<compile_context>
chip_gen: v5e
topology: v5e:2x2
jax: 0.10.0
libtpu: 0.0.40
codegen_flags: <defaults>
</compile_context>

<pallas_src>
import functools

import jax
import jax.numpy as jnp
from jax.experimental import pallas as pl
from jax.experimental.pallas import tpu as pltpu


# -----------------------------------------------------------------------------
# Fused Pallas kernel: entire FCVAE forward for one batch tile
# -----------------------------------------------------------------------------
def _fcvae_kernel(x_ref, eps_ref, w1_ref, b1_ref, wml_ref, bml_ref,
                  w3_ref, b3_ref, w4_ref, b4_ref,
                  recon_ref, mulv_ref, *, z_dim, mulv_w):
    """recon = sigmoid(fc4(relu(fc3(z)))),  [mu|logvar] = fc21/22(relu(fc1(x))),
    z = mu + exp(0.5*logvar)*eps.  All intermediates stay in VMEM/vregs."""

    x = x_ref[...]                                              # (bn, D) f32

    # encoder fc1: bf16 MXU operands, f32 accumulation + epilogue
    h1 = jnp.maximum(
        jnp.dot(x.astype(jnp.bfloat16), w1_ref[...],
                preferred_element_type=jnp.float32) + b1_ref[...], 0.0)   # (bn, 400)

    # merged fc21/fc22 -> [mu | logvar]; kept fully f32 (tiny matmul,
    # preserves mu/logvar (KL-term) fidelity)
    ml = jnp.dot(h1, wml_ref[...],
                 preferred_element_type=jnp.float32) + bml_ref[...]       # (bn, 2Z)
    mu = ml[:, :z_dim]
    logvar = ml[:, z_dim:]

    # reparameterize (f32 epilogue)
    z = mu + jnp.exp(0.5 * logvar) * eps_ref[...]                         # (bn, Z)

    # decoder: h3 = relu(z @ W3 + b3); logits = h3 @ W4 + b4
    h3 = jnp.maximum(
        jnp.dot(z.astype(jnp.bfloat16), w3_ref[...],
                preferred_element_type=jnp.float32) + b3_ref[...], 0.0)   # (bn, 400)
    logits = jnp.dot(h3.astype(jnp.bfloat16), w4_ref[...],
                     preferred_element_type=jnp.float32) + b4_ref[...]    # (bn, D)

    # sigmoid = 1 / (1 + exp(-x)): exp on EUP, approx reciprocal on EUP
    # (keeps the (bn, D) divide off the VALU slots on v5e).
    recon_ref[...] = pl.reciprocal(1.0 + jnp.exp(-logits), approx=True)

    # lane-dense mu|logvar slab (pad to mulv_w lanes; wrapper slices [:, :2Z])
    if mulv_w == 2 * z_dim:
        mulv_ref[...] = ml
    else:
        pad = jnp.zeros((ml.shape[0], mulv_w - 2 * z_dim), jnp.float32)
        mulv_ref[...] = jnp.concatenate([ml, pad], axis=1)


# -----------------------------------------------------------------------------
# One-time parameter preparation (called OUTSIDE the jitted forward)
# -----------------------------------------------------------------------------
def prepare_params(params):
    """Convert params to the dtypes/layout the kernel consumes.  Do this once,
    not per forward call, so the bf16 casts never show up in the jitted graph."""
    hid = params["w1"].shape[1]
    z2 = params["w_mulv"].shape[1]
    d_out = params["w4"].shape[1]
    return {
        "w1": params["w1"].astype(jnp.bfloat16),
        "b1": params["b1"].reshape(1, hid).astype(jnp.float32),
        # fc21/fc22 kept f32 (tiny; mu/logvar fidelity)
        "w_mulv": params["w_mulv"].astype(jnp.float32),
        "b_mulv": params["b_mulv"].reshape(1, z2).astype(jnp.float32),
        "w3": params["w3"].astype(jnp.bfloat16),
        "b3": params["b3"].reshape(1, hid).astype(jnp.float32),
        "w4": params["w4"].astype(jnp.bfloat16),
        "b4": params["b4"].reshape(1, d_out).astype(jnp.float32),
    }


# -----------------------------------------------------------------------------
# Wrapper
# -----------------------------------------------------------------------------
def fcvae_forward(kparams, x_nchw, eps):
    """kparams: output of prepare_params.  x_nchw: (N, C, H, W) f32,
    eps: (N, Z) f32.  Returns (reconstruction NCHW, mu, logvar)."""
    N, C, H, W = x_nchw.shape
    D = C * H * W
    Z = eps.shape[1]                       # static under tracing
    HID = kparams["w1"].shape[1]
    # lane-dense width for the [mu|logvar] output slab
    MULV_W = max(128, -((-2 * Z) // 128) * 128)

    x = x_nchw.reshape(N, D)               # PyTorch flatten == reshape of NCHW

    # Batch tile: capped at 256 (fits every chip's scoped VMEM with default
    # double-buffering), and forced to give >= 2 grid steps when N >= 16 so
    # v7x's two TensorCores both get work via dimension_semantics.
    bn = N
    if N >= 16:
        for cand in (256, 128, 64, 32, 16, 8):
            if N % cand == 0 and N // cand >= 2:
                bn = cand
                break
    grid = (N // bn,)

    def tile(shape):            # batch-tiled operand
        return pl.BlockSpec(shape, lambda i: (i, 0))

    def whole(shape):           # replicated operand (weights / biases)
        return pl.BlockSpec(shape, lambda i: (0, 0))

    recon_flat, mulv = pl.pallas_call(
        functools.partial(_fcvae_kernel, z_dim=Z, mulv_w=MULV_W),
        out_shape=(jax.ShapeDtypeStruct((N, D), jnp.float32),
                   jax.ShapeDtypeStruct((N, MULV_W), jnp.float32)),
        grid=grid,
        in_specs=[
            tile((bn, D)),          # x
            tile((bn, Z)),          # eps
            whole((D, HID)),        # w1  (bf16)
            whole((1, HID)),        # b1
            whole((HID, 2 * Z)),    # w_mulv (f32)
            whole((1, 2 * Z)),      # b_mulv
            whole((Z, HID)),        # w3  (bf16)
            whole((1, HID)),        # b3
            whole((HID, D)),        # w4  (bf16)
            whole((1, D)),          # b4
        ],
        out_specs=(tile((bn, D)), tile((bn, MULV_W))),
        compiler_params=pltpu.CompilerParams(
            dimension_semantics=("parallel",),
            vmem_limit_bytes=32 * 1024 * 1024),
    )(x, eps,
      kparams["w1"], kparams["b1"], kparams["w_mulv"], kparams["b_mulv"],
      kparams["w3"], kparams["b3"], kparams["w4"], kparams["b4"])

    recon = recon_flat.reshape(N, C, H, W)   # PyTorch unflatten == reshape
    mu = mulv[:, :Z]
    logvar = mulv[:, Z:2 * Z]
    return recon, mu, logvar


# -----------------------------------------------------------------------------
# Pure-JAX reference (f32) for validation
# -----------------------------------------------------------------------------
def fcvae_reference(params, x_nchw, eps):
    N = x_nchw.shape[0]
    Z = eps.shape[1]
    x = x_nchw.reshape(N, -1)
    h1 = jax.nn.relu(x @ params["w1"] + params["b1"])
    ml = h1 @ params["w_mulv"] + params["b_mulv"]
    mu, logvar = ml[:, :Z], ml[:, Z:]
    z = mu + jnp.exp(0.5 * logvar) * eps
    h3 = jax.nn.relu(z @ params["w3"] + params["b3"])
    recon = jax.nn.sigmoid(h3 @ params["w4"] + params["b4"])
    return recon.reshape(x_nchw.shape), mu, logvar


# -----------------------------------------------------------------------------
# Parameter init (PyTorch nn.Linear-style uniform), stored as (in, out), f32
# -----------------------------------------------------------------------------
def init_params(key, channels, height, width, z_dim, hidden=400):
    D = channels * height * width
    ks = jax.random.split(key, 10)

    def linear(kw, kb, fan_in, fan_out):
        lim = 1.0 / float(fan_in) ** 0.5
        w = jax.random.uniform(kw, (fan_in, fan_out), jnp.float32, -lim, lim)
        b = jax.random.uniform(kb, (fan_out,), jnp.float32, -lim, lim)
        return w, b

    w1, b1 = linear(ks[0], ks[1], D, hidden)
    w21, b21 = linear(ks[2], ks[3], hidden, z_dim)
    w22, b22 = linear(ks[4], ks[5], hidden, z_dim)
    w3, b3 = linear(ks[6], ks[7], z_dim, hidden)
    w4, b4 = linear(ks[8], ks[9], hidden, D)

    return {
        "w1": w1, "b1": b1,
        # fc21 / fc22 merged -> one matmul producing [mu | logvar]
        "w_mulv": jnp.concatenate([w21, w22], axis=1),
        "b_mulv": jnp.concatenate([b21, b22], axis=0),
        "w3": w3, "b3": b3,
        "w4": w4, "b4": b4,
    }


# -----------------------------------------------------------------------------
if __name__ == "__main__":
    # Small shapes consistent with the module: FCVAE(channels=4, width=16,
    # height=16, z_dim=8); batch = 2.  Flat dim D = 4*16*16 = 1024, hidden=400.
    channels, height, width, z_dim, batch = 4, 16, 16, 8, 2

    root = jax.random.PRNGKey(0)
    k_param, k_x, k_eps = jax.random.split(root, 3)

    params = init_params(k_param, channels, height, width, z_dim)
    kparams = jax.tree.map(lambda a: a, prepare_params(params))  # one-time prep
    jax.block_until_ready(kparams)

    x = jax.random.normal(k_x, (batch, channels, height, width), jnp.float32)
    # torch.randn_like noise in reparameterize -> explicit eps input (deterministic)
    eps = jax.random.normal(k_eps, (batch, z_dim), jnp.float32)

    fwd = jax.jit(fcvae_forward)
    recon, mu, logvar = fwd(kparams, x, eps)
    jax.block_until_ready((recon, mu, logvar))

    # Shape / range checks (approx reciprocal can overshoot 1.0 by ~1e-4)
    assert recon.shape == (batch, channels, height, width)
    assert mu.shape == (batch, z_dim) and logvar.shape == (batch, z_dim)
    assert bool(jnp.all(recon >= -1e-3)) and bool(jnp.all(recon <= 1.0 + 1e-3))

    # Numerical check vs. f32 reference (bf16 MXU operands -> loose tolerance)
    r_ref, mu_ref, lv_ref = fcvae_reference(params, x, eps)
    assert bool(jnp.allclose(recon, r_ref, atol=5e-2, rtol=5e-2))
    assert bool(jnp.allclose(mu, mu_ref, atol=5e-2, rtol=5e-2))
    assert bool(jnp.allclose(logvar, lv_ref, atol=5e-2, rtol=5e-2))

    print("KERNEL_OK")
</pallas_src>

<mosaic_0001>
module attributes {stable_mosaic.version = 11 : i64} {
  func.func @_fcvae_kernel(%arg0: i32, %arg1: memref<2x1024xf32, #tpu.memory_space<vmem>>, %arg2: memref<2x8xf32, #tpu.memory_space<vmem>>, %arg3: memref<1024x400xbf16, #tpu.memory_space<vmem>>, %arg4: memref<1x400xf32, #tpu.memory_space<vmem>>, %arg5: memref<400x16xf32, #tpu.memory_space<vmem>>, %arg6: memref<1x16xf32, #tpu.memory_space<vmem>>, %arg7: memref<8x400xbf16, #tpu.memory_space<vmem>>, %arg8: memref<1x400xf32, #tpu.memory_space<vmem>>, %arg9: memref<400x1024xbf16, #tpu.memory_space<vmem>>, %arg10: memref<1x1024xf32, #tpu.memory_space<vmem>>, %arg11: memref<2x1024xf32, #tpu.memory_space<vmem>>, %arg12: memref<2x128xf32, #tpu.memory_space<vmem>>) attributes {dimension_semantics = [#tpu.dimension_semantics<parallel>], iteration_bounds = array<i64: 1>, scalar_prefetch = 0 : i64, scratch_operands = 0 : i64, tpu.core_type = #tpu.core_type<tc>, window_params = [{transform_indices = @transform_0, window_bounds = array<i64: 2, 1024>}, {transform_indices = @transform_1, window_bounds = array<i64: 2, 8>}, {pipeline_mode = #tpu.pipeline_mode<synchronous>, transform_indices = @transform_2, window_bounds = array<i64: 1024, 400>}, {pipeline_mode = #tpu.pipeline_mode<synchronous>, transform_indices = @transform_3, window_bounds = array<i64: 1, 400>}, {pipeline_mode = #tpu.pipeline_mode<synchronous>, transform_indices = @transform_4, window_bounds = array<i64: 400, 16>}, {pipeline_mode = #tpu.pipeline_mode<synchronous>, transform_indices = @transform_5, window_bounds = array<i64: 1, 16>}, {pipeline_mode = #tpu.pipeline_mode<synchronous>, transform_indices = @transform_6, window_bounds = array<i64: 8, 400>}, {pipeline_mode = #tpu.pipeline_mode<synchronous>, transform_indices = @transform_7, window_bounds = array<i64: 1, 400>}, {pipeline_mode = #tpu.pipeline_mode<synchronous>, transform_indices = @transform_8, window_bounds = array<i64: 400, 1024>}, {pipeline_mode = #tpu.pipeline_mode<synchronous>, transform_indices = @transform_9, window_bounds = array<i64: 1, 1024>}, {transform_indices = @transform_10, window_bounds = array<i64: 2, 1024>}, {transform_indices = @transform_11, window_bounds = array<i64: 2, 128>}]} {
    %c0 = arith.constant 0 : index
    %c0_0 = arith.constant 0 : index
    %0 = vector.load %arg1[%c0, %c0_0] : memref<2x1024xf32, #tpu.memory_space<vmem>>, vector<2x1024xf32>
    %1 = arith.truncf %0 : vector<2x1024xf32> to vector<2x1024xbf16>
    %c0_1 = arith.constant 0 : index
    %c0_2 = arith.constant 0 : index
    %2 = vector.load %arg3[%c0_1, %c0_2] : memref<1024x400xbf16, #tpu.memory_space<vmem>>, vector<1024x400xbf16>
    %cst = arith.constant dense<0.000000e+00> : vector<2x400xf32>
    %3 = tpu.matmul %1, %2, %cst {dimension_numbers = #tpu.dot_dimension_numbers<[1], [0], [0], [1], [0, 0, 1, 1], [], []>} : vector<2x1024xbf16>, vector<1024x400xbf16>, vector<2x400xf32> -> vector<2x400xf32>
    %c0_3 = arith.constant 0 : index
    %c0_4 = arith.constant 0 : index
    %4 = vector.load %arg4[%c0_3, %c0_4] : memref<1x400xf32, #tpu.memory_space<vmem>>, vector<1x400xf32>
    %5 = vector.broadcast %4 : vector<1x400xf32> to vector<2x400xf32>
    %6 = arith.addf %3, %5 : vector<2x400xf32>
    %cst_5 = arith.constant 0.000000e+00 : f32
    %7 = vector.broadcast %cst_5 : f32 to vector<2x400xf32>
    %8 = arith.maximumf %6, %7 : vector<2x400xf32>
    %c0_6 = arith.constant 0 : index
    %c0_7 = arith.constant 0 : index
    %9 = vector.load %arg5[%c0_6, %c0_7] : memref<400x16xf32, #tpu.memory_space<vmem>>, vector<400x16xf32>
    %cst_8 = arith.constant dense<0.000000e+00> : vector<2x16xf32>
    %10 = tpu.matmul %8, %9, %cst_8 {dimension_numbers = #tpu.dot_dimension_numbers<[1], [0], [0], [1], [0, 0, 1, 1], [], []>} : vector<2x400xf32>, vector<400x16xf32>, vector<2x16xf32> -> vector<2x16xf32>
    %c0_9 = arith.constant 0 : index
    %c0_10 = arith.constant 0 : index
    %11 = vector.load %arg6[%c0_9, %c0_10] : memref<1x16xf32, #tpu.memory_space<vmem>>, vector<1x16xf32>
    %12 = vector.broadcast %11 : vector<1x16xf32> to vector<2x16xf32>
    %13 = arith.addf %10, %12 : vector<2x16xf32>
    %14 = vector.extract_strided_slice %13 {offsets = [0, 0], sizes = [2, 8], strides = [1, 1]} : vector<2x16xf32> to vector<2x8xf32>
    %15 = vector.extract_strided_slice %13 {offsets = [0, 8], sizes = [2, 8], strides = [1, 1]} : vector<2x16xf32> to vector<2x8xf32>
    %cst_11 = arith.constant 5.000000e-01 : f32
    %16 = vector.broadcast %cst_11 : f32 to vector<2x8xf32>
    %17 = arith.mulf %16, %15 : vector<2x8xf32>
    %18 = math.exp %17 : vector<2x8xf32>
    %c0_12 = arith.constant 0 : index
    %c0_13 = arith.constant 0 : index
    %19 = vector.load %arg2[%c0_12, %c0_13] : memref<2x8xf32, #tpu.memory_space<vmem>>, vector<2x8xf32>
    %20 = arith.mulf %18, %19 : vector<2x8xf32>
    %21 = arith.addf %14, %20 : vector<2x8xf32>
    %22 = arith.truncf %21 : vector<2x8xf32> to vector<2x8xbf16>
    %c0_14 = arith.constant 0 : index
    %c0_15 = arith.constant 0 : index
    %23 = vector.load %arg7[%c0_14, %c0_15] : memref<8x400xbf16, #tpu.memory_space<vmem>>, vector<8x400xbf16>
    %cst_16 = arith.constant dense<0.000000e+00> : vector<2x400xf32>
    %24 = tpu.matmul %22, %23, %cst_16 {dimension_numbers = #tpu.dot_dimension_numbers<[1], [0], [0], [1], [0, 0, 1, 1], [], []>} : vector<2x8xbf16>, vector<8x400xbf16>, vector<2x400xf32> -> vector<2x400xf32>
    %c0_17 = arith.constant 0 : index
    %c0_18 = arith.constant 0 : index
    %25 = vector.load %arg8[%c0_17, %c0_18] : memref<1x400xf32, #tpu.memory_space<vmem>>, vector<1x400xf32>
    %26 = vector.broadcast %25 : vector<1x400xf32> to vector<2x400xf32>
    %27 = arith.addf %24, %26 : vector<2x400xf32>
    %cst_19 = arith.constant 0.000000e+00 : f32
    %28 = vector.broadcast %cst_19 : f32 to vector<2x400xf32>
    %29 = arith.maximumf %27, %28 : vector<2x400xf32>
    %30 = arith.truncf %29 : vector<2x400xf32> to vector<2x400xbf16>
    %c0_20 = arith.constant 0 : index
    %c0_21 = arith.constant 0 : index
    %31 = vector.load %arg9[%c0_20, %c0_21] : memref<400x1024xbf16, #tpu.memory_space<vmem>>, vector<400x1024xbf16>
    %cst_22 = arith.constant dense<0.000000e+00> : vector<2x1024xf32>
    %32 = tpu.matmul %30, %31, %cst_22 {dimension_numbers = #tpu.dot_dimension_numbers<[1], [0], [0], [1], [0, 0, 1, 1], [], []>} : vector<2x400xbf16>, vector<400x1024xbf16>, vector<2x1024xf32> -> vector<2x1024xf32>
    %c0_23 = arith.constant 0 : index
    %c0_24 = arith.constant 0 : index
    %33 = vector.load %arg10[%c0_23, %c0_24] : memref<1x1024xf32, #tpu.memory_space<vmem>>, vector<1x1024xf32>
    %34 = vector.broadcast %33 : vector<1x1024xf32> to vector<2x1024xf32>
    %35 = arith.addf %32, %34 : vector<2x1024xf32>
    %cst_25 = arith.constant 0.000000e+00 : f32
    %36 = vector.broadcast %cst_25 : f32 to vector<2x1024xf32>
    %37 = arith.subf %36, %35 : vector<2x1024xf32>
    %38 = math.exp %37 : vector<2x1024xf32>
    %cst_26 = arith.constant 1.000000e+00 : f32
    %39 = vector.broadcast %cst_26 : f32 to vector<2x1024xf32>
    %40 = arith.addf %39, %38 : vector<2x1024xf32>
    %41 = tpu.reciprocal %40 {approx = true} : vector<2x1024xf32> -> vector<2x1024xf32>
    %c0_27 = arith.constant 0 : index
    %c0_28 = arith.constant 0 : index
    %42 = vector.load %arg11[%c0_27, %c0_28] : memref<2x1024xf32, #tpu.memory_space<vmem>>, vector<2x1024xf32>
    tpu.vector_store %arg11[%c0_27, %c0_28], %41 {strides = array<i32>} : memref<2x1024xf32, #tpu.memory_space<vmem>>, vector<2x1024xf32>,
    %cst_29 = arith.constant 0.000000e+00 : f32
    %43 = vector.broadcast %cst_29 : f32 to vector<2x112xf32>
    %44 = tpu.concatenate %13, %43 in 1 : vector<2x16xf32>, vector<2x112xf32> -> vector<2x128xf32>
    %c0_30 = arith.constant 0 : index
    %c0_31 = arith.constant 0 : index
    %45 = vector.load %arg12[%c0_30, %c0_31] : memref<2x128xf32, #tpu.memory_space<vmem>>, vector<2x128xf32>
    tpu.vector_store %arg12[%c0_30, %c0_31], %44 {strides = array<i32>} : memref<2x128xf32, #tpu.memory_space<vmem>>, vector<2x128xf32>,
    return
  }
  func.func @transform_0(%arg0: i32) -> (i32, i32) {
    %c0_i32 = arith.constant 0 : i32
    %c0_i32_0 = arith.constant 0 : i32
    return %arg0, %c0_i32 : i32, i32
  }
  func.func @transform_1(%arg0: i32) -> (i32, i32) {
    %c0_i32 = arith.constant 0 : i32
    %c0_i32_0 = arith.constant 0 : i32
    return %arg0, %c0_i32 : i32, i32
  }
  func.func @transform_2(%arg0: i32) -> (i32, i32) {
    %c0_i32 = arith.constant 0 : i32
    %c0_i32_0 = arith.constant 0 : i32
    %c0_i32_1 = arith.constant 0 : i32
    return %c0_i32, %c0_i32_0 : i32, i32
  }
  func.func @transform_3(%arg0: i32) -> (i32, i32) {
    %c0_i32 = arith.constant 0 : i32
    %c0_i32_0 = arith.constant 0 : i32
    %c0_i32_1 = arith.constant 0 : i32
    return %c0_i32, %c0_i32_0 : i32, i32
  }
  func.func @transform_4(%arg0: i32) -> (i32, i32) {
    %c0_i32 = arith.constant 0 : i32
    %c0_i32_0 = arith.constant 0 : i32
    %c0_i32_1 = arith.constant 0 : i32
    return %c0_i32, %c0_i32_0 : i32, i32
  }
  func.func @transform_5(%arg0: i32) -> (i32, i32) {
    %c0_i32 = arith.constant 0 : i32
    %c0_i32_0 = arith.constant 0 : i32
    %c0_i32_1 = arith.constant 0 : i32
    return %c0_i32, %c0_i32_0 : i32, i32
  }
  func.func @transform_6(%arg0: i32) -> (i32, i32) {
    %c0_i32 = arith.constant 0 : i32
    %c0_i32_0 = arith.constant 0 : i32
    %c0_i32_1 = arith.constant 0 : i32
    return %c0_i32, %c0_i32_0 : i32, i32
  }
  func.func @transform_7(%arg0: i32) -> (i32, i32) {
    %c0_i32 = arith.constant 0 : i32
    %c0_i32_0 = arith.constant 0 : i32
    %c0_i32_1 = arith.constant 0 : i32
    return %c0_i32, %c0_i32_0 : i32, i32
  }
  func.func @transform_8(%arg0: i32) -> (i32, i32) {
    %c0_i32 = arith.constant 0 : i32
    %c0_i32_0 = arith.constant 0 : i32
    %c0_i32_1 = arith.constant 0 : i32
    return %c0_i32, %c0_i32_0 : i32, i32
  }
  func.func @transform_9(%arg0: i32) -> (i32, i32) {
    %c0_i32 = arith.constant 0 : i32
    %c0_i32_0 = arith.constant 0 : i32
    %c0_i32_1 = arith.constant 0 : i32
    return %c0_i32, %c0_i32_0 : i32, i32
  }
  func.func @transform_10(%arg0: i32) -> (i32, i32) {
    %c0_i32 = arith.constant 0 : i32
    %c0_i32_0 = arith.constant 0 : i32
    return %arg0, %c0_i32 : i32, i32
  }
  func.func @transform_11(%arg0: i32) -> (i32, i32) {
    %c0_i32 = arith.constant 0 : i32
    %c0_i32_0 = arith.constant 0 : i32
    return %arg0, %c0_i32 : i32, i32
  }
}

</mosaic_0001>

<llo_original>
// kernel: fcvae_forward.1
$region0: #{fcvae_forward.1}
  #allocation0 [shape = 'u32[]', space=smem, size = 0x4, offset = 0x4, fixed_abs, tag = 'smem constant byte address 0x4 - core index']
  #allocation1 [shape = 'u32[72,128]{1,0:T(1,128)}', space=vmem, size = 0x9000, scoped, tag = 'internal scratch']
  %s0 = inlined_call_operand.vmem [shape: f32[2,1024], index: 0, kind: input, shape index: {}]
  %s1 = inlined_call_operand.vmem [shape: f32[2,8], index: 1, kind: input, shape index: {}]
  %s2 = inlined_call_operand.vmem [shape: bf16[1024,400], index: 2, kind: input, shape index: {}]
  %s3 = inlined_call_operand.vmem [shape: f32[1,400], index: 3, kind: input, shape index: {}]
  %s4 = inlined_call_operand.vmem [shape: f32[400,16], index: 4, kind: input, shape index: {}]
  %s5 = inlined_call_operand.vmem [shape: f32[1,16], index: 5, kind: input, shape index: {}]
  %s6 = inlined_call_operand.vmem [shape: bf16[8,400], index: 6, kind: input, shape index: {}]
  %s7 = inlined_call_operand.vmem [shape: f32[1,400], index: 7, kind: input, shape index: {}]
  %s8 = inlined_call_operand.vmem [shape: bf16[400,1024], index: 8, kind: input, shape index: {}]
  %s9 = inlined_call_operand.vmem [shape: f32[1,1024], index: 9, kind: input, shape index: {}]
  %s10 = inlined_call_operand.vmem [shape: f32[2,1024], index: 10, kind: output, shape index: {0}]
  %s11 = inlined_call_operand.vmem [shape: f32[2,128], index: 11, kind: output, shape index: {1}]
  %12 = xla_tuple %s10, %s11
  %s13 = sld [smem:[#allocation0]]
  $region58: #{fcvae_forward.1} parent=0
    _
  %s15 = ssub.s32 1, %s13
  %s16 = scalar_select 0, %s15, %s13
  // Predicated region
  $region2: #{fcvae_forward.1} parent=0 // pred_check
    _
  $region3: #{fcvae_forward.1} parent=0 // pred_check_branch
    %18 = sbr.rel (0) target = $region5
  $region4: #{fcvae_forward.1} parent=0 // pred_region
    _
  $region5: #{fcvae_forward.1} parent=0 // pred_fallthru
    _
  // Predicated region
  $region6: #{fcvae_forward.1} parent=0 // pred_check
    _
  $region7: #{fcvae_forward.1} parent=0 // pred_check_branch
    %20 = sbr.rel (0) target = $region9
  $region8: #{fcvae_forward.1} parent=0 // pred_region
    _
  $region9: #{fcvae_forward.1} parent=0 // pred_fallthru
    _
  // Predicated region
  $region10: #{fcvae_forward.1} parent=0 // pred_check
    _
  $region11: #{fcvae_forward.1} parent=0 // pred_check_branch
    %22 = sbr.rel (0) target = $region13
  $region12: #{fcvae_forward.1} parent=0 // pred_region
    _
  $region13: #{fcvae_forward.1} parent=0 // pred_fallthru
    _
  // Predicated region
  $region14: #{fcvae_forward.1} parent=0 // pred_check
    _
  $region15: #{fcvae_forward.1} parent=0 // pred_check_branch
    %24 = sbr.rel (0) target = $region17
  $region16: #{fcvae_forward.1} parent=0 // pred_region
    _
  $region17: #{fcvae_forward.1} parent=0 // pred_fallthru
    _
  // Predicated region
  $region18: #{fcvae_forward.1} parent=0 // pred_check
    _
  $region19: #{fcvae_forward.1} parent=0 // pred_check_branch
    %26 = sbr.rel (0) target = $region21
  $region20: #{fcvae_forward.1} parent=0 // pred_region
    _
  $region21: #{fcvae_forward.1} parent=0 // pred_fallthru
    _
  // Predicated region
  $region22: #{fcvae_forward.1} parent=0 // pred_check
    _
  $region23: #{fcvae_forward.1} parent=0 // pred_check_branch
    %28 = sbr.rel (0) target = $region25
  $region24: #{fcvae_forward.1} parent=0 // pred_region
    _
  $region25: #{fcvae_forward.1} parent=0 // pred_fallthru
    _
  // Predicated region
  $region26: #{fcvae_forward.1} parent=0 // pred_check
    _
  $region27: #{fcvae_forward.1} parent=0 // pred_check_branch
    %30 = sbr.rel (0) target = $region29
  $region28: #{fcvae_forward.1} parent=0 // pred_region
    _
  $region29: #{fcvae_forward.1} parent=0 // pred_fallthru
    _
  // Predicated region
  $region30: #{fcvae_forward.1} parent=0 // pred_check
    _
  $region31: #{fcvae_forward.1} parent=0 // pred_check_branch
    %32 = sbr.rel (0) target = $region33
  $region32: #{fcvae_forward.1} parent=0 // pred_region
    _
  $region33: #{fcvae_forward.1} parent=0 // pred_fallthru
    _
  // Predicated region
  $region34: #{fcvae_forward.1} parent=0 // pred_check
    _
  $region35: #{fcvae_forward.1} parent=0 // pred_check_branch
    %34 = sbr.rel (0) target = $region37
  $region36: #{fcvae_forward.1} parent=0 // pred_region
    _
  $region37: #{fcvae_forward.1} parent=0 // pred_fallthru
    _
  // Predicated region
  $region38: #{fcvae_forward.1} parent=0 // pred_check
    _
  $region39: #{fcvae_forward.1} parent=0 // pred_check_branch
    %36 = sbr.rel (0) target = $region41
  $region40: #{fcvae_forward.1} parent=0 // pred_region
    _
  $region41: #{fcvae_forward.1} parent=0 // pred_fallthru
    _
  %v38 = vld [vmem:[%s0] sm:$0xff]
  %v39 = vld [vmem:[%s0 + $0x8] sm:$0xff]
  %42 = vst [vmem:[#allocation1] ss:$4 sm:$0xff] %v38
  %s43 = scalar_lea.vmem [#allocation1], 32
  %44 = vst [vmem:[%s43] ss:$4 sm:$0xff] %v39
  %v45 = vld.sshfl [vmem:[#allocation1] sm:$0xff pattern:$0x73625140]
  %v46 = vld.sshfl [vmem:[#allocation1 + $0x8] sm:$0xff pattern:$0x73625140]
  %v47 = vld.sshfl [vmem:[#allocation1 + $0x10] sm:$0xff pattern:$0x73625140]
  %v48 = vld.sshfl [vmem:[#allocation1 + $0x18] sm:$0xff pattern:$0x73625140]
  %v49 = vld.sshfl [vmem:[#allocation1 + $0x20] sm:$0xff pattern:$0x73625140]
  %v50 = vld.sshfl [vmem:[#allocation1 + $0x28] sm:$0xff pattern:$0x73625140]
  %v51 = vld.sshfl [vmem:[#allocation1 + $0x30] sm:$0xff pattern:$0x73625140]
  %v52 = vld.sshfl [vmem:[#allocation1 + $0x38] sm:$0xff pattern:$0x73625140]
  %v61 = vpack.c.bf16 %v45, %v45
  %v62 = vpack.c.bf16 %v46, %v46
  %v63 = vpack.c.bf16 %v47, %v47
  %v64 = vpack.c.bf16 %v48, %v48
  %v65 = vpack.c.bf16 %v49, %v49
  %v66 = vpack.c.bf16 %v50, %v50
  %v67 = vpack.c.bf16 %v51, %v51
  %v68 = vpack.c.bf16 %v52, %v52
  %v69 = vld [vmem:[%s2] sm:$0xff]
  %v70 = vld [vmem:[%s2 + $0x8] sm:$0xff]
  %v71 = vld [vmem:[%s2 + $0x10] sm:$0xff]
  %v72 = vld [vmem:[%s2 + $0x18] sm:$0xff]
  %v73 = vld [vmem:[%s2 + $0x20] sm:$0xff]
  %v74 = vld [vmem:[%s2 + $0x28] sm:$0xff]
  %v75 = vld [vmem:[%s2 + $0x30] sm:$0xff]
  %v76 = vld [vmem:[%s2 + $0x38] sm:$0xff]
  %v77 = vld [vmem:[%s2 + $0x40] sm:$0xff]
  %v78 = vld [vmem:[%s2 + $0x48] sm:$0xff]
  %v79 = vld [vmem:[%s2 + $0x50] sm:$0xff]
  %v80 = vld [vmem:[%s2 + $0x58] sm:$0xff]
  %v81 = vld [vmem:[%s2 + $0x60] sm:$0xff]
  %v82 = vld [vmem:[%s2 + $0x68] sm:$0xff]
  %v83 = vld [vmem:[%s2 + $0x70] sm:$0xff]
  %v84 = vld [vmem:[%s2 + $0x78] sm:$0xff]
  %v85 = vld [vmem:[%s2 + $0x80] sm:$0xff]
  %v86 = vld [vmem:[%s2 + $0x88] sm:$0xff]
  %v87 = vld [vmem:[%s2 + $0x90] sm:$0xff]
  %v88 = vld [vmem:[%s2 + $0x98] sm:$0xff]
  %v89 = vld [vmem:[%s2 + $0xa0] sm:$0xff]
  %v90 = vld [vmem:[%s2 + $0xa8] sm:$0xff]
  %v91 = vld [vmem:[%s2 + $0xb0] sm:$0xff]
  %v92 = vld [vmem:[%s2 + $0xb8] sm:$0xff]
  %v93 = vld [vmem:[%s2 + $0xc0] sm:$0xff]
  %v94 = vld [vmem:[%s2 + $0xc8] sm:$0xff]
  %v95 = vld [vmem:[%s2 + $0xd0] sm:$0xff]
  %v96 = vld [vmem:[%s2 + $0xd8] sm:$0xff]
  %v97 = vld [vmem:[%s2 + $0xe0] sm:$0xff]
  %v98 = vld [vmem:[%s2 + $0xe8] sm:$0xff]
  %v99 = vld [vmem:[%s2 + $0xf0] sm:$0xff]
  %v100 = vld [vmem:[%s2 + $0xf8] sm:$0xff]
  %v101 = vld [vmem:[%s2 + $0x100] sm:$0xff]
  %v102 = vld [vmem:[%s2 + $0x108] sm:$0xff]
  %v103 = vld [vmem:[%s2 + $0x110] sm:$0xff]
  %v104 = vld [vmem:[%s2 + $0x118] sm:$0xff]
  %v105 = vld [vmem:[%s2 + $0x120] sm:$0xff]
  %v106 = vld [vmem:[%s2 + $0x128] sm:$0xff]
  %v107 = vld [vmem:[%s2 + $0x130] sm:$0xff]
  %v108 = vld [vmem:[%s2 + $0x138] sm:$0xff]
  %v109 = vld [vmem:[%s2 + $0x140] sm:$0xff]
  %v110 = vld [vmem:[%s2 + $0x148] sm:$0xff]
  %v111 = vld [vmem:[%s2 + $0x150] sm:$0xff]
  %v112 = vld [vmem:[%s2 + $0x158] sm:$0xff]
  %v113 = vld [vmem:[%s2 + $0x160] sm:$0xff]
  %v114 = vld [vmem:[%s2 + $0x168] sm:$0xff]
  %v115 = vld [vmem:[%s2 + $0x170] sm:$0xff]
  %v116 = vld [vmem:[%s2 + $0x178] sm:$0xff]
  %v117 = vld [vmem:[%s2 + $0x180] sm:$0xff]
  %v118 = vld [vmem:[%s2 + $0x188] sm:$0xff]
  %v119 = vld [vmem:[%s2 + $0x190] sm:$0xff]
  %v120 = vld [vmem:[%s2 + $0x198] sm:$0xff]
  %v121 = vld [vmem:[%s2 + $0x1a0] sm:$0xff]
  %v122 = vld [vmem:[%s2 + $0x1a8] sm:$0xff]
  %v123 = vld [vmem:[%s2 + $0x1b0] sm:$0xff]
  %v124 = vld [vmem:[%s2 + $0x1b8] sm:$0xff]
  %v125 = vld [vmem:[%s2 + $0x1c0] sm:$0xff]
  %v126 = vld [vmem:[%s2 + $0x1c8] sm:$0xff]
  %v127 = vld [vmem:[%s2 + $0x1d0] sm:$0xff]
  %v128 = vld [vmem:[%s2 + $0x1d8] sm:$0xff]
  %v129 = vld [vmem:[%s2 + $0x1e0] sm:$0xff]
  %v130 = vld [vmem:[%s2 + $0x1e8] sm:$0xff]
  %v131 = vld [vmem:[%s2 + $0x1f0] sm:$0xff]
  %v132 = vld [vmem:[%s2 + $0x1f8] sm:$0xff]
  %v133 = vld [vmem:[%s2 + $0x200] sm:$0xff]
  %v134 = vld [vmem:[%s2 + $0x208] sm:$0xff]
  %v135 = vld [vmem:[%s2 + $0x210] sm:$0xff]
  %v136 = vld [vmem:[%s2 + $0x218] sm:$0xff]
  %v137 = vld [vmem:[%s2 + $0x220] sm:$0xff]
  %v138 = vld [vmem:[%s2 + $0x228] sm:$0xff]
  %v139 = vld [vmem:[%s2 + $0x230] sm:$0xff]
  %v140 = vld [vmem:[%s2 + $0x238] sm:$0xff]
  %v141 = vld [vmem:[%s2 + $0x240] sm:$0xff]
  %v142 = vld [vmem:[%s2 + $0x248] sm:$0xff]
  %v143 = vld [vmem:[%s2 + $0x250] sm:$0xff]
  %v144 = vld [vmem:[%s2 + $0x258] sm:$0xff]
  %v145 = vld [vmem:[%s2 + $0x260] sm:$0xff]
  %v146 = vld [vmem:[%s2 + $0x268] sm:$0xff]
  %v147 = vld [vmem:[%s2 + $0x270] sm:$0xff]
  %v148 = vld [vmem:[%s2 + $0x278] sm:$0xff]
  %v149 = vld [vmem:[%s2 + $0x280] sm:$0xff]
  %v150 = vld [vmem:[%s2 + $0x288] sm:$0xff]
  %v151 = vld [vmem:[%s2 + $0x290] sm:$0xff]
  %v152 = vld [vmem:[%s2 + $0x298] sm:$0xff]
  %v153 = vld [vmem:[%s2 + $0x2a0] sm:$0xff]
  %v154 = vld [vmem:[%s2 + $0x2a8] sm:$0xff]
  %v155 = vld [vmem:[%s2 + $0x2b0] sm:$0xff]
  %v156 = vld [vmem:[%s2 + $0x2b8] sm:$0xff]
  %v157 = vld [vmem:[%s2 + $0x2c0] sm:$0xff]
  %v158 = vld [vmem:[%s2 + $0x2c8] sm:$0xff]
  %v159 = vld [vmem:[%s2 + $0x2d0] sm:$0xff]
  %v160 = vld [vmem:[%s2 + $0x2d8] sm:$0xff]
  %v161 = vld [vmem:[%s2 + $0x2e0] sm:$0xff]
  %v162 = vld [vmem:[%s2 + $0x2e8] sm:$0xff]
  %v163 = vld [vmem:[%s2 + $0x2f0] sm:$0xff]
  %v164 = vld [vmem:[%s2 + $0x2f8] sm:$0xff]
  %v165 = vld [vmem:[%s2 + $0x300] sm:$0xff]
  %v166 = vld [vmem:[%s2 + $0x308] sm:$0xff]
  %v167 = vld [vmem:[%s2 + $0x310] sm:$0xff]
  %v168 = vld [vmem:[%s2 + $0x318] sm:$0xff]
  %v169 = vld [vmem:[%s2 + $0x320] sm:$0xff]
  %v170 = vld [vmem:[%s2 + $0x328] sm:$0xff]
  %v171 = vld [vmem:[%s2 + $0x330] sm:$0xff]
  %v172 = vld [vmem:[%s2 + $0x338] sm:$0xff]
  %v173 = vld [vmem:[%s2 + $0x340] sm:$0xff]
  %v174 = vld [vmem:[%s2 + $0x348] sm:$0xff]
  %v175 = vld [vmem:[%s2 + $0x350] sm:$0xff]
  %v176 = vld [vmem:[%s2 + $0x358] sm:$0xff]
  %v177 = vld [vmem:[%s2 + $0x360] sm:$0xff]
  %v178 = vld [vmem:[%s2 + $0x368] sm:$0xff]
  %v179 = vld [vmem:[%s2 + $0x370] sm:$0xff]
  %v180 = vld [vmem:[%s2 + $0x378] sm:$0xff]
  %v181 = vld [vmem:[%s2 + $0x380] sm:$0xff]
  %v182 = vld [vmem:[%s2 + $0x388] sm:$0xff]
  %v183 = vld [vmem:[%s2 + $0x390] sm:$0xff]
  %v184 = vld [vmem:[%s2 + $0x398] sm:$0xff]
  %v185 = vld [vmem:[%s2 + $0x3a0] sm:$0xff]
  %v186 = vld [vmem:[%s2 + $0x3a8] sm:$0xff]
  %v187 = vld [vmem:[%s2 + $0x3b0] sm:$0xff]
  %v188 = vld [vmem:[%s2 + $0x3b8] sm:$0xff]
  %v189 = vld [vmem:[%s2 + $0x3c0] sm:$0xff]
  %v190 = vld [vmem:[%s2 + $0x3c8] sm:$0xff]
  %v191 = vld [vmem:[%s2 + $0x3d0] sm:$0xff]
  %v192 = vld [vmem:[%s2 + $0x3d8] sm:$0xff]
  %v193 = vld [vmem:[%s2 + $0x3e0] sm:$0xff]
  %v194 = vld [vmem:[%s2 + $0x3e8] sm:$0xff]
  %v195 = vld [vmem:[%s2 + $0x3f0] sm:$0xff]
  %v196 = vld [vmem:[%s2 + $0x3f8] sm:$0xff]
  %v197 = vld [vmem:[%s2 + $0x400] sm:$0xff]
  %v198 = vld [vmem:[%s2 + $0x408] sm:$0xff]
  %v199 = vld [vmem:[%s2 + $0x410] sm:$0xff]
  %v200 = vld [vmem:[%s2 + $0x418] sm:$0xff]
  %v201 = vld [vmem:[%s2 + $0x420] sm:$0xff]
  %v202 = vld [vmem:[%s2 + $0x428] sm:$0xff]
  %v203 = vld [vmem:[%s2 + $0x430] sm:$0xff]
  %v204 = vld [vmem:[%s2 + $0x438] sm:$0xff]
  %v205 = vld [vmem:[%s2 + $0x440] sm:$0xff]
  %v206 = vld [vmem:[%s2 + $0x448] sm:$0xff]
  %v207 = vld [vmem:[%s2 + $0x450] sm:$0xff]
  %v208 = vld [vmem:[%s2 + $0x458] sm:$0xff]
  %v209 = vld [vmem:[%s2 + $0x460] sm:$0xff]
  %v210 = vld [vmem:[%s2 + $0x468] sm:$0xff]
  %v211 = vld [vmem:[%s2 + $0x470] sm:$0xff]
  %v212 = vld [vmem:[%s2 + $0x478] sm:$0xff]
  %v213 = vld [vmem:[%s2 + $0x480] sm:$0xff]
  %v214 = vld [vmem:[%s2 + $0x488] sm:$0xff]
  %v215 = vld [vmem:[%s2 + $0x490] sm:$0xff]
  %v216 = vld [vmem:[%s2 + $0x498] sm:$0xff]
  %v217 = vld [vmem:[%s2 + $0x4a0] sm:$0xff]
  %v218 = vld [vmem:[%s2 + $0x4a8] sm:$0xff]
  %v219 = vld [vmem:[%s2 + $0x4b0] sm:$0xff]
  %v220 = vld [vmem:[%s2 + $0x4b8] sm:$0xff]
  %v221 = vld [vmem:[%s2 + $0x4c0] sm:$0xff]
  %v222 = vld [vmem:[%s2 + $0x4c8] sm:$0xff]
  %v223 = vld [vmem:[%s2 + $0x4d0] sm:$0xff]
  %v224 = vld [vmem:[%s2 + $0x4d8] sm:$0xff]
  %v225 = vld [vmem:[%s2 + $0x4e0] sm:$0xff]
  %v226 = vld [vmem:[%s2 + $0x4e8] sm:$0xff]
  %v227 = vld [vmem:[%s2 + $0x4f0] sm:$0xff]
  %v228 = vld [vmem:[%s2 + $0x4f8] sm:$0xff]
  %v229 = vld [vmem:[%s2 + $0x500] sm:$0xff]
  %v230 = vld [vmem:[%s2 + $0x508] sm:$0xff]
  %v231 = vld [vmem:[%s2 + $0x510] sm:$0xff]
  %v232 = vld [vmem:[%s2 + $0x518] sm:$0xff]
  %v233 = vld [vmem:[%s2 + $0x520] sm:$0xff]
  %v234 = vld [vmem:[%s2 + $0x528] sm:$0xff]
  %v235 = vld [vmem:[%s2 + $0x530] sm:$0xff]
  %v236 = vld [vmem:[%s2 + $0x538] sm:$0xff]
  %v237 = vld [vmem:[%s2 + $0x540] sm:$0xff]
  %v238 = vld [vmem:[%s2 + $0x548] sm:$0xff]
  %v239 = vld [vmem:[%s2 + $0x550] sm:$0xff]
  %v240 = vld [vmem:[%s2 + $0x558] sm:$0xff]
  %v241 = vld [vmem:[%s2 + $0x560] sm:$0xff]
  %v242 = vld [vmem:[%s2 + $0x568] sm:$0xff]
  %v243 = vld [vmem:[%s2 + $0x570] sm:$0xff]
  %v244 = vld [vmem:[%s2 + $0x578] sm:$0xff]
  %v245 = vld [vmem:[%s2 + $0x580] sm:$0xff]
  %v246 = vld [vmem:[%s2 + $0x588] sm:$0xff]
  %v247 = vld [vmem:[%s2 + $0x590] sm:$0xff]
  %v248 = vld [vmem:[%s2 + $0x598] sm:$0xff]
  %v249 = vld [vmem:[%s2 + $0x5a0] sm:$0xff]
  %v250 = vld [vmem:[%s2 + $0x5a8] sm:$0xff]
  %v251 = vld [vmem:[%s2 + $0x5b0] sm:$0xff]
  %v252 = vld [vmem:[%s2 + $0x5b8] sm:$0xff]
  %v253 = vld [vmem:[%s2 + $0x5c0] sm:$0xff]
  %v254 = vld [vmem:[%s2 + $0x5c8] sm:$0xff]
  %v255 = vld [vmem:[%s2 + $0x5d0] sm:$0xff]
  %v256 = vld [vmem:[%s2 + $0x5d8] sm:$0xff]
  %v257 = vld [vmem:[%s2 + $0x5e0] sm:$0xff]
  %v258 = vld [vmem:[%s2 + $0x5e8] sm:$0xff]
  %v259 = vld [vmem:[%s2 + $0x5f0] sm:$0xff]
  %v260 = vld [vmem:[%s2 + $0x5f8] sm:$0xff]
  %v261 = vld [vmem:[%s2 + $0x600] sm:$0xff]
  %v262 = vld [vmem:[%s2 + $0x608] sm:$0xff]
  %v263 = vld [vmem:[%s2 + $0x610] sm:$0xff]
  %v264 = vld [vmem:[%s2 + $0x618] sm:$0xff]
  %v265 = vld [vmem:[%s2 + $0x620] sm:$0xff]
  %v266 = vld [vmem:[%s2 + $0x628] sm:$0xff]
  %v267 = vld [vmem:[%s2 + $0x630] sm:$0xff]
  %v268 = vld [vmem:[%s2 + $0x638] sm:$0xff]
  %v269 = vld [vmem:[%s2 + $0x640] sm:$0xff]
  %v270 = vld [vmem:[%s2 + $0x648] sm:$0xff]
  %v271 = vld [vmem:[%s2 + $0x650] sm:$0xff]
  %v272 = vld [vmem:[%s2 + $0x658] sm:$0xff]
  %v273 = vld [vmem:[%s2 + $0x660] sm:$0xff]
  %v274 = vld [vmem:[%s2 + $0x668] sm:$0xff]
  %v275 = vld [vmem:[%s2 + $0x670] sm:$0xff]
  %v276 = vld [vmem:[%s2 + $0x678] sm:$0xff]
  %v277 = vld [vmem:[%s2 + $0x680] sm:$0xff]
  %v278 = vld [vmem:[%s2 + $0x688] sm:$0xff]
  %v279 = vld [vmem:[%s2 + $0x690] sm:$0xff]
  %v280 = vld [vmem:[%s2 + $0x698] sm:$0xff]
  %v281 = vld [vmem:[%s2 + $0x6a0] sm:$0xff]
  %v282 = vld [vmem:[%s2 + $0x6a8] sm:$0xff]
  %v283 = vld [vmem:[%s2 + $0x6b0] sm:$0xff]
  %v284 = vld [vmem:[%s2 + $0x6b8] sm:$0xff]
  %v285 = vld [vmem:[%s2 + $0x6c0] sm:$0xff]
  %v286 = vld [vmem:[%s2 + $0x6c8] sm:$0xff]
  %v287 = vld [vmem:[%s2 + $0x6d0] sm:$0xff]
  %v288 = vld [vmem:[%s2 + $0x6d8] sm:$0xff]
  %v289 = vld [vmem:[%s2 + $0x6e0] sm:$0xff]
  %v290 = vld [vmem:[%s2 + $0x6e8] sm:$0xff]
  %v291 = vld [vmem:[%s2 + $0x6f0] sm:$0xff]
  %v292 = vld [vmem:[%s2 + $0x6f8] sm:$0xff]
  %v293 = vld [vmem:[%s2 + $0x700] sm:$0xff]
  %v294 = vld [vmem:[%s2 + $0x708] sm:$0xff]
  %v295 = vld [vmem:[%s2 + $0x710] sm:$0xff]
  %v296 = vld [vmem:[%s2 + $0x718] sm:$0xff]
  %v297 = vld [vmem:[%s2 + $0x720] sm:$0xff]
  %v298 = vld [vmem:[%s2 + $0x728] sm:$0xff]
  %v299 = vld [vmem:[%s2 + $0x730] sm:$0xff]
  %v300 = vld [vmem:[%s2 + $0x738] sm:$0xff]
  %v301 = vld [vmem:[%s2 + $0x740] sm:$0xff]
  %v302 = vld [vmem:[%s2 + $0x748] sm:$0xff]
  %v303 = vld [vmem:[%s2 + $0x750] sm:$0xff]
  %v304 = vld [vmem:[%s2 + $0x758] sm:$0xff]
  %v305 = vld [vmem:[%s2 + $0x760] sm:$0xff]
  %v306 = vld [vmem:[%s2 + $0x768] sm:$0xff]
  %v307 = vld [vmem:[%s2 + $0x770] sm:$0xff]
  %v308 = vld [vmem:[%s2 + $0x778] sm:$0xff]
  %v309 = vld [vmem:[%s2 + $0x780] sm:$0xff]
  %v310 = vld [vmem:[%s2 + $0x788] sm:$0xff]
  %v311 = vld [vmem:[%s2 + $0x790] sm:$0xff]
  %v312 = vld [vmem:[%s2 + $0x798] sm:$0xff]
  %v313 = vld [vmem:[%s2 + $0x7a0] sm:$0xff]
  %v314 = vld [vmem:[%s2 + $0x7a8] sm:$0xff]
  %v315 = vld [vmem:[%s2 + $0x7b0] sm:$0xff]
  %v316 = vld [vmem:[%s2 + $0x7b8] sm:$0xff]
  %v317 = vld [vmem:[%s2 + $0x7c0] sm:$0xff]
  %v318 = vld [vmem:[%s2 + $0x7c8] sm:$0xff]
  %v319 = vld [vmem:[%s2 + $0x7d0] sm:$0xff]
  %v320 = vld [vmem:[%s2 + $0x7d8] sm:$0xff]
  %v321 = vld [vmem:[%s2 + $0x7e0] sm:$0xff]
  %v322 = vld [vmem:[%s2 + $0x7e8] sm:$0xff]
  %v323 = vld [vmem:[%s2 + $0x7f0] sm:$0xff]
  %v324 = vld [vmem:[%s2 + $0x7f8] sm:$0xff]
  %v325 = vld [vmem:[%s3] sm:$0xf]
  %v327 = vperm.slane %v325, 0
  %v328 = vperm.slane %v325, 1
  %v329 = vperm.slane %v325, 2
  %v330 = vperm.slane %v325, 3
  %v591 = vunpack.c.l.b16 %v69
  %v592 = vunpack.c.h.b16 %v69
  %v593 = vunpack.c.l.b16 %v70
  %v594 = vunpack.c.h.b16 %v70
  %v595 = vunpack.c.l.b16 %v71
  %v596 = vunpack.c.h.b16 %v71
  %v597 = vunpack.c.l.b16 %v72
  %v598 = vunpack.c.h.b16 %v72
  %v599 = vunpack.c.l.b16 %v73
  %v600 = vunpack.c.h.b16 %v73
  %v601 = vunpack.c.l.b16 %v74
  %v602 = vunpack.c.h.b16 %v74
  %v603 = vunpack.c.l.b16 %v75
  %v604 = vunpack.c.h.b16 %v75
  %v605 = vunpack.c.l.b16 %v76
  %v606 = vunpack.c.h.b16 %v76
  %v607 = vunpack.c.l.b16 %v77
  %v608 = vunpack.c.h.b16 %v77
  %v609 = vunpack.c.l.b16 %v78
  %v610 = vunpack.c.h.b16 %v78
  %v611 = vunpack.c.l.b16 %v79
  %v612 = vunpack.c.h.b16 %v79
  %v613 = vunpack.c.l.b16 %v80
  %v614 = vunpack.c.h.b16 %v80
  %v615 = vunpack.c.l.b16 %v81
  %v616 = vunpack.c.h.b16 %v81
  %v617 = vunpack.c.l.b16 %v82
  %v618 = vunpack.c.h.b16 %v82
  %v619 = vunpack.c.l.b16 %v83
  %v620 = vunpack.c.h.b16 %v83
  %v621 = vunpack.c.l.b16 %v84
  %v622 = vunpack.c.h.b16 %v84
  %v623 = vunpack.c.l.b16 %v85
  %v624 = vunpack.c.h.b16 %v85
  %v625 = vunpack.c.l.b16 %v86
  %v626 = vunpack.c.h.b16 %v86
  %v627 = vunpack.c.l.b16 %v87
  %v628 = vunpack.c.h.b16 %v87
  %v629 = vunpack.c.l.b16 %v88
  %v630 = vunpack.c.h.b16 %v88
  %v631 = vunpack.c.l.b16 %v89
  %v632 = vunpack.c.h.b16 %v89
  %v633 = vunpack.c.l.b16 %v90
  %v634 = vunpack.c.h.b16 %v90
  %v635 = vunpack.c.l.b16 %v91
  %v636 = vunpack.c.h.b16 %v91
  %v637 = vunpack.c.l.b16 %v92
  %v638 = vunpack.c.h.b16 %v92
  %v639 = vunpack.c.l.b16 %v93
  %v640 = vunpack.c.h.b16 %v93
  %v641 = vunpack.c.l.b16 %v94
  %v642 = vunpack.c.h.b16 %v94
  %v643 = vunpack.c.l.b16 %v95
  %v644 = vunpack.c.h.b16 %v95
  %v645 = vunpack.c.l.b16 %v96
  %v646 = vunpack.c.h.b16 %v96
  %v647 = vunpack.c.l.b16 %v97
  %v648 = vunpack.c.h.b16 %v97
  %v649 = vunpack.c.l.b16 %v98
  %v650 = vunpack.c.h.b16 %v98
  %v651 = vunpack.c.l.b16 %v99
  %v652 = vunpack.c.h.b16 %v99
  %v653 = vunpack.c.l.b16 %v100
  %v654 = vunpack.c.h.b16 %v100
  %v655 = vunpack.c.l.b16 %v101
  %v656 = vunpack.c.h.b16 %v101
  %v657 = vunpack.c.l.b16 %v102
  %v658 = vunpack.c.h.b16 %v102
  %v659 = vunpack.c.l.b16 %v103
  %v660 = vunpack.c.h.b16 %v103
  %v661 = vunpack.c.l.b16 %v104
  %v662 = vunpack.c.h.b16 %v104
  %v663 = vunpack.c.l.b16 %v105
  %v664 = vunpack.c.h.b16 %v105
  %v665 = vunpack.c.l.b16 %v106
  %v666 = vunpack.c.h.b16 %v106
  %v667 = vunpack.c.l.b16 %v107
  %v668 = vunpack.c.h.b16 %v107
  %v669 = vunpack.c.l.b16 %v108
  %v670 = vunpack.c.h.b16 %v108
  %v671 = vunpack.c.l.b16 %v109
  %v672 = vunpack.c.h.b16 %v109
  %v673 = vunpack.c.l.b16 %v110
  %v674 = vunpack.c.h.b16 %v110
  %v675 = vunpack.c.l.b16 %v111
  %v676 = vunpack.c.h.b16 %v111
  %v677 = vunpack.c.l.b16 %v112
  %v678 = vunpack.c.h.b16 %v112
  %v679 = vunpack.c.l.b16 %v113
  %v680 = vunpack.c.h.b16 %v113
  %v681 = vunpack.c.l.b16 %v114
  %v682 = vunpack.c.h.b16 %v114
  %v683 = vunpack.c.l.b16 %v115
  %v684 = vunpack.c.h.b16 %v115
  %v685 = vunpack.c.l.b16 %v116
  %v686 = vunpack.c.h.b16 %v116
  %v687 = vunpack.c.l.b16 %v117
  %v688 = vunpack.c.h.b16 %v117
  %v689 = vunpack.c.l.b16 %v118
  %v690 = vunpack.c.h.b16 %v118
  %v691 = vunpack.c.l.b16 %v119
  %v692 = vunpack.c.h.b16 %v119
  %v693 = vunpack.c.l.b16 %v120
  %v694 = vunpack.c.h.b16 %v120
  %v695 = vunpack.c.l.b16 %v121
  %v696 = vunpack.c.h.b16 %v121
  %v697 = vunpack.c.l.b16 %v122
  %v698 = vunpack.c.h.b16 %v122
  %v699 = vunpack.c.l.b16 %v123
  %v700 = vunpack.c.h.b16 %v123
  %v701 = vunpack.c.l.b16 %v124
  %v702 = vunpack.c.h.b16 %v124
  %v703 = vunpack.c.l.b16 %v125
  %v704 = vunpack.c.h.b16 %v125
  %v705 = vunpack.c.l.b16 %v126
  %v706 = vunpack.c.h.b16 %v126
  %v707 = vunpack.c.l.b16 %v127
  %v708 = vunpack.c.h.b16 %v127
  %v709 = vunpack.c.l.b16 %v128
  %v710 = vunpack.c.h.b16 %v128
  %v711 = vunpack.c.l.b16 %v129
  %v712 = vunpack.c.h.b16 %v129
  %v713 = vunpack.c.l.b16 %v130
  %v714 = vunpack.c.h.b16 %v130
  %v715 = vunpack.c.l.b16 %v131
  %v716 = vunpack.c.h.b16 %v131
  %v717 = vunpack.c.l.b16 %v132
  %v718 = vunpack.c.h.b16 %v132
  %v719 = vunpack.c.l.b16 %v133
  %v720 = vunpack.c.h.b16 %v133
  %v721 = vunpack.c.l.b16 %v134
  %v722 = vunpack.c.h.b16 %v134
  %v723 = vunpack.c.l.b16 %v135
  %v724 = vunpack.c.h.b16 %v135
  %v725 = vunpack.c.l.b16 %v136
  %v726 = vunpack.c.h.b16 %v136
  %v727 = vunpack.c.l.b16 %v137
  %v728 = vunpack.c.h.b16 %v137
  %v729 = vunpack.c.l.b16 %v138
  %v730 = vunpack.c.h.b16 %v138
  %v731 = vunpack.c.l.b16 %v139
  %v732 = vunpack.c.h.b16 %v139
  %v733 = vunpack.c.l.b16 %v140
  %v734 = vunpack.c.h.b16 %v140
  %v735 = vunpack.c.l.b16 %v141
  %v736 = vunpack.c.h.b16 %v141
  %v737 = vunpack.c.l.b16 %v142
  %v738 = vunpack.c.h.b16 %v142
  %v739 = vunpack.c.l.b16 %v143
  %v740 = vunpack.c.h.b16 %v143
  %v741 = vunpack.c.l.b16 %v144
  %v742 = vunpack.c.h.b16 %v144
  %v743 = vunpack.c.l.b16 %v145
  %v744 = vunpack.c.h.b16 %v145
  %v745 = vunpack.c.l.b16 %v146
  %v746 = vunpack.c.h.b16 %v146
  %v747 = vunpack.c.l.b16 %v147
  %v748 = vunpack.c.h.b16 %v147
  %v749 = vunpack.c.l.b16 %v148
  %v750 = vunpack.c.h.b16 %v148
  %v751 = vunpack.c.l.b16 %v149
  %v752 = vunpack.c.h.b16 %v149
  %v753 = vunpack.c.l.b16 %v150
  %v754 = vunpack.c.h.b16 %v150
  %v755 = vunpack.c.l.b16 %v151
  %v756 = vunpack.c.h.b16 %v151
  %v757 = vunpack.c.l.b16 %v152
  %v758 = vunpack.c.h.b16 %v152
  %v759 = vunpack.c.l.b16 %v153
  %v760 = vunpack.c.h.b16 %v153
  %v761 = vunpack.c.l.b16 %v154
  %v762 = vunpack.c.h.b16 %v154
  %v763 = vunpack.c.l.b16 %v155
  %v764 = vunpack.c.h.b16 %v155
  %v765 = vunpack.c.l.b16 %v156
  %v766 = vunpack.c.h.b16 %v156
  %v767 = vunpack.c.l.b16 %v157
  %v768 = vunpack.c.h.b16 %v157
  %v769 = vunpack.c.l.b16 %v158
  %v770 = vunpack.c.h.b16 %v158
  %v771 = vunpack.c.l.b16 %v159
  %v772 = vunpack.c.h.b16 %v159
  %v773 = vunpack.c.l.b16 %v160
  %v774 = vunpack.c.h.b16 %v160
  %v775 = vunpack.c.l.b16 %v161
  %v776 = vunpack.c.h.b16 %v161
  %v777 = vunpack.c.l.b16 %v162
  %v778 = vunpack.c.h.b16 %v162
  %v779 = vunpack.c.l.b16 %v163
  %v780 = vunpack.c.h.b16 %v163
  %v781 = vunpack.c.l.b16 %v164
  %v782 = vunpack.c.h.b16 %v164
  %v783 = vunpack.c.l.b16 %v165
  %v784 = vunpack.c.h.b16 %v165
  %v785 = vunpack.c.l.b16 %v166
  %v786 = vunpack.c.h.b16 %v166
  %v787 = vunpack.c.l.b16 %v167
  %v788 = vunpack.c.h.b16 %v167
  %v789 = vunpack.c.l.b16 %v168
  %v790 = vunpack.c.h.b16 %v168
  %v791 = vunpack.c.l.b16 %v169
  %v792 = vunpack.c.h.b16 %v169
  %v793 = vunpack.c.l.b16 %v170
  %v794 = vunpack.c.h.b16 %v170
  %v795 = vunpack.c.l.b16 %v171
  %v796 = vunpack.c.h.b16 %v171
  %v797 = vunpack.c.l.b16 %v172
  %v798 = vunpack.c.h.b16 %v172
  %v799 = vunpack.c.l.b16 %v173
  %v800 = vunpack.c.h.b16 %v173
  %v801 = vunpack.c.l.b16 %v174
  %v802 = vunpack.c.h.b16 %v174
  %v803 = vunpack.c.l.b16 %v175
  %v804 = vunpack.c.h.b16 %v175
  %v805 = vunpack.c.l.b16 %v176
  %v806 = vunpack.c.h.b16 %v176
  %v807 = vunpack.c.l.b16 %v177
  %v808 = vunpack.c.h.b16 %v177
  %v809 = vunpack.c.l.b16 %v178
  %v810 = vunpack.c.h.b16 %v178
  %v811 = vunpack.c.l.b16 %v179
  %v812 = vunpack.c.h.b16 %v179
  %v813 = vunpack.c.l.b16 %v180
  %v814 = vunpack.c.h.b16 %v180
  %v815 = vunpack.c.l.b16 %v181
  %v816 = vunpack.c.h.b16 %v181
  %v817 = vunpack.c.l.b16 %v182
  %v818 = vunpack.c.h.b16 %v182
  %v819 = vunpack.c.l.b16 %v183
  %v820 = vunpack.c.h.b16 %v183
  %v821 = vunpack.c.l.b16 %v184
  %v822 = vunpack.c.h.b16 %v184
  %v823 = vunpack.c.l.b16 %v185
  %v824 = vunpack.c.h.b16 %v185
  %v825 = vunpack.c.l.b16 %v186
  %v826 = vunpack.c.h.b16 %v186
  %v827 = vunpack.c.l.b16 %v187
  %v828 = vunpack.c.h.b16 %v187
  %v829 = vunpack.c.l.b16 %v188
  %v830 = vunpack.c.h.b16 %v188
  %v831 = vunpack.c.l.b16 %v189
  %v832 = vunpack.c.h.b16 %v189
  %v833 = vunpack.c.l.b16 %v190
  %v834 = vunpack.c.h.b16 %v190
  %v835 = vunpack.c.l.b16 %v191
  %v836 = vunpack.c.h.b16 %v191
  %v837 = vunpack.c.l.b16 %v192
  %v838 = vunpack.c.h.b16 %v192
  %v839 = vunpack.c.l.b16 %v193
  %v840 = vunpack.c.h.b16 %v193
  %v841 = vunpack.c.l.b16 %v194
  %v842 = vunpack.c.h.b16 %v194
  %v843 = vunpack.c.l.b16 %v195
  %v844 = vunpack.c.h.b16 %v195
  %v845 = vunpack.c.l.b16 %v196
  %v846 = vunpack.c.h.b16 %v196
  %v847 = vunpack.c.l.b16 %v197
  %v848 = vunpack.c.h.b16 %v197
  %v849 = vunpack.c.l.b16 %v198
  %v850 = vunpack.c.h.b16 %v198
  %v851 = vunpack.c.l.b16 %v199
  %v852 = vunpack.c.h.b16 %v199
  %v853 = vunpack.c.l.b16 %v200
  %v854 = vunpack.c.h.b16 %v200
  %v855 = vunpack.c.l.b16 %v201
  %v856 = vunpack.c.h.b16 %v201
  %v857 = vunpack.c.l.b16 %v202
  %v858 = vunpack.c.h.b16 %v202
  %v859 = vunpack.c.l.b16 %v203
  %v860 = vunpack.c.h.b16 %v203
  %v861 = vunpack.c.l.b16 %v204
  %v862 = vunpack.c.h.b16 %v204
  %v863 = vunpack.c.l.b16 %v205
  %v864 = vunpack.c.h.b16 %v205
  %v865 = vunpack.c.l.b16 %v206
  %v866 = vunpack.c.h.b16 %v206
  %v867 = vunpack.c.l.b16 %v207
  %v868 = vunpack.c.h.b16 %v207
  %v869 = vunpack.c.l.b16 %v208
  %v870 = vunpack.c.h.b16 %v208
  %v871 = vunpack.c.l.b16 %v209
  %v872 = vunpack.c.h.b16 %v209
  %v873 = vunpack.c.l.b16 %v210
  %v874 = vunpack.c.h.b16 %v210
  %v875 = vunpack.c.l.b16 %v211
  %v876 = vunpack.c.h.b16 %v211
  %v877 = vunpack.c.l.b16 %v212
  %v878 = vunpack.c.h.b16 %v212
  %v879 = vunpack.c.l.b16 %v213
  %v880 = vunpack.c.h.b16 %v213
  %v881 = vunpack.c.l.b16 %v214
  %v882 = vunpack.c.h.b16 %v214
  %v883 = vunpack.c.l.b16 %v215
  %v884 = vunpack.c.h.b16 %v215
  %v885 = vunpack.c.l.b16 %v216
  %v886 = vunpack.c.h.b16 %v216
  %v887 = vunpack.c.l.b16 %v217
  %v888 = vunpack.c.h.b16 %v217
  %v889 = vunpack.c.l.b16 %v218
  %v890 = vunpack.c.h.b16 %v218
  %v891 = vunpack.c.l.b16 %v219
  %v892 = vunpack.c.h.b16 %v219
  %v893 = vunpack.c.l.b16 %v220
  %v894 = vunpack.c.h.b16 %v220
  %v895 = vunpack.c.l.b16 %v221
  %v896 = vunpack.c.h.b16 %v221
  %v897 = vunpack.c.l.b16 %v222
  %v898 = vunpack.c.h.b16 %v222
  %v899 = vunpack.c.l.b16 %v223
  %v900 = vunpack.c.h.b16 %v223
  %v901 = vunpack.c.l.b16 %v224
  %v902 = vunpack.c.h.b16 %v224
  %v903 = vunpack.c.l.b16 %v225
  %v904 = vunpack.c.h.b16 %v225
  %v905 = vunpack.c.l.b16 %v226
  %v906 = vunpack.c.h.b16 %v226
  %v907 = vunpack.c.l.b16 %v227
  %v908 = vunpack.c.h.b16 %v227
  %v909 = vunpack.c.l.b16 %v228
  %v910 = vunpack.c.h.b16 %v228
  %v911 = vunpack.c.l.b16 %v229
  %v912 = vunpack.c.h.b16 %v229
  %v913 = vunpack.c.l.b16 %v230
  %v914 = vunpack.c.h.b16 %v230
  %v915 = vunpack.c.l.b16 %v231
  %v916 = vunpack.c.h.b16 %v231
  %v917 = vunpack.c.l.b16 %v232
  %v918 = vunpack.c.h.b16 %v232
  %v919 = vunpack.c.l.b16 %v233
  %v920 = vunpack.c.h.b16 %v233
  %v921 = vunpack.c.l.b16 %v234
  %v922 = vunpack.c.h.b16 %v234
  %v923 = vunpack.c.l.b16 %v235
  %v924 = vunpack.c.h.b16 %v235
  %v925 = vunpack.c.l.b16 %v236
  %v926 = vunpack.c.h.b16 %v236
  %v927 = vunpack.c.l.b16 %v237
  %v928 = vunpack.c.h.b16 %v237
  %v929 = vunpack.c.l.b16 %v238
  %v930 = vunpack.c.h.b16 %v238
  %v931 = vunpack.c.l.b16 %v239
  %v932 = vunpack.c.h.b16 %v239
  %v933 = vunpack.c.l.b16 %v240
  %v934 = vunpack.c.h.b16 %v240
  %v935 = vunpack.c.l.b16 %v241
  %v936 = vunpack.c.h.b16 %v241
  %v937 = vunpack.c.l.b16 %v242
  %v938 = vunpack.c.h.b16 %v242
  %v939 = vunpack.c.l.b16 %v243
  %v940 = vunpack.c.h.b16 %v243
  %v941 = vunpack.c.l.b16 %v244
  %v942 = vunpack.c.h.b16 %v244
  %v943 = vunpack.c.l.b16 %v245
  %v944 = vunpack.c.h.b16 %v245
  %v945 = vunpack.c.l.b16 %v246
  %v946 = vunpack.c.h.b16 %v246
  %v947 = vunpack.c.l.b16 %v247
  %v948 = vunpack.c.h.b16 %v247
  %v949 = vunpack.c.l.b16 %v248
  %v950 = vunpack.c.h.b16 %v248
  %v951 = vunpack.c.l.b16 %v249
  %v952 = vunpack.c.h.b16 %v249
  %v953 = vunpack.c.l.b16 %v250
  %v954 = vunpack.c.h.b16 %v250
  %v955 = vunpack.c.l.b16 %v251
  %v956 = vunpack.c.h.b16 %v251
  %v957 = vunpack.c.l.b16 %v252
  %v958 = vunpack.c.h.b16 %v252
  %v959 = vunpack.c.l.b16 %v253
  %v960 = vunpack.c.h.b16 %v253
  %v961 = vunpack.c.l.b16 %v254
  %v962 = vunpack.c.h.b16 %v254
  %v963 = vunpack.c.l.b16 %v255
  %v964 = vunpack.c.h.b16 %v255
  %v965 = vunpack.c.l.b16 %v256
  %v966 = vunpack.c.h.b16 %v256
  %v967 = vunpack.c.l.b16 %v257
  %v968 = vunpack.c.h.b16 %v257
  %v969 = vunpack.c.l.b16 %v258
  %v970 = vunpack.c.h.b16 %v258
  %v971 = vunpack.c.l.b16 %v259
  %v972 = vunpack.c.h.b16 %v259
  %v973 = vunpack.c.l.b16 %v260
  %v974 = vunpack.c.h.b16 %v260
  %v975 = vunpack.c.l.b16 %v261
  %v976 = vunpack.c.h.b16 %v261
  %v977 = vunpack.c.l.b16 %v262
  %v978 = vunpack.c.h.b16 %v262
  %v979 = vunpack.c.l.b16 %v263
  %v980 = vunpack.c.h.b16 %v263
  %v981 = vunpack.c.l.b16 %v264
  %v982 = vunpack.c.h.b16 %v264
  %v983 = vunpack.c.l.b16 %v265
  %v984 = vunpack.c.h.b16 %v265
  %v985 = vunpack.c.l.b16 %v266
  %v986 = vunpack.c.h.b16 %v266
  %v987 = vunpack.c.l.b16 %v267
  %v988 = vunpack.c.h.b16 %v267
  %v989 = vunpack.c.l.b16 %v268
  %v990 = vunpack.c.h.b16 %v268
  %v991 = vunpack.c.l.b16 %v269
  %v992 = vunpack.c.h.b16 %v269
  %v993 = vunpack.c.l.b16 %v270
  %v994 = vunpack.c.h.b16 %v270
  %v995 = vunpack.c.l.b16 %v271
  %v996 = vunpack.c.h.b16 %v271
  %v997 = vunpack.c.l.b16 %v272
  %v998 = vunpack.c.h.b16 %v272
  %v999 = vunpack.c.l.b16 %v273
  %v1000 = vunpack.c.h.b16 %v273
  %v1001 = vunpack.c.l.b16 %v274
  %v1002 = vunpack.c.h.b16 %v274
  %v1003 = vunpack.c.l.b16 %v275
  %v1004 = vunpack.c.h.b16 %v275
  %v1005 = vunpack.c.l.b16 %v276
  %v1006 = vunpack.c.h.b16 %v276
  %v1007 = vunpack.c.l.b16 %v277
  %v1008 = vunpack.c.h.b16 %v277
  %v1009 = vunpack.c.l.b16 %v278
  %v1010 = vunpack.c.h.b16 %v278
  %v1011 = vunpack.c.l.b16 %v279
  %v1012 = vunpack.c.h.b16 %v279
  %v1013 = vunpack.c.l.b16 %v280
  %v1014 = vunpack.c.h.b16 %v280
  %v1015 = vunpack.c.l.b16 %v281
  %v1016 = vunpack.c.h.b16 %v281
  %v1017 = vunpack.c.l.b16 %v282
  %v1018 = vunpack.c.h.b16 %v282
  %v1019 = vunpack.c.l.b16 %v283
  %v1020 = vunpack.c.h.b16 %v283
  %v1021 = vunpack.c.l.b16 %v284
  %v1022 = vunpack.c.h.b16 %v284
  %v1023 = vunpack.c.l.b16 %v285
  %v1024 = vunpack.c.h.b16 %v285
  %v1025 = vunpack.c.l.b16 %v286
  %v1026 = vunpack.c.h.b16 %v286
  %v1027 = vunpack.c.l.b16 %v287
  %v1028 = vunpack.c.h.b16 %v287
  %v1029 = vunpack.c.l.b16 %v288
  %v1030 = vunpack.c.h.b16 %v288
  %v1031 = vunpack.c.l.b16 %v289
  %v1032 = vunpack.c.h.b16 %v289
  %v1033 = vunpack.c.l.b16 %v290
  %v1034 = vunpack.c.h.b16 %v290
  %v1035 = vunpack.c.l.b16 %v291
  %v1036 = vunpack.c.h.b16 %v291
  %v1037 = vunpack.c.l.b16 %v292
  %v1038 = vunpack.c.h.b16 %v292
  %v1039 = vunpack.c.l.b16 %v293
  %v1040 = vunpack.c.h.b16 %v293
  %v1041 = vunpack.c.l.b16 %v294
  %v1042 = vunpack.c.h.b16 %v294
  %v1043 = vunpack.c.l.b16 %v295
  %v1044 = vunpack.c.h.b16 %v295
  %v1045 = vunpack.c.l.b16 %v296
  %v1046 = vunpack.c.h.b16 %v296
  %v1047 = vunpack.c.l.b16 %v297
  %v1048 = vunpack.c.h.b16 %v297
  %v1049 = vunpack.c.l.b16 %v298
  %v1050 = vunpack.c.h.b16 %v298
  %v1051 = vunpack.c.l.b16 %v299
  %v1052 = vunpack.c.h.b16 %v299
  %v1053 = vunpack.c.l.b16 %v300
  %v1054 = vunpack.c.h.b16 %v300
  %v1055 = vunpack.c.l.b16 %v301
  %v1056 = vunpack.c.h.b16 %v301
  %v1057 = vunpack.c.l.b16 %v302
  %v1058 = vunpack.c.h.b16 %v302
  %v1059 = vunpack.c.l.b16 %v303
  %v1060 = vunpack.c.h.b16 %v303
  %v1061 = vunpack.c.l.b16 %v304
  %v1062 = vunpack.c.h.b16 %v304
  %v1063 = vunpack.c.l.b16 %v305
  %v1064 = vunpack.c.h.b16 %v305
  %v1065 = vunpack.c.l.b16 %v306
  %v1066 = vunpack.c.h.b16 %v306
  %v1067 = vunpack.c.l.b16 %v307
  %v1068 = vunpack.c.h.b16 %v307
  %v1069 = vunpack.c.l.b16 %v308
  %v1070 = vunpack.c.h.b16 %v308
  %v1071 = vunpack.c.l.b16 %v309
  %v1072 = vunpack.c.h.b16 %v309
  %v1073 = vunpack.c.l.b16 %v310
  %v1074 = vunpack.c.h.b16 %v310
  %v1075 = vunpack.c.l.b16 %v311
  %v1076 = vunpack.c.h.b16 %v311
  %v1077 = vunpack.c.l.b16 %v312
  %v1078 = vunpack.c.h.b16 %v312
  %v1079 = vunpack.c.l.b16 %v313
  %v1080 = vunpack.c.h.b16 %v313
  %v1081 = vunpack.c.l.b16 %v314
  %v1082 = vunpack.c.h.b16 %v314
  %v1083 = vunpack.c.l.b16 %v315
  %v1084 = vunpack.c.h.b16 %v315
  %v1085 = vunpack.c.l.b16 %v316
  %v1086 = vunpack.c.h.b16 %v316
  %v1087 = vunpack.c.l.b16 %v317
  %v1088 = vunpack.c.h.b16 %v317
  %v1089 = vunpack.c.l.b16 %v318
  %v1090 = vunpack.c.h.b16 %v318
  %v1091 = vunpack.c.l.b16 %v319
  %v1092 = vunpack.c.h.b16 %v319
  %v1093 = vunpack.c.l.b16 %v320
  %v1094 = vunpack.c.h.b16 %v320
  %v1095 = vunpack.c.l.b16 %v321
  %v1096 = vunpack.c.h.b16 %v321
  %v1097 = vunpack.c.l.b16 %v322
  %v1098 = vunpack.c.h.b16 %v322
  %v1099 = vunpack.c.l.b16 %v323
  %v1100 = vunpack.c.h.b16 %v323
  %v1101 = vunpack.c.l.b16 %v324
  %v1102 = vunpack.c.h.b16 %v324
  %v1103 = vpack.c.b16 %v595, %v591
  %v1104 = vpack.c.b16 %v596, %v592
  %v1105 = vpack.c.b16 %v597, %v593
  %v1106 = vpack.c.b16 %v598, %v594
  %v1107 = vpack.c.b16 %v603, %v599
  %v1108 = vpack.c.b16 %v604, %v600
  %v1109 = vpack.c.b16 %v605, %v601
  %v1110 = vpack.c.b16 %v606, %v602
  %v1111 = vpack.c.b16 %v611, %v607
  %v1112 = vpack.c.b16 %v612, %v608
  %v1113 = vpack.c.b16 %v613, %v609
  %v1114 = vpack.c.b16 %v614, %v610
  %v1115 = vpack.c.b16 %v619, %v615
  %v1116 = vpack.c.b16 %v620, %v616
  %v1117 = vpack.c.b16 %v621, %v617
  %v1118 = vpack.c.b16 %v622, %v618
  %v1119 = vpack.c.b16 %v627, %v623
  %v1120 = vpack.c.b16 %v628, %v624
  %v1121 = vpack.c.b16 %v629, %v625
  %v1122 = vpack.c.b16 %v630, %v626
  %v1123 = vpack.c.b16 %v635, %v631
  %v1124 = vpack.c.b16 %v636, %v632
  %v1125 = vpack.c.b16 %v637, %v633
  %v1126 = vpack.c.b16 %v638, %v634
  %v1127 = vpack.c.b16 %v643, %v639
  %v1128 = vpack.c.b16 %v644, %v640
  %v1129 = vpack.c.b16 %v645, %v641
  %v1130 = vpack.c.b16 %v646, %v642
  %v1131 = vpack.c.b16 %v651, %v647
  %v1132 = vpack.c.b16 %v652, %v648
  %v1133 = vpack.c.b16 %v653, %v649
  %v1134 = vpack.c.b16 %v654, %v650
  %v1135 = vpack.c.b16 %v659, %v655
  %v1136 = vpack.c.b16 %v660, %v656
  %v1137 = vpack.c.b16 %v661, %v657
  %v1138 = vpack.c.b16 %v662, %v658
  %v1139 = vpack.c.b16 %v667, %v663
  %v1140 = vpack.c.b16 %v668, %v664
  %v1141 = vpack.c.b16 %v669, %v665
  %v1142 = vpack.c.b16 %v670, %v666
  %v1143 = vpack.c.b16 %v675, %v671
  %v1144 = vpack.c.b16 %v676, %v672
  %v1145 = vpack.c.b16 %v677, %v673
  %v1146 = vpack.c.b16 %v678, %v674
  %v1147 = vpack.c.b16 %v683, %v679
  %v1148 = vpack.c.b16 %v684, %v680
  %v1149 = vpack.c.b16 %v685, %v681
  %v1150 = vpack.c.b16 %v686, %v682
  %v1151 = vpack.c.b16 %v691, %v687
  %v1152 = vpack.c.b16 %v692, %v688
  %v1153 = vpack.c.b16 %v693, %v689
  %v1154 = vpack.c.b16 %v694, %v690
  %v1155 = vpack.c.b16 %v699, %v695
  %v1156 = vpack.c.b16 %v700, %v696
  %v1157 = vpack.c.b16 %v701, %v697
  %v1158 = vpack.c.b16 %v702, %v698
  %v1159 = vpack.c.b16 %v707, %v703
  %v1160 = vpack.c.b16 %v708, %v704
  %v1161 = vpack.c.b16 %v709, %v705
  %v1162 = vpack.c.b16 %v710, %v706
  %v1163 = vpack.c.b16 %v715, %v711
  %v1164 = vpack.c.b16 %v716, %v712
  %v1165 = vpack.c.b16 %v717, %v713
  %v1166 = vpack.c.b16 %v718, %v714
  %v1167 = vpack.c.b16 %v723, %v719
  %v1168 = vpack.c.b16 %v724, %v720
  %v1169 = vpack.c.b16 %v725, %v721
  %v1170 = vpack.c.b16 %v726, %v722
  %v1171 = vpack.c.b16 %v731, %v727
  %v1172 = vpack.c.b16 %v732, %v728
  %v1173 = vpack.c.b16 %v733, %v729
  %v1174 = vpack.c.b16 %v734, %v730
  %v1175 = vpack.c.b16 %v739, %v735
  %v1176 = vpack.c.b16 %v740, %v736
  %v1177 = vpack.c.b16 %v741, %v737
  %v1178 = vpack.c.b16 %v742, %v738
  %v1179 = vpack.c.b16 %v747, %v743
  %v1180 = vpack.c.b16 %v748, %v744
  %v1181 = vpack.c.b16 %v749, %v745
  %v1182 = vpack.c.b16 %v750, %v746
  %v1183 = vpack.c.b16 %v755, %v751
  %v1184 = vpack.c.b16 %v756, %v752
  %v1185 = vpack.c.b16 %v757, %v753
  %v1186 = vpack.c.b16 %v758, %v754
  %v1187 = vpack.c.b16 %v763, %v759
  %v1188 = vpack.c.b16 %v764, %v760
  %v1189 = vpack.c.b16 %v765, %v761
  %v1190 = vpack.c.b16 %v766, %v762
  %v1191 = vpack.c.b16 %v771, %v767
  %v1192 = vpack.c.b16 %v772, %v768
  %v1193 = vpack.c.b16 %v773, %v769
  %v1194 = vpack.c.b16 %v774, %v770
  %v1195 = vpack.c.b16 %v779, %v775
  %v1196 = vpack.c.b16 %v780, %v776
  %v1197 = vpack.c.b16 %v781, %v777
  %v1198 = vpack.c.b16 %v782, %v778
  %v1199 = vpack.c.b16 %v787, %v783
  %v1200 = vpack.c.b16 %v788, %v784
  %v1201 = vpack.c.b16 %v789, %v785
  %v1202 = vpack.c.b16 %v790, %v786
  %v1203 = vpack.c.b16 %v795, %v791
  %v1204 = vpack.c.b16 %v796, %v792
  %v1205 = vpack.c.b16 %v797, %v793
  %v1206 = vpack.c.b16 %v798, %v794
  %v1207 = vpack.c.b16 %v803, %v799
  %v1208 = vpack.c.b16 %v804, %v800
  %v1209 = vpack.c.b16 %v805, %v801
  %v1210 = vpack.c.b16 %v806, %v802
  %v1211 = vpack.c.b16 %v811, %v807
  %v1212 = vpack.c.b16 %v812, %v808
  %v1213 = vpack.c.b16 %v813, %v809
  %v1214 = vpack.c.b16 %v814, %v810
  %v1215 = vpack.c.b16 %v819, %v815
  %v1216 = vpack.c.b16 %v820, %v816
  %v1217 = vpack.c.b16 %v821, %v817
  %v1218 = vpack.c.b16 %v822, %v818
  %v1219 = vpack.c.b16 %v827, %v823
  %v1220 = vpack.c.b16 %v828, %v824
  %v1221 = vpack.c.b16 %v829, %v825
  %v1222 = vpack.c.b16 %v830, %v826
  %v1223 = vpack.c.b16 %v835, %v831
  %v1224 = vpack.c.b16 %v836, %v832
  %v1225 = vpack.c.b16 %v837, %v833
  %v1226 = vpack.c.b16 %v838, %v834
  %v1227 = vpack.c.b16 %v843, %v839
  %v1228 = vpack.c.b16 %v844, %v840
  %v1229 = vpack.c.b16 %v845, %v841
  %v1230 = vpack.c.b16 %v846, %v842
  %v1231 = vpack.c.b16 %v851, %v847
  %v1232 = vpack.c.b16 %v852, %v848
  %v1233 = vpack.c.b16 %v853, %v849
  %v1234 = vpack.c.b16 %v854, %v850
  %v1235 = vpack.c.b16 %v859, %v855
  %v1236 = vpack.c.b16 %v860, %v856
  %v1237 = vpack.c.b16 %v861, %v857
  %v1238 = vpack.c.b16 %v862, %v858
  %v1239 = vpack.c.b16 %v867, %v863
  %v1240 = vpack.c.b16 %v868, %v864
  %v1241 = vpack.c.b16 %v869, %v865
  %v1242 = vpack.c.b16 %v870, %v866
  %v1243 = vpack.c.b16 %v875, %v871
  %v1244 = vpack.c.b16 %v876, %v872
  %v1245 = vpack.c.b16 %v877, %v873
  %v1246 = vpack.c.b16 %v878, %v874
  %v1247 = vpack.c.b16 %v883, %v879
  %v1248 = vpack.c.b16 %v884, %v880
  %v1249 = vpack.c.b16 %v885, %v881
  %v1250 = vpack.c.b16 %v886, %v882
  %v1251 = vpack.c.b16 %v891, %v887
  %v1252 = vpack.c.b16 %v892, %v888
  %v1253 = vpack.c.b16 %v893, %v889
  %v1254 = vpack.c.b16 %v894, %v890
  %v1255 = vpack.c.b16 %v899, %v895
  %v1256 = vpack.c.b16 %v900, %v896
  %v1257 = vpack.c.b16 %v901, %v897
  %v1258 = vpack.c.b16 %v902, %v898
  %v1259 = vpack.c.b16 %v907, %v903
  %v1260 = vpack.c.b16 %v908, %v904
  %v1261 = vpack.c.b16 %v909, %v905
  %v1262 = vpack.c.b16 %v910, %v906
  %v1263 = vpack.c.b16 %v915, %v911
  %v1264 = vpack.c.b16 %v916, %v912
  %v1265 = vpack.c.b16 %v917, %v913
  %v1266 = vpack.c.b16 %v918, %v914
  %v1267 = vpack.c.b16 %v923, %v919
  %v1268 = vpack.c.b16 %v924, %v920
  %v1269 = vpack.c.b16 %v925, %v921
  %v1270 = vpack.c.b16 %v926, %v922
  %v1271 = vpack.c.b16 %v931, %v927
  %v1272 = vpack.c.b16 %v932, %v928
  %v1273 = vpack.c.b16 %v933, %v929
  %v1274 = vpack.c.b16 %v934, %v930
  %v1275 = vpack.c.b16 %v939, %v935
  %v1276 = vpack.c.b16 %v940, %v936
  %v1277 = vpack.c.b16 %v941, %v937
  %v1278 = vpack.c.b16 %v942, %v938
  %v1279 = vpack.c.b16 %v947, %v943
  %v1280 = vpack.c.b16 %v948, %v944
  %v1281 = vpack.c.b16 %v949, %v945
  %v1282 = vpack.c.b16 %v950, %v946
  %v1283 = vpack.c.b16 %v955, %v951
  %v1284 = vpack.c.b16 %v956, %v952
  %v1285 = vpack.c.b16 %v957, %v953
  %v1286 = vpack.c.b16 %v958, %v954
  %v1287 = vpack.c.b16 %v963, %v959
  %v1288 = vpack.c.b16 %v964, %v960
  %v1289 = vpack.c.b16 %v965, %v961
  %v1290 = vpack.c.b16 %v966, %v962
  %v1291 = vpack.c.b16 %v971, %v967
  %v1292 = vpack.c.b16 %v972, %v968
  %v1293 = vpack.c.b16 %v973, %v969
  %v1294 = vpack.c.b16 %v974, %v970
  %v1295 = vpack.c.b16 %v979, %v975
  %v1296 = vpack.c.b16 %v980, %v976
  %v1297 = vpack.c.b16 %v981, %v977
  %v1298 = vpack.c.b16 %v982, %v978
  %v1299 = vpack.c.b16 %v987, %v983
  %v1300 = vpack.c.b16 %v988, %v984
  %v1301 = vpack.c.b16 %v989, %v985
  %v1302 = vpack.c.b16 %v990, %v986
  %v1303 = vpack.c.b16 %v995, %v991
  %v1304 = vpack.c.b16 %v996, %v992
  %v1305 = vpack.c.b16 %v997, %v993
  %v1306 = vpack.c.b16 %v998, %v994
  %v1307 = vpack.c.b16 %v1003, %v999
  %v1308 = vpack.c.b16 %v1004, %v1000
  %v1309 = vpack.c.b16 %v1005, %v1001
  %v1310 = vpack.c.b16 %v1006, %v1002
  %v1311 = vpack.c.b16 %v1011, %v1007
  %v1312 = vpack.c.b16 %v1012, %v1008
  %v1313 = vpack.c.b16 %v1013, %v1009
  %v1314 = vpack.c.b16 %v1014, %v1010
  %v1315 = vpack.c.b16 %v1019, %v1015
  %v1316 = vpack.c.b16 %v1020, %v1016
  %v1317 = vpack.c.b16 %v1021, %v1017
  %v1318 = vpack.c.b16 %v1022, %v1018
  %v1319 = vpack.c.b16 %v1027, %v1023
  %v1320 = vpack.c.b16 %v1028, %v1024
  %v1321 = vpack.c.b16 %v1029, %v1025
  %v1322 = vpack.c.b16 %v1030, %v1026
  %v1323 = vpack.c.b16 %v1035, %v1031
  %v1324 = vpack.c.b16 %v1036, %v1032
  %v1325 = vpack.c.b16 %v1037, %v1033
  %v1326 = vpack.c.b16 %v1038, %v1034
  %v1327 = vpack.c.b16 %v1043, %v1039
  %v1328 = vpack.c.b16 %v1044, %v1040
  %v1329 = vpack.c.b16 %v1045, %v1041
  %v1330 = vpack.c.b16 %v1046, %v1042
  %v1331 = vpack.c.b16 %v1051, %v1047
  %v1332 = vpack.c.b16 %v1052, %v1048
  %v1333 = vpack.c.b16 %v1053, %v1049
  %v1334 = vpack.c.b16 %v1054, %v1050
  %v1335 = vpack.c.b16 %v1059, %v1055
  %v1336 = vpack.c.b16 %v1060, %v1056
  %v1337 = vpack.c.b16 %v1061, %v1057
  %v1338 = vpack.c.b16 %v1062, %v1058
  %v1339 = vpack.c.b16 %v1067, %v1063
  %v1340 = vpack.c.b16 %v1068, %v1064
  %v1341 = vpack.c.b16 %v1069, %v1065
  %v1342 = vpack.c.b16 %v1070, %v1066
  %v1343 = vpack.c.b16 %v1075, %v1071
  %v1344 = vpack.c.b16 %v1076, %v1072
  %v1345 = vpack.c.b16 %v1077, %v1073
  %v1346 = vpack.c.b16 %v1078, %v1074
  %v1347 = vpack.c.b16 %v1083, %v1079
  %v1348 = vpack.c.b16 %v1084, %v1080
  %v1349 = vpack.c.b16 %v1085, %v1081
  %v1350 = vpack.c.b16 %v1086, %v1082
  %v1351 = vpack.c.b16 %v1091, %v1087
  %v1352 = vpack.c.b16 %v1092, %v1088
  %v1353 = vpack.c.b16 %v1093, %v1089
  %v1354 = vpack.c.b16 %v1094, %v1090
  %v1355 = vpack.c.b16 %v1099, %v1095
  %v1356 = vpack.c.b16 %v1100, %v1096
  %v1357 = vpack.c.b16 %v1101, %v1097
  %v1358 = vpack.c.b16 %v1102, %v1098
  %1615 = vmatpush.bf16.msra.mxu0 %v1131
  %1616 = vmatpush.bf16.msra.mxu0 %v1127
  %1617 = vmatpush.bf16.msra.mxu0 %v1123
  %1618 = vmatpush.bf16.msra.mxu0 %v1119
  %1619 = vmatpush.bf16.msra.mxu0 %v1115
  %1620 = vmatpush.bf16.msra.mxu0 %v1111
  %1621 = vmatpush.bf16.msra.mxu0 %v1107
  %1622 = vmatpush.bf16.msra.mxu0 %v1103
  %1623 = vmatmul.bf16.gmra.mxu0 %v61
  %v1624 = vpop.f32.mrf.mxu0
  %v1625 = vadd.f32 %v327, %v1624
  %v1626 = vpop.f32.mrf.mxu0
  %1627 = vdwg.mxu0
  %1628 = vmatpush.bf16.msra.mxu0 %v1163
  %1629 = vmatpush.bf16.msra.mxu0 %v1159
  %1630 = vmatpush.bf16.msra.mxu0 %v1155
  %1631 = vmatpush.bf16.msra.mxu0 %v1151
  %1632 = vmatpush.bf16.msra.mxu0 %v1147
  %1633 = vmatpush.bf16.msra.mxu0 %v1143
  %1634 = vmatpush.bf16.msra.mxu0 %v1139
  %1635 = vmatpush.bf16.msra.mxu0 %v1135
  %1636 = vmatmul.bf16.gmra.mxu0 %v62
  %v1637 = vpop.f32.mrf.mxu0
  %v1638 = vadd.f32 %v1625, %v1637
  %v1639 = vpop.f32.mrf.mxu0
  %1640 = vdwg.mxu0
  %1641 = vmatpush.bf16.msra.mxu0 %v1195
  %1642 = vmatpush.bf16.msra.mxu0 %v1191
  %1643 = vmatpush.bf16.msra.mxu0 %v1187
  %1644 = vmatpush.bf16.msra.mxu0 %v1183
  %1645 = vmatpush.bf16.msra.mxu0 %v1179
  %1646 = vmatpush.bf16.msra.mxu0 %v1175
  %1647 = vmatpush.bf16.msra.mxu0 %v1171
  %1648 = vmatpush.bf16.msra.mxu0 %v1167
  %1649 = vmatmul.bf16.gmra.mxu0 %v63
  %v1650 = vpop.f32.mrf.mxu0
  %v1651 = vadd.f32 %v1638, %v1650
  %v1652 = vpop.f32.mrf.mxu0
  %1653 = vdwg.mxu0
  %1654 = vmatpush.bf16.msra.mxu0 %v1227
  %1655 = vmatpush.bf16.msra.mxu0 %v1223
  %1656 = vmatpush.bf16.msra.mxu0 %v1219
  %1657 = vmatpush.bf16.msra.mxu0 %v1215
  %1658 = vmatpush.bf16.msra.mxu0 %v1211
  %1659 = vmatpush.bf16.msra.mxu0 %v1207
  %1660 = vmatpush.bf16.msra.mxu0 %v1203
  %1661 = vmatpush.bf16.msra.mxu0 %v1199
  %1662 = vmatmul.bf16.gmra.mxu0 %v64
  %v1663 = vpop.f32.mrf.mxu0
  %v1664 = vadd.f32 %v1651, %v1663
  %v1665 = vpop.f32.mrf.mxu0
  %1666 = vdwg.mxu0
  %1667 = vmatpush.bf16.msra.mxu0 %v1259
  %1668 = vmatpush.bf16.msra.mxu0 %v1255
  %1669 = vmatpush.bf16.msra.mxu0 %v1251
  %1670 = vmatpush.bf16.msra.mxu0 %v1247
  %1671 = vmatpush.bf16.msra.mxu0 %v1243
  %1672 = vmatpush.bf16.msra.mxu0 %v1239
  %1673 = vmatpush.bf16.msra.mxu0 %v1235
  %1674 = vmatpush.bf16.msra.mxu0 %v1231
  %1675 = vmatmul.bf16.gmra.mxu0 %v65
  %v1676 = vpop.f32.mrf.mxu0
  %v1677 = vadd.f32 %v1664, %v1676
  %v1678 = vpop.f32.mrf.mxu0
  %1679 = vdwg.mxu0
  %1680 = vmatpush.bf16.msra.mxu0 %v1291
  %1681 = vmatpush.bf16.msra.mxu0 %v1287
  %1682 = vmatpush.bf16.msra.mxu0 %v1283
  %1683 = vmatpush.bf16.msra.mxu0 %v1279
  %1684 = vmatpush.bf16.msra.mxu0 %v1275
  %1685 = vmatpush.bf16.msra.mxu0 %v1271
  %1686 = vmatpush.bf16.msra.mxu0 %v1267
  %1687 = vmatpush.bf16.msra.mxu0 %v1263
  %1688 = vmatmul.bf16.gmra.mxu0 %v66
  %v1689 = vpop.f32.mrf.mxu0
  %v1690 = vadd.f32 %v1677, %v1689
  %v1691 = vpop.f32.mrf.mxu0
  %1692 = vdwg.mxu0
  %1693 = vmatpush.bf16.msra.mxu0 %v1323
  %1694 = vmatpush.bf16.msra.mxu0 %v1319
  %1695 = vmatpush.bf16.msra.mxu0 %v1315
  %1696 = vmatpush.bf16.msra.mxu0 %v1311
  %1697 = vmatpush.bf16.msra.mxu0 %v1307
  %1698 = vmatpush.bf16.msra.mxu0 %v1303
  %1699 = vmatpush.bf16.msra.mxu0 %v1299
  %1700 = vmatpush.bf16.msra.mxu0 %v1295
  %1701 = vmatmul.bf16.gmra.mxu0 %v67
  %v1702 = vpop.f32.mrf.mxu0
  %v1703 = vadd.f32 %v1690, %v1702
  %v1704 = vpop.f32.mrf.mxu0
  %1705 = vdwg.mxu0
  %1706 = vmatpush.bf16.msra.mxu0 %v1355
  %1707 = vmatpush.bf16.msra.mxu0 %v1351
  %1708 = vmatpush.bf16.msra.mxu0 %v1347
  %1709 = vmatpush.bf16.msra.mxu0 %v1343
  %1710 = vmatpush.bf16.msra.mxu0 %v1339
  %1711 = vmatpush.bf16.msra.mxu0 %v1335
  %1712 = vmatpush.bf16.msra.mxu0 %v1331
  %1713 = vmatpush.bf16.msra.mxu0 %v1327
  %1714 = vmatmul.bf16.gmra.mxu0 %v68
  %v1715 = vpop.f32.mrf.mxu0
  %v1716 = vadd.f32 %v1703, %v1715
  %v1717 = vpop.f32.mrf.mxu0
  %1718 = vdwg.mxu0
  %1719 = vmatpush.bf16.msra.mxu0 %v1132
  %1720 = vmatpush.bf16.msra.mxu0 %v1128
  %1721 = vmatpush.bf16.msra.mxu0 %v1124
  %1722 = vmatpush.bf16.msra.mxu0 %v1120
  %1723 = vmatpush.bf16.msra.mxu0 %v1116
  %1724 = vmatpush.bf16.msra.mxu0 %v1112
  %1725 = vmatpush.bf16.msra.mxu0 %v1108
  %1726 = vmatpush.bf16.msra.mxu0 %v1104
  %1727 = vmatmul.bf16.gmra.mxu0 %v61
  %v1728 = vpop.f32.mrf.mxu0
  %v1729 = vadd.f32 %v328, %v1728
  %v1730 = vpop.f32.mrf.mxu0
  %1731 = vdwg.mxu0
  %1732 = vmatpush.bf16.msra.mxu0 %v1164
  %1733 = vmatpush.bf16.msra.mxu0 %v1160
  %1734 = vmatpush.bf16.msra.mxu0 %v1156
  %1735 = vmatpush.bf16.msra.mxu0 %v1152
  %1736 = vmatpush.bf16.msra.mxu0 %v1148
  %1737 = vmatpush.bf16.msra.mxu0 %v1144
  %1738 = vmatpush.bf16.msra.mxu0 %v1140
  %1739 = vmatpush.bf16.msra.mxu0 %v1136
  %1740 = vmatmul.bf16.gmra.mxu0 %v62
  %v1741 = vpop.f32.mrf.mxu0
  %v1742 = vadd.f32 %v1729, %v1741
  %v1743 = vpop.f32.mrf.mxu0
  %1744 = vdwg.mxu0
  %1745 = vmatpush.bf16.msra.mxu0 %v1196
  %1746 = vmatpush.bf16.msra.mxu0 %v1192
  %1747 = vmatpush.bf16.msra.mxu0 %v1188
  %1748 = vmatpush.bf16.msra.mxu0 %v1184
  %1749 = vmatpush.bf16.msra.mxu0 %v1180
  %1750 = vmatpush.bf16.msra.mxu0 %v1176
  %1751 = vmatpush.bf16.msra.mxu0 %v1172
  %1752 = vmatpush.bf16.msra.mxu0 %v1168
  %1753 = vmatmul.bf16.gmra.mxu0 %v63
  %v1754 = vpop.f32.mrf.mxu0
  %v1755 = vadd.f32 %v1742, %v1754
  %v1756 = vpop.f32.mrf.mxu0
  %1757 = vdwg.mxu0
  %1758 = vmatpush.bf16.msra.mxu0 %v1228
  %1759 = vmatpush.bf16.msra.mxu0 %v1224
  %1760 = vmatpush.bf16.msra.mxu0 %v1220
  %1761 = vmatpush.bf16.msra.mxu0 %v1216
  %1762 = vmatpush.bf16.msra.mxu0 %v1212
  %1763 = vmatpush.bf16.msra.mxu0 %v1208
  %1764 = vmatpush.bf16.msra.mxu0 %v1204
  %1765 = vmatpush.bf16.msra.mxu0 %v1200
  %1766 = vmatmul.bf16.gmra.mxu0 %v64
  %v1767 = vpop.f32.mrf.mxu0
  %v1768 = vadd.f32 %v1755, %v1767
  %v1769 = vpop.f32.mrf.mxu0
  %1770 = vdwg.mxu0
  %1771 = vmatpush.bf16.msra.mxu0 %v1260
  %1772 = vmatpush.bf16.msra.mxu0 %v1256
  %1773 = vmatpush.bf16.msra.mxu0 %v1252
  %1774 = vmatpush.bf16.msra.mxu0 %v1248
  %1775 = vmatpush.bf16.msra.mxu0 %v1244
  %1776 = vmatpush.bf16.msra.mxu0 %v1240
  %1777 = vmatpush.bf16.msra.mxu0 %v1236
  %1778 = vmatpush.bf16.msra.mxu0 %v1232
  %1779 = vmatmul.bf16.gmra.mxu0 %v65
  %v1780 = vpop.f32.mrf.mxu0
  %v1781 = vadd.f32 %v1768, %v1780
  %v1782 = vpop.f32.mrf.mxu0
  %1783 = vdwg.mxu0
  %1784 = vmatpush.bf16.msra.mxu0 %v1292
  %1785 = vmatpush.bf16.msra.mxu0 %v1288
  %1786 = vmatpush.bf16.msra.mxu0 %v1284
  %1787 = vmatpush.bf16.msra.mxu0 %v1280
  %1788 = vmatpush.bf16.msra.mxu0 %v1276
  %1789 = vmatpush.bf16.msra.mxu0 %v1272
  %1790 = vmatpush.bf16.msra.mxu0 %v1268
  %1791 = vmatpush.bf16.msra.mxu0 %v1264
  %1792 = vmatmul.bf16.gmra.mxu0 %v66
  %v1793 = vpop.f32.mrf.mxu0
  %v1794 = vadd.f32 %v1781, %v1793
  %v1795 = vpop.f32.mrf.mxu0
  %1796 = vdwg.mxu0
  %1797 = vmatpush.bf16.msra.mxu0 %v1324
  %1798 = vmatpush.bf16.msra.mxu0 %v1320
  %1799 = vmatpush.bf16.msra.mxu0 %v1316
  %1800 = vmatpush.bf16.msra.mxu0 %v1312
  %1801 = vmatpush.bf16.msra.mxu0 %v1308
  %1802 = vmatpush.bf16.msra.mxu0 %v1304
  %1803 = vmatpush.bf16.msra.mxu0 %v1300
  %1804 = vmatpush.bf16.msra.mxu0 %v1296
  %1805 = vmatmul.bf16.gmra.mxu0 %v67
  %v1806 = vpop.f32.mrf.mxu0
  %v1807 = vadd.f32 %v1794, %v1806
  %v1808 = vpop.f32.mrf.mxu0
  %1809 = vdwg.mxu0
  %1810 = vmatpush.bf16.msra.mxu0 %v1356
  %1811 = vmatpush.bf16.msra.mxu0 %v1352
  %1812 = vmatpush.bf16.msra.mxu0 %v1348
  %1813 = vmatpush.bf16.msra.mxu0 %v1344
  %1814 = vmatpush.bf16.msra.mxu0 %v1340
  %1815 = vmatpush.bf16.msra.mxu0 %v1336
  %1816 = vmatpush.bf16.msra.mxu0 %v1332
  %1817 = vmatpush.bf16.msra.mxu0 %v1328
  %1818 = vmatmul.bf16.gmra.mxu0 %v68
  %v1819 = vpop.f32.mrf.mxu0
  %v1820 = vadd.f32 %v1807, %v1819
  %v1821 = vpop.f32.mrf.mxu0
  %1822 = vdwg.mxu0
  %1823 = vmatpush.bf16.msra.mxu0 %v1133
  %1824 = vmatpush.bf16.msra.mxu0 %v1129
  %1825 = vmatpush.bf16.msra.mxu0 %v1125
  %1826 = vmatpush.bf16.msra.mxu0 %v1121
  %1827 = vmatpush.bf16.msra.mxu0 %v1117
  %1828 = vmatpush.bf16.msra.mxu0 %v1113
  %1829 = vmatpush.bf16.msra.mxu0 %v1109
  %1830 = vmatpush.bf16.msra.mxu0 %v1105
  %1831 = vmatmul.bf16.gmra.mxu0 %v61
  %v1832 = vpop.f32.mrf.mxu0
  %v1833 = vadd.f32 %v329, %v1832
  %v1834 = vpop.f32.mrf.mxu0
  %1835 = vdwg.mxu0
  %1836 = vmatpush.bf16.msra.mxu0 %v1165
  %1837 = vmatpush.bf16.msra.mxu0 %v1161
  %1838 = vmatpush.bf16.msra.mxu0 %v1157
  %1839 = vmatpush.bf16.msra.mxu0 %v1153
  %1840 = vmatpush.bf16.msra.mxu0 %v1149
  %1841 = vmatpush.bf16.msra.mxu0 %v1145
  %1842 = vmatpush.bf16.msra.mxu0 %v1141
  %1843 = vmatpush.bf16.msra.mxu0 %v1137
  %1844 = vmatmul.bf16.gmra.mxu0 %v62
  %v1845 = vpop.f32.mrf.mxu0
  %v1846 = vadd.f32 %v1833, %v1845
  %v1847 = vpop.f32.mrf.mxu0
  %1848 = vdwg.mxu0
  %1849 = vmatpush.bf16.msra.mxu0 %v1197
  %1850 = vmatpush.bf16.msra.mxu0 %v1193
  %1851 = vmatpush.bf16.msra.mxu0 %v1189
  %1852 = vmatpush.bf16.msra.mxu0 %v1185
  %1853 = vmatpush.bf16.msra.mxu0 %v1181
  %1854 = vmatpush.bf16.msra.mxu0 %v1177
  %1855 = vmatpush.bf16.msra.mxu0 %v1173
  %1856 = vmatpush.bf16.msra.mxu0 %v1169
  %1857 = vmatmul.bf16.gmra.mxu0 %v63
  %v1858 = vpop.f32.mrf.mxu0
  %v1859 = vadd.f32 %v1846, %v1858
  %v1860 = vpop.f32.mrf.mxu0
  %1861 = vdwg.mxu0
  %1862 = vmatpush.bf16.msra.mxu0 %v1229
  %1863 = vmatpush.bf16.msra.mxu0 %v1225
  %1864 = vmatpush.bf16.msra.mxu0 %v1221
  %1865 = vmatpush.bf16.msra.mxu0 %v1217
  %1866 = vmatpush.bf16.msra.mxu0 %v1213
  %1867 = vmatpush.bf16.msra.mxu0 %v1209
  %1868 = vmatpush.bf16.msra.mxu0 %v1205
  %1869 = vmatpush.bf16.msra.mxu0 %v1201
  %1870 = vmatmul.bf16.gmra.mxu0 %v64
  %v1871 = vpop.f32.mrf.mxu0
  %v1872 = vadd.f32 %v1859, %v1871
  %v1873 = vpop.f32.mrf.mxu0
  %1874 = vdwg.mxu0
  %1875 = vmatpush.bf16.msra.mxu0 %v1261
  %1876 = vmatpush.bf16.msra.mxu0 %v1257
  %1877 = vmatpush.bf16.msra.mxu0 %v1253
  %1878 = vmatpush.bf16.msra.mxu0 %v1249
  %1879 = vmatpush.bf16.msra.mxu0 %v1245
  %1880 = vmatpush.bf16.msra.mxu0 %v1241
  %1881 = vmatpush.bf16.msra.mxu0 %v1237
  %1882 = vmatpush.bf16.msra.mxu0 %v1233
  %1883 = vmatmul.bf16.gmra.mxu0 %v65
  %v1884 = vpop.f32.mrf.mxu0
  %v1885 = vadd.f32 %v1872, %v1884
  %v1886 = vpop.f32.mrf.mxu0
  %1887 = vdwg.mxu0
  %1888 = vmatpush.bf16.msra.mxu0 %v1293
  %1889 = vmatpush.bf16.msra.mxu0 %v1289
  %1890 = vmatpush.bf16.msra.mxu0 %v1285
  %1891 = vmatpush.bf16.msra.mxu0 %v1281
  %1892 = vmatpush.bf16.msra.mxu0 %v1277
  %1893 = vmatpush.bf16.msra.mxu0 %v1273
  %1894 = vmatpush.bf16.msra.mxu0 %v1269
  %1895 = vmatpush.bf16.msra.mxu0 %v1265
  %1896 = vmatmul.bf16.gmra.mxu0 %v66
  %v1897 = vpop.f32.mrf.mxu0
  %v1898 = vadd.f32 %v1885, %v1897
  %v1899 = vpop.f32.mrf.mxu0
  %1900 = vdwg.mxu0
  %1901 = vmatpush.bf16.msra.mxu0 %v1325
  %1902 = vmatpush.bf16.msra.mxu0 %v1321
  %1903 = vmatpush.bf16.msra.mxu0 %v1317
  %1904 = vmatpush.bf16.msra.mxu0 %v1313
  %1905 = vmatpush.bf16.msra.mxu0 %v1309
  %1906 = vmatpush.bf16.msra.mxu0 %v1305
  %1907 = vmatpush.bf16.msra.mxu0 %v1301
  %1908 = vmatpush.bf16.msra.mxu0 %v1297
  %1909 = vmatmul.bf16.gmra.mxu0 %v67
  %v1910 = vpop.f32.mrf.mxu0
  %v1911 = vadd.f32 %v1898, %v1910
  %v1912 = vpop.f32.mrf.mxu0
  %1913 = vdwg.mxu0
  %1914 = vmatpush.bf16.msra.mxu0 %v1357
  %1915 = vmatpush.bf16.msra.mxu0 %v1353
  %1916 = vmatpush.bf16.msra.mxu0 %v1349
  %1917 = vmatpush.bf16.msra.mxu0 %v1345
  %1918 = vmatpush.bf16.msra.mxu0 %v1341
  %1919 = vmatpush.bf16.msra.mxu0 %v1337
  %1920 = vmatpush.bf16.msra.mxu0 %v1333
  %1921 = vmatpush.bf16.msra.mxu0 %v1329
  %1922 = vmatmul.bf16.gmra.mxu0 %v68
  %v1923 = vpop.f32.mrf.mxu0
  %v1924 = vadd.f32 %v1911, %v1923
  %v1925 = vpop.f32.mrf.mxu0
  %1926 = vdwg.mxu0
  %1927 = vmatpush.bf16.msra.mxu0 %v1134
  %1928 = vmatpush.bf16.msra.mxu0 %v1130
  %1929 = vmatpush.bf16.msra.mxu0 %v1126
  %1930 = vmatpush.bf16.msra.mxu0 %v1122
  %1931 = vmatpush.bf16.msra.mxu0 %v1118
  %1932 = vmatpush.bf16.msra.mxu0 %v1114
  %1933 = vmatpush.bf16.msra.mxu0 %v1110
  %1934 = vmatpush.bf16.msra.mxu0 %v1106
  %1935 = vmatmul.bf16.gmra.mxu0 %v61
  %v1936 = vpop.f32.mrf.mxu0
  %v1937 = vadd.f32 %v330, %v1936
  %v1938 = vpop.f32.mrf.mxu0
  %1939 = vdwg.mxu0
  %1940 = vmatpush.bf16.msra.mxu0 %v1166
  %1941 = vmatpush.bf16.msra.mxu0 %v1162
  %1942 = vmatpush.bf16.msra.mxu0 %v1158
  %1943 = vmatpush.bf16.msra.mxu0 %v1154
  %1944 = vmatpush.bf16.msra.mxu0 %v1150
  %1945 = vmatpush.bf16.msra.mxu0 %v1146
  %1946 = vmatpush.bf16.msra.mxu0 %v1142
  %1947 = vmatpush.bf16.msra.mxu0 %v1138
  %1948 = vmatmul.bf16.gmra.mxu0 %v62
  %v1949 = vpop.f32.mrf.mxu0
  %v1950 = vadd.f32 %v1937, %v1949
  %v1951 = vpop.f32.mrf.mxu0
  %1952 = vdwg.mxu0
  %1953 = vmatpush.bf16.msra.mxu0 %v1198
  %1954 = vmatpush.bf16.msra.mxu0 %v1194
  %1955 = vmatpush.bf16.msra.mxu0 %v1190
  %1956 = vmatpush.bf16.msra.mxu0 %v1186
  %1957 = vmatpush.bf16.msra.mxu0 %v1182
  %1958 = vmatpush.bf16.msra.mxu0 %v1178
  %1959 = vmatpush.bf16.msra.mxu0 %v1174
  %1960 = vmatpush.bf16.msra.mxu0 %v1170
  %1961 = vmatmul.bf16.gmra.mxu0 %v63
  %v1962 = vpop.f32.mrf.mxu0
  %v1963 = vadd.f32 %v1950, %v1962
  %v1964 = vpop.f32.mrf.mxu0
  %1965 = vdwg.mxu0
  %1966 = vmatpush.bf16.msra.mxu0 %v1230
  %1967 = vmatpush.bf16.msra.mxu0 %v1226
  %1968 = vmatpush.bf16.msra.mxu0 %v1222
  %1969 = vmatpush.bf16.msra.mxu0 %v1218
  %1970 = vmatpush.bf16.msra.mxu0 %v1214
  %1971 = vmatpush.bf16.msra.mxu0 %v1210
  %1972 = vmatpush.bf16.msra.mxu0 %v1206
  %1973 = vmatpush.bf16.msra.mxu0 %v1202
  %1974 = vmatmul.bf16.gmra.mxu0 %v64
  %v1975 = vpop.f32.mrf.mxu0
  %v1976 = vadd.f32 %v1963, %v1975
  %v1977 = vpop.f32.mrf.mxu0
  %1978 = vdwg.mxu0
  %1979 = vmatpush.bf16.msra.mxu0 %v1262
  %1980 = vmatpush.bf16.msra.mxu0 %v1258
  %1981 = vmatpush.bf16.msra.mxu0 %v1254
  %1982 = vmatpush.bf16.msra.mxu0 %v1250
  %1983 = vmatpush.bf16.msra.mxu0 %v1246
  %1984 = vmatpush.bf16.msra.mxu0 %v1242
  %1985 = vmatpush.bf16.msra.mxu0 %v1238
  %1986 = vmatpush.bf16.msra.mxu0 %v1234
  %1987 = vmatmul.bf16.gmra.mxu0 %v65
  %v1988 = vpop.f32.mrf.mxu0
  %v1989 = vadd.f32 %v1976, %v1988
  %v1990 = vpop.f32.mrf.mxu0
  %1991 = vdwg.mxu0
  %1992 = vmatpush.bf16.msra.mxu0 %v1294
  %1993 = vmatpush.bf16.msra.mxu0 %v1290
  %1994 = vmatpush.bf16.msra.mxu0 %v1286
  %1995 = vmatpush.bf16.msra.mxu0 %v1282
  %1996 = vmatpush.bf16.msra.mxu0 %v1278
  %1997 = vmatpush.bf16.msra.mxu0 %v1274
  %1998 = vmatpush.bf16.msra.mxu0 %v1270
  %1999 = vmatpush.bf16.msra.mxu0 %v1266
  %2000 = vmatmul.bf16.gmra.mxu0 %v66
  %v2001 = vpop.f32.mrf.mxu0
  %v2002 = vadd.f32 %v1989, %v2001
  %v2003 = vpop.f32.mrf.mxu0
  %2004 = vdwg.mxu0
  %2005 = vmatpush.bf16.msra.mxu0 %v1326
  %2006 = vmatpush.bf16.msra.mxu0 %v1322
  %2007 = vmatpush.bf16.msra.mxu0 %v1318
  %2008 = vmatpush.bf16.msra.mxu0 %v1314
  %2009 = vmatpush.bf16.msra.mxu0 %v1310
  %2010 = vmatpush.bf16.msra.mxu0 %v1306
  %2011 = vmatpush.bf16.msra.mxu0 %v1302
  %2012 = vmatpush.bf16.msra.mxu0 %v1298
  %2013 = vmatmul.bf16.gmra.mxu0 %v67
  %v2014 = vpop.f32.mrf.mxu0
  %v2015 = vadd.f32 %v2002, %v2014
  %v2016 = vpop.f32.mrf.mxu0
  %2017 = vdwg.mxu0
  %2018 = vmatpush.bf16.msra.mxu0 %v1358
  %2019 = vmatpush.bf16.msra.mxu0 %v1354
  %2020 = vmatpush.bf16.msra.mxu0 %v1350
  %2021 = vmatpush.bf16.msra.mxu0 %v1346
  %2022 = vmatpush.bf16.msra.mxu0 %v1342
  %2023 = vmatpush.bf16.msra.mxu0 %v1338
  %2024 = vmatpush.bf16.msra.mxu0 %v1334
  %2025 = vmatpush.bf16.msra.mxu0 %v1330
  %2026 = vmatmul.bf16.gmra.mxu0 %v68
  %v2027 = vpop.f32.mrf.mxu0
  %v2028 = vadd.f32 %v2015, %v2027
  %v2029 = vpop.f32.mrf.mxu0
  %2030 = vdwg.mxu0
  %v2031 = vmax.f32 %v1716, 0.0
  %v2032 = vmax.f32 %v1820, 0.0
  %v2033 = vmax.f32 %v1924, 0.0
  %v2034 = vmax.f32 %v2028, 0.0
  %v2035 = vld [vmem:[%s4] sm:$0xff]
  %v2036 = vld [vmem:[%s4 + $0x8] sm:$0xff]
  %v2037 = vld [vmem:[%s4 + $0x10] sm:$0xff]
  %v2038 = vld [vmem:[%s4 + $0x18] sm:$0xff]
  %v2039 = vld [vmem:[%s4 + $0x20] sm:$0xff]
  %v2040 = vld [vmem:[%s4 + $0x28] sm:$0xff]
  %v2041 = vld [vmem:[%s4 + $0x30] sm:$0xff]
  %v2042 = vld [vmem:[%s4 + $0x38] sm:$0xff]
  %v2043 = vld [vmem:[%s4 + $0x40] sm:$0xff]
  %v2044 = vld [vmem:[%s4 + $0x48] sm:$0xff]
  %v2045 = vld [vmem:[%s4 + $0x50] sm:$0xff]
  %v2046 = vld [vmem:[%s4 + $0x58] sm:$0xff]
  %v2047 = vld [vmem:[%s4 + $0x60] sm:$0xff]
  %v2048 = vld [vmem:[%s4 + $0x68] sm:$0xff]
  %v2049 = vld [vmem:[%s4 + $0x70] sm:$0xff]
  %v2050 = vld [vmem:[%s4 + $0x78] sm:$0xff]
  %v2051 = vld [vmem:[%s4 + $0x80] sm:$0xff]
  %v2052 = vld [vmem:[%s4 + $0x88] sm:$0xff]
  %v2053 = vld [vmem:[%s4 + $0x90] sm:$0xff]
  %v2054 = vld [vmem:[%s4 + $0x98] sm:$0xff]
  %v2055 = vld [vmem:[%s4 + $0xa0] sm:$0xff]
  %v2056 = vld [vmem:[%s4 + $0xa8] sm:$0xff]
  %v2057 = vld [vmem:[%s4 + $0xb0] sm:$0xff]
  %v2058 = vld [vmem:[%s4 + $0xb8] sm:$0xff]
  %v2059 = vld [vmem:[%s4 + $0xc0] sm:$0xff]
  %v2060 = vld [vmem:[%s4 + $0xc8] sm:$0xff]
  %v2061 = vld [vmem:[%s4 + $0xd0] sm:$0xff]
  %v2062 = vld [vmem:[%s4 + $0xd8] sm:$0xff]
  %v2063 = vld [vmem:[%s4 + $0xe0] sm:$0xff]
  %v2064 = vld [vmem:[%s4 + $0xe8] sm:$0xff]
  %v2065 = vld [vmem:[%s4 + $0xf0] sm:$0xff]
  %v2066 = vld [vmem:[%s4 + $0xf8] sm:$0xff]
  %v2067 = vld [vmem:[%s4 + $0x100] sm:$0xff]
  %v2068 = vld [vmem:[%s4 + $0x108] sm:$0xff]
  %v2069 = vld [vmem:[%s4 + $0x110] sm:$0xff]
  %v2070 = vld [vmem:[%s4 + $0x118] sm:$0xff]
  %v2071 = vld [vmem:[%s4 + $0x120] sm:$0xff]
  %v2072 = vld [vmem:[%s4 + $0x128] sm:$0xff]
  %v2073 = vld [vmem:[%s4 + $0x130] sm:$0xff]
  %v2074 = vld [vmem:[%s4 + $0x138] sm:$0xff]
  %v2075 = vld [vmem:[%s4 + $0x140] sm:$0xff]
  %v2076 = vld [vmem:[%s4 + $0x148] sm:$0xff]
  %v2077 = vld [vmem:[%s4 + $0x150] sm:$0xff]
  %v2078 = vld [vmem:[%s4 + $0x158] sm:$0xff]
  %v2079 = vld [vmem:[%s4 + $0x160] sm:$0xff]
  %v2080 = vld [vmem:[%s4 + $0x168] sm:$0xff]
  %v2081 = vld [vmem:[%s4 + $0x170] sm:$0xff]
  %v2082 = vld [vmem:[%s4 + $0x178] sm:$0xff]
  %v2083 = vld [vmem:[%s4 + $0x180] sm:$0xff]
  %v2084 = vld [vmem:[%s4 + $0x188] sm:$0xff]
  %v2085 = vld [vmem:[%s5] sm:$0x1]
  %v2087 = vperm.slane %v2085, 0
  %vm2089 = vcmask 130048
  %v2091 = vsel %vm2089, %v2034, 0
  %2093 = vmatpush.msra.mxu0 %v2050
  %2094 = vmatpush.msra.mxu0 %v2049
  %2095 = vmatpush.msra.mxu0 %v2048
  %2096 = vmatpush.msra.mxu0 %v2047
  %2097 = vmatpush.msra.mxu0 %v2046
  %2098 = vmatpush.msra.mxu0 %v2045
  %2099 = vmatpush.msra.mxu0 %v2044
  %2100 = vmatpush.msra.mxu0 %v2043
  %2101 = vmatpush.msra.mxu0 %v2042
  %2102 = vmatpush.msra.mxu0 %v2041
  %2103 = vmatpush.msra.mxu0 %v2040
  %2104 = vmatpush.msra.mxu0 %v2039
  %2105 = vmatpush.msra.mxu0 %v2038
  %2106 = vmatpush.msra.mxu0 %v2037
  %2107 = vmatpush.msra.mxu0 %v2036
  %2108 = vmatpush.msra.mxu0 %v2035
  %2109 = vmatmul.f32.gmra.mxu0 %v2031
  %v2110 = vpop.f32.mrf.mxu0
  %v2111 = vadd.f32 %v2087, %v2110
  %2112 = vdwg.mxu0
  %2113 = vmatpush.msra.mxu0 %v2066
  %2114 = vmatpush.msra.mxu0 %v2065
  %2115 = vmatpush.msra.mxu0 %v2064
  %2116 = vmatpush.msra.mxu0 %v2063
  %2117 = vmatpush.msra.mxu0 %v2062
  %2118 = vmatpush.msra.mxu0 %v2061
  %2119 = vmatpush.msra.mxu0 %v2060
  %2120 = vmatpush.msra.mxu0 %v2059
  %2121 = vmatpush.msra.mxu0 %v2058
  %2122 = vmatpush.msra.mxu0 %v2057
  %2123 = vmatpush.msra.mxu0 %v2056
  %2124 = vmatpush.msra.mxu0 %v2055
  %2125 = vmatpush.msra.mxu0 %v2054
  %2126 = vmatpush.msra.mxu0 %v2053
  %2127 = vmatpush.msra.mxu0 %v2052
  %2128 = vmatpush.msra.mxu0 %v2051
  %2129 = vmatmul.f32.gmra.mxu0 %v2032
  %v2130 = vpop.f32.mrf.mxu0
  %v2131 = vadd.f32 %v2111, %v2130
  %2132 = vdwg.mxu0
  %2133 = vmatpush.msra.mxu0 %v2082
  %2134 = vmatpush.msra.mxu0 %v2081
  %2135 = vmatpush.msra.mxu0 %v2080
  %2136 = vmatpush.msra.mxu0 %v2079
  %2137 = vmatpush.msra.mxu0 %v2078
  %2138 = vmatpush.msra.mxu0 %v2077
  %2139 = vmatpush.msra.mxu0 %v2076
  %2140 = vmatpush.msra.mxu0 %v2075
  %2141 = vmatpush.msra.mxu0 %v2074
  %2142 = vmatpush.msra.mxu0 %v2073
  %2143 = vmatpush.msra.mxu0 %v2072
  %2144 = vmatpush.msra.mxu0 %v2071
  %2145 = vmatpush.msra.mxu0 %v2070
  %2146 = vmatpush.msra.mxu0 %v2069
  %2147 = vmatpush.msra.mxu0 %v2068
  %2148 = vmatpush.msra.mxu0 %v2067
  %2149 = vmatmul.f32.gmra.mxu0 %v2033
  %v2150 = vpop.f32.mrf.mxu0
  %v2151 = vadd.f32 %v2131, %v2150
  %2152 = vdwg.mxu0
  %2153 = vmatpush.msra.mxu0 0.0
  %2154 = vmatpush.msra.mxu0 0.0
  %2155 = vmatpush.msra.mxu0 0.0
  %2156 = vmatpush.msra.mxu0 0.0
  %2157 = vmatpush.msra.mxu0 0.0
  %2158 = vmatpush.msra.mxu0 0.0
  %2159 = vmatpush.msra.mxu0 0.0
  %2160 = vmatpush.msra.mxu0 0.0
  %2161 = vmatpush.msra.mxu0 0.0
  %2162 = vmatpush.msra.mxu0 0.0
  %2163 = vmatpush.msra.mxu0 0.0
  %2164 = vmatpush.msra.mxu0 0.0
  %2165 = vmatpush.msra.mxu0 0.0
  %2166 = vmatpush.msra.mxu0 0.0
  %2167 = vmatpush.msra.mxu0 %v2084
  %2168 = vmatpush.msra.mxu0 %v2083
  %2169 = vmatmul.f32.gmra.mxu0 %v2091
  %v2170 = vpop.f32.mrf.mxu0
  %v2171 = vadd.f32 %v2151, %v2170
  %2172 = vdwg.mxu0
  %v2173 = vmul.f32 %v2171, 0.5
  %v2174 = vmul.f32 %v2173, 1.442695
  %v2175 = vpow.pop %v2174
  %v2176 = vld [vmem:[%s1] sm:$0x3]
  %2178 = vrot.lane.b32.xlu0 %v2176, 8
  %v2179 = vpop.permute.xlu0 %2178
  %v2181 = vmul.f32 %v2175, %v2179
  %2183 = vrot.lane.b32.xlu0 %v2181, 120
  %v2184 = vpop.permute.xlu0 %2183
  %v2186 = vadd.f32 %v2171, %v2184
  %v2187 = vpack.c.bf16 %v2186, %v2186
  %v2188 = vld [vmem:[%s6] sm:$0xff]
  %v2189 = vld [vmem:[%s6 + $0x8] sm:$0xff]
  %v2190 = vld [vmem:[%s7] sm:$0xf]
  %v2192 = vperm.slane %v2190, 0
  %v2193 = vperm.slane %v2190, 1
  %v2194 = vperm.slane %v2190, 2
  %v2195 = vperm.slane %v2190, 3
  %v2202 = vunpack.c.l.b16 %v2188
  %v2203 = vunpack.c.h.b16 %v2188
  %v2204 = vunpack.c.l.b16 %v2189
  %v2205 = vunpack.c.h.b16 %v2189
  %v2206 = vpack.c.b16 %v2202, %v2202
  %v2207 = vpack.c.b16 %v2203, %v2203
  %v2208 = vpack.c.b16 %v2204, %v2204
  %v2209 = vpack.c.b16 %v2205, %v2205
  %vm2210 = vcmask 64512
  %v2212 = vsel %vm2210, %v2187, 0
  %vm2214 = vcmask 1043456
  %v2216 = vsel %vm2214, %v2206, 0
  %v2219 = vsel %vm2214, %v2207, 0
  %v2222 = vsel %vm2214, %v2208, 0
  %v2225 = vsel %vm2214, %v2209, 0
  %2227 = vmatpush.bf16.msra.mxu0 0
  %2228 = vmatpush.bf16.msra.mxu0 0
  %2229 = vmatpush.bf16.msra.mxu0 0
  %2230 = vmatpush.bf16.msra.mxu0 0
  %2231 = vmatpush.bf16.msra.mxu0 0
  %2232 = vmatpush.bf16.msra.mxu0 0
  %2233 = vmatpush.bf16.msra.mxu0 0
  %2234 = vmatpush.bf16.msra.mxu0 %v2216
  %2235 = vmatmul.bf16.gmra.mxu0 %v2212
  %v2236 = vpop.f32.mrf.mxu0
  %v2237 = vadd.f32 %v2192, %v2236
  %v2238 = vpop.f32.mrf.mxu0
  %2239 = vdwg.mxu0
  %2240 = vmatpush.bf16.msra.mxu0 0
  %2241 = vmatpush.bf16.msra.mxu0 0
  %2242 = vmatpush.bf16.msra.mxu0 0
  %2243 = vmatpush.bf16.msra.mxu0 0
  %2244 = vmatpush.bf16.msra.mxu0 0
  %2245 = vmatpush.bf16.msra.mxu0 0
  %2246 = vmatpush.bf16.msra.mxu0 0
  %2247 = vmatpush.bf16.msra.mxu0 %v2219
  %2248 = vmatmul.bf16.gmra.mxu0 %v2212
  %v2249 = vpop.f32.mrf.mxu0
  %v2250 = vadd.f32 %v2193, %v2249
  %v2251 = vpop.f32.mrf.mxu0
  %2252 = vdwg.mxu0
  %2253 = vmatpush.bf16.msra.mxu0 0
  %2254 = vmatpush.bf16.msra.mxu0 0
  %2255 = vmatpush.bf16.msra.mxu0 0
  %2256 = vmatpush.bf16.msra.mxu0 0
  %2257 = vmatpush.bf16.msra.mxu0 0
  %2258 = vmatpush.bf16.msra.mxu0 0
  %2259 = vmatpush.bf16.msra.mxu0 0
  %2260 = vmatpush.bf16.msra.mxu0 %v2222
  %2261 = vmatmul.bf16.gmra.mxu0 %v2212
  %v2262 = vpop.f32.mrf.mxu0
  %v2263 = vadd.f32 %v2194, %v2262
  %v2264 = vpop.f32.mrf.mxu0
  %2265 = vdwg.mxu0
  %2266 = vmatpush.bf16.msra.mxu0 0
  %2267 = vmatpush.bf16.msra.mxu0 0
  %2268 = vmatpush.bf16.msra.mxu0 0
  %2269 = vmatpush.bf16.msra.mxu0 0
  %2270 = vmatpush.bf16.msra.mxu0 0
  %2271 = vmatpush.bf16.msra.mxu0 0
  %2272 = vmatpush.bf16.msra.mxu0 0
  %2273 = vmatpush.bf16.msra.mxu0 %v2225
  %2274 = vmatmul.bf16.gmra.mxu0 %v2212
  %v2275 = vpop.f32.mrf.mxu0
  %v2276 = vadd.f32 %v2195, %v2275
  %v2277 = vpop.f32.mrf.mxu0
  %2278 = vdwg.mxu0
  %v2279 = vmax.f32 %v2237, 0.0
  %v2280 = vmax.f32 %v2250, 0.0
  %v2281 = vmax.f32 %v2263, 0.0
  %v2282 = vmax.f32 %v2276, 0.0
  %v2283 = vpack.c.bf16 %v2279, %v2279
  %v2284 = vpack.c.bf16 %v2280, %v2280
  %v2285 = vpack.c.bf16 %v2281, %v2281
  %v2286 = vpack.c.bf16 %v2282, %v2282
  %v2287 = vld [vmem:[%s8] sm:$0xff]
  %v2288 = vld [vmem:[%s8 + $0x8] sm:$0xff]
  %v2289 = vld [vmem:[%s8 + $0x10] sm:$0xff]
  %v2290 = vld [vmem:[%s8 + $0x18] sm:$0xff]
  %v2291 = vld [vmem:[%s8 + $0x20] sm:$0xff]
  %v2292 = vld [vmem:[%s8 + $0x28] sm:$0xff]
  %v2293 = vld [vmem:[%s8 + $0x30] sm:$0xff]
  %v2294 = vld [vmem:[%s8 + $0x38] sm:$0xff]
  %v2295 = vld [vmem:[%s8 + $0x40] sm:$0xff]
  %v2296 = vld [vmem:[%s8 + $0x48] sm:$0xff]
  %v2297 = vld [vmem:[%s8 + $0x50] sm:$0xff]
  %v2298 = vld [vmem:[%s8 + $0x58] sm:$0xff]
  %v2299 = vld [vmem:[%s8 + $0x60] sm:$0xff]
  %v2300 = vld [vmem:[%s8 + $0x68] sm:$0xff]
  %v2301 = vld [vmem:[%s8 + $0x70] sm:$0xff]
  %v2302 = vld [vmem:[%s8 + $0x78] sm:$0xff]
  %v2303 = vld [vmem:[%s8 + $0x80] sm:$0xff]
  %v2304 = vld [vmem:[%s8 + $0x88] sm:$0xff]
  %v2305 = vld [vmem:[%s8 + $0x90] sm:$0xff]
  %v2306 = vld [vmem:[%s8 + $0x98] sm:$0xff]
  %v2307 = vld [vmem:[%s8 + $0xa0] sm:$0xff]
  %v2308 = vld [vmem:[%s8 + $0xa8] sm:$0xff]
  %v2309 = vld [vmem:[%s8 + $0xb0] sm:$0xff]
  %v2310 = vld [vmem:[%s8 + $0xb8] sm:$0xff]
  %v2311 = vld [vmem:[%s8 + $0xc0] sm:$0xff]
  %v2312 = vld [vmem:[%s8 + $0xc8] sm:$0xff]
  %v2313 = vld [vmem:[%s8 + $0xd0] sm:$0xff]
  %v2314 = vld [vmem:[%s8 + $0xd8] sm:$0xff]
  %v2315 = vld [vmem:[%s8 + $0xe0] sm:$0xff]
  %v2316 = vld [vmem:[%s8 + $0xe8] sm:$0xff]
  %v2317 = vld [vmem:[%s8 + $0xf0] sm:$0xff]
  %v2318 = vld [vmem:[%s8 + $0xf8] sm:$0xff]
  %v2319 = vld [vmem:[%s8 + $0x100] sm:$0xff]
  %v2320 = vld [vmem:[%s8 + $0x108] sm:$0xff]
  %v2321 = vld [vmem:[%s8 + $0x110] sm:$0xff]
  %v2322 = vld [vmem:[%s8 + $0x118] sm:$0xff]
  %v2323 = vld [vmem:[%s8 + $0x120] sm:$0xff]
  %v2324 = vld [vmem:[%s8 + $0x128] sm:$0xff]
  %v2325 = vld [vmem:[%s8 + $0x130] sm:$0xff]
  %v2326 = vld [vmem:[%s8 + $0x138] sm:$0xff]
  %v2327 = vld [vmem:[%s8 + $0x140] sm:$0xff]
  %v2328 = vld [vmem:[%s8 + $0x148] sm:$0xff]
  %v2329 = vld [vmem:[%s8 + $0x150] sm:$0xff]
  %v2330 = vld [vmem:[%s8 + $0x158] sm:$0xff]
  %v2331 = vld [vmem:[%s8 + $0x160] sm:$0xff]
  %v2332 = vld [vmem:[%s8 + $0x168] sm:$0xff]
  %v2333 = vld [vmem:[%s8 + $0x170] sm:$0xff]
  %v2334 = vld [vmem:[%s8 + $0x178] sm:$0xff]
  %v2335 = vld [vmem:[%s8 + $0x180] sm:$0xff]
  %v2336 = vld [vmem:[%s8 + $0x188] sm:$0xff]
  %v2337 = vld [vmem:[%s8 + $0x190] sm:$0xff]
  %v2338 = vld [vmem:[%s8 + $0x198] sm:$0xff]
  %v2339 = vld [vmem:[%s8 + $0x1a0] sm:$0xff]
  %v2340 = vld [vmem:[%s8 + $0x1a8] sm:$0xff]
  %v2341 = vld [vmem:[%s8 + $0x1b0] sm:$0xff]
  %v2342 = vld [vmem:[%s8 + $0x1b8] sm:$0xff]
  %v2343 = vld [vmem:[%s8 + $0x1c0] sm:$0xff]
  %v2344 = vld [vmem:[%s8 + $0x1c8] sm:$0xff]
  %v2345 = vld [vmem:[%s8 + $0x1d0] sm:$0xff]
  %v2346 = vld [vmem:[%s8 + $0x1d8] sm:$0xff]
  %v2347 = vld [vmem:[%s8 + $0x1e0] sm:$0xff]
  %v2348 = vld [vmem:[%s8 + $0x1e8] sm:$0xff]
  %v2349 = vld [vmem:[%s8 + $0x1f0] sm:$0xff]
  %v2350 = vld [vmem:[%s8 + $0x1f8] sm:$0xff]
  %v2351 = vld [vmem:[%s8 + $0x200] sm:$0xff]
  %v2352 = vld [vmem:[%s8 + $0x208] sm:$0xff]
  %v2353 = vld [vmem:[%s8 + $0x210] sm:$0xff]
  %v2354 = vld [vmem:[%s8 + $0x218] sm:$0xff]
  %v2355 = vld [vmem:[%s8 + $0x220] sm:$0xff]
  %v2356 = vld [vmem:[%s8 + $0x228] sm:$0xff]
  %v2357 = vld [vmem:[%s8 + $0x230] sm:$0xff]
  %v2358 = vld [vmem:[%s8 + $0x238] sm:$0xff]
  %v2359 = vld [vmem:[%s8 + $0x240] sm:$0xff]
  %v2360 = vld [vmem:[%s8 + $0x248] sm:$0xff]
  %v2361 = vld [vmem:[%s8 + $0x250] sm:$0xff]
  %v2362 = vld [vmem:[%s8 + $0x258] sm:$0xff]
  %v2363 = vld [vmem:[%s8 + $0x260] sm:$0xff]
  %v2364 = vld [vmem:[%s8 + $0x268] sm:$0xff]
  %v2365 = vld [vmem:[%s8 + $0x270] sm:$0xff]
  %v2366 = vld [vmem:[%s8 + $0x278] sm:$0xff]
  %v2367 = vld [vmem:[%s8 + $0x280] sm:$0xff]
  %v2368 = vld [vmem:[%s8 + $0x288] sm:$0xff]
  %v2369 = vld [vmem:[%s8 + $0x290] sm:$0xff]
  %v2370 = vld [vmem:[%s8 + $0x298] sm:$0xff]
  %v2371 = vld [vmem:[%s8 + $0x2a0] sm:$0xff]
  %v2372 = vld [vmem:[%s8 + $0x2a8] sm:$0xff]
  %v2373 = vld [vmem:[%s8 + $0x2b0] sm:$0xff]
  %v2374 = vld [vmem:[%s8 + $0x2b8] sm:$0xff]
  %v2375 = vld [vmem:[%s8 + $0x2c0] sm:$0xff]
  %v2376 = vld [vmem:[%s8 + $0x2c8] sm:$0xff]
  %v2377 = vld [vmem:[%s8 + $0x2d0] sm:$0xff]
  %v2378 = vld [vmem:[%s8 + $0x2d8] sm:$0xff]
  %v2379 = vld [vmem:[%s8 + $0x2e0] sm:$0xff]
  %v2380 = vld [vmem:[%s8 + $0x2e8] sm:$0xff]
  %v2381 = vld [vmem:[%s8 + $0x2f0] sm:$0xff]
  %v2382 = vld [vmem:[%s8 + $0x2f8] sm:$0xff]
  %v2383 = vld [vmem:[%s8 + $0x300] sm:$0xff]
  %v2384 = vld [vmem:[%s8 + $0x308] sm:$0xff]
  %v2385 = vld [vmem:[%s8 + $0x310] sm:$0xff]
  %v2386 = vld [vmem:[%s8 + $0x318] sm:$0xff]
  %v2387 = vld [vmem:[%s8 + $0x320] sm:$0xff]
  %v2388 = vld [vmem:[%s8 + $0x328] sm:$0xff]
  %v2389 = vld [vmem:[%s8 + $0x330] sm:$0xff]
  %v2390 = vld [vmem:[%s8 + $0x338] sm:$0xff]
  %v2391 = vld [vmem:[%s8 + $0x340] sm:$0xff]
  %v2392 = vld [vmem:[%s8 + $0x348] sm:$0xff]
  %v2393 = vld [vmem:[%s8 + $0x350] sm:$0xff]
  %v2394 = vld [vmem:[%s8 + $0x358] sm:$0xff]
  %v2395 = vld [vmem:[%s8 + $0x360] sm:$0xff]
  %v2396 = vld [vmem:[%s8 + $0x368] sm:$0xff]
  %v2397 = vld [vmem:[%s8 + $0x370] sm:$0xff]
  %v2398 = vld [vmem:[%s8 + $0x378] sm:$0xff]
  %v2399 = vld [vmem:[%s8 + $0x380] sm:$0xff]
  %v2400 = vld [vmem:[%s8 + $0x388] sm:$0xff]
  %v2401 = vld [vmem:[%s8 + $0x390] sm:$0xff]
  %v2402 = vld [vmem:[%s8 + $0x398] sm:$0xff]
  %v2403 = vld [vmem:[%s8 + $0x3a0] sm:$0xff]
  %v2404 = vld [vmem:[%s8 + $0x3a8] sm:$0xff]
  %v2405 = vld [vmem:[%s8 + $0x3b0] sm:$0xff]
  %v2406 = vld [vmem:[%s8 + $0x3b8] sm:$0xff]
  %v2407 = vld [vmem:[%s8 + $0x3c0] sm:$0xff]
  %v2408 = vld [vmem:[%s8 + $0x3c8] sm:$0xff]
  %v2409 = vld [vmem:[%s8 + $0x3d0] sm:$0xff]
  %v2410 = vld [vmem:[%s8 + $0x3d8] sm:$0xff]
  %v2411 = vld [vmem:[%s8 + $0x3e0] sm:$0xff]
  %v2412 = vld [vmem:[%s8 + $0x3e8] sm:$0xff]
  %v2413 = vld [vmem:[%s8 + $0x3f0] sm:$0xff]
  %v2414 = vld [vmem:[%s8 + $0x3f8] sm:$0xff]
  %v2415 = vld [vmem:[%s8 + $0x400] sm:$0xff]
  %v2416 = vld [vmem:[%s8 + $0x408] sm:$0xff]
  %v2417 = vld [vmem:[%s8 + $0x410] sm:$0xff]
  %v2418 = vld [vmem:[%s8 + $0x418] sm:$0xff]
  %v2419 = vld [vmem:[%s8 + $0x420] sm:$0xff]
  %v2420 = vld [vmem:[%s8 + $0x428] sm:$0xff]
  %v2421 = vld [vmem:[%s8 + $0x430] sm:$0xff]
  %v2422 = vld [vmem:[%s8 + $0x438] sm:$0xff]
  %v2423 = vld [vmem:[%s8 + $0x440] sm:$0xff]
  %v2424 = vld [vmem:[%s8 + $0x448] sm:$0xff]
  %v2425 = vld [vmem:[%s8 + $0x450] sm:$0xff]
  %v2426 = vld [vmem:[%s8 + $0x458] sm:$0xff]
  %v2427 = vld [vmem:[%s8 + $0x460] sm:$0xff]
  %v2428 = vld [vmem:[%s8 + $0x468] sm:$0xff]
  %v2429 = vld [vmem:[%s8 + $0x470] sm:$0xff]
  %v2430 = vld [vmem:[%s8 + $0x478] sm:$0xff]
  %v2431 = vld [vmem:[%s8 + $0x480] sm:$0xff]
  %v2432 = vld [vmem:[%s8 + $0x488] sm:$0xff]
  %v2433 = vld [vmem:[%s8 + $0x490] sm:$0xff]
  %v2434 = vld [vmem:[%s8 + $0x498] sm:$0xff]
  %v2435 = vld [vmem:[%s8 + $0x4a0] sm:$0xff]
  %v2436 = vld [vmem:[%s8 + $0x4a8] sm:$0xff]
  %v2437 = vld [vmem:[%s8 + $0x4b0] sm:$0xff]
  %v2438 = vld [vmem:[%s8 + $0x4b8] sm:$0xff]
  %v2439 = vld [vmem:[%s8 + $0x4c0] sm:$0xff]
  %v2440 = vld [vmem:[%s8 + $0x4c8] sm:$0xff]
  %v2441 = vld [vmem:[%s8 + $0x4d0] sm:$0xff]
  %v2442 = vld [vmem:[%s8 + $0x4d8] sm:$0xff]
  %v2443 = vld [vmem:[%s8 + $0x4e0] sm:$0xff]
  %v2444 = vld [vmem:[%s8 + $0x4e8] sm:$0xff]
  %v2445 = vld [vmem:[%s8 + $0x4f0] sm:$0xff]
  %v2446 = vld [vmem:[%s8 + $0x4f8] sm:$0xff]
  %v2447 = vld [vmem:[%s8 + $0x500] sm:$0xff]
  %v2448 = vld [vmem:[%s8 + $0x508] sm:$0xff]
  %v2449 = vld [vmem:[%s8 + $0x510] sm:$0xff]
  %v2450 = vld [vmem:[%s8 + $0x518] sm:$0xff]
  %v2451 = vld [vmem:[%s8 + $0x520] sm:$0xff]
  %v2452 = vld [vmem:[%s8 + $0x528] sm:$0xff]
  %v2453 = vld [vmem:[%s8 + $0x530] sm:$0xff]
  %v2454 = vld [vmem:[%s8 + $0x538] sm:$0xff]
  %v2455 = vld [vmem:[%s8 + $0x540] sm:$0xff]
  %v2456 = vld [vmem:[%s8 + $0x548] sm:$0xff]
  %v2457 = vld [vmem:[%s8 + $0x550] sm:$0xff]
  %v2458 = vld [vmem:[%s8 + $0x558] sm:$0xff]
  %v2459 = vld [vmem:[%s8 + $0x560] sm:$0xff]
  %v2460 = vld [vmem:[%s8 + $0x568] sm:$0xff]
  %v2461 = vld [vmem:[%s8 + $0x570] sm:$0xff]
  %v2462 = vld [vmem:[%s8 + $0x578] sm:$0xff]
  %v2463 = vld [vmem:[%s8 + $0x580] sm:$0xff]
  %v2464 = vld [vmem:[%s8 + $0x588] sm:$0xff]
  %v2465 = vld [vmem:[%s8 + $0x590] sm:$0xff]
  %v2466 = vld [vmem:[%s8 + $0x598] sm:$0xff]
  %v2467 = vld [vmem:[%s8 + $0x5a0] sm:$0xff]
  %v2468 = vld [vmem:[%s8 + $0x5a8] sm:$0xff]
  %v2469 = vld [vmem:[%s8 + $0x5b0] sm:$0xff]
  %v2470 = vld [vmem:[%s8 + $0x5b8] sm:$0xff]
  %v2471 = vld [vmem:[%s8 + $0x5c0] sm:$0xff]
  %v2472 = vld [vmem:[%s8 + $0x5c8] sm:$0xff]
  %v2473 = vld [vmem:[%s8 + $0x5d0] sm:$0xff]
  %v2474 = vld [vmem:[%s8 + $0x5d8] sm:$0xff]
  %v2475 = vld [vmem:[%s8 + $0x5e0] sm:$0xff]
  %v2476 = vld [vmem:[%s8 + $0x5e8] sm:$0xff]
  %v2477 = vld [vmem:[%s8 + $0x5f0] sm:$0xff]
  %v2478 = vld [vmem:[%s8 + $0x5f8] sm:$0xff]
  %v2479 = vld [vmem:[%s8 + $0x600] sm:$0xff]
  %v2480 = vld [vmem:[%s8 + $0x608] sm:$0xff]
  %v2481 = vld [vmem:[%s8 + $0x610] sm:$0xff]
  %v2482 = vld [vmem:[%s8 + $0x618] sm:$0xff]
  %v2483 = vld [vmem:[%s8 + $0x620] sm:$0xff]
  %v2484 = vld [vmem:[%s8 + $0x628] sm:$0xff]
  %v2485 = vld [vmem:[%s8 + $0x630] sm:$0xff]
  %v2486 = vld [vmem:[%s8 + $0x638] sm:$0xff]
  %v2487 = vld [vmem:[%s9] sm:$0xff]
  %v2489 = vperm.slane %v2487, 0
  %v2490 = vperm.slane %v2487, 1
  %v2491 = vperm.slane %v2487, 2
  %v2492 = vperm.slane %v2487, 3
  %v2493 = vperm.slane %v2487, 4
  %v2494 = vperm.slane %v2487, 5
  %v2495 = vperm.slane %v2487, 6
  %v2496 = vperm.slane %v2487, 7
  %v2705 = vunpack.c.l.b16 %v2287
  %v2706 = vunpack.c.h.b16 %v2287
  %v2707 = vunpack.c.l.b16 %v2288
  %v2708 = vunpack.c.h.b16 %v2288
  %v2709 = vunpack.c.l.b16 %v2289
  %v2710 = vunpack.c.h.b16 %v2289
  %v2711 = vunpack.c.l.b16 %v2290
  %v2712 = vunpack.c.h.b16 %v2290
  %v2713 = vunpack.c.l.b16 %v2291
  %v2714 = vunpack.c.h.b16 %v2291
  %v2715 = vunpack.c.l.b16 %v2292
  %v2716 = vunpack.c.h.b16 %v2292
  %v2717 = vunpack.c.l.b16 %v2293
  %v2718 = vunpack.c.h.b16 %v2293
  %v2719 = vunpack.c.l.b16 %v2294
  %v2720 = vunpack.c.h.b16 %v2294
  %v2721 = vunpack.c.l.b16 %v2295
  %v2722 = vunpack.c.h.b16 %v2295
  %v2723 = vunpack.c.l.b16 %v2296
  %v2724 = vunpack.c.h.b16 %v2296
  %v2725 = vunpack.c.l.b16 %v2297
  %v2726 = vunpack.c.h.b16 %v2297
  %v2727 = vunpack.c.l.b16 %v2298
  %v2728 = vunpack.c.h.b16 %v2298
  %v2729 = vunpack.c.l.b16 %v2299
  %v2730 = vunpack.c.h.b16 %v2299
  %v2731 = vunpack.c.l.b16 %v2300
  %v2732 = vunpack.c.h.b16 %v2300
  %v2733 = vunpack.c.l.b16 %v2301
  %v2734 = vunpack.c.h.b16 %v2301
  %v2735 = vunpack.c.l.b16 %v2302
  %v2736 = vunpack.c.h.b16 %v2302
  %v2737 = vunpack.c.l.b16 %v2303
  %v2738 = vunpack.c.h.b16 %v2303
  %v2739 = vunpack.c.l.b16 %v2304
  %v2740 = vunpack.c.h.b16 %v2304
  %v2741 = vunpack.c.l.b16 %v2305
  %v2742 = vunpack.c.h.b16 %v2305
  %v2743 = vunpack.c.l.b16 %v2306
  %v2744 = vunpack.c.h.b16 %v2306
  %v2745 = vunpack.c.l.b16 %v2307
  %v2746 = vunpack.c.h.b16 %v2307
  %v2747 = vunpack.c.l.b16 %v2308
  %v2748 = vunpack.c.h.b16 %v2308
  %v2749 = vunpack.c.l.b16 %v2309
  %v2750 = vunpack.c.h.b16 %v2309
  %v2751 = vunpack.c.l.b16 %v2310
  %v2752 = vunpack.c.h.b16 %v2310
  %v2753 = vunpack.c.l.b16 %v2311
  %v2754 = vunpack.c.h.b16 %v2311
  %v2755 = vunpack.c.l.b16 %v2312
  %v2756 = vunpack.c.h.b16 %v2312
  %v2757 = vunpack.c.l.b16 %v2313
  %v2758 = vunpack.c.h.b16 %v2313
  %v2759 = vunpack.c.l.b16 %v2314
  %v2760 = vunpack.c.h.b16 %v2314
  %v2761 = vunpack.c.l.b16 %v2315
  %v2762 = vunpack.c.h.b16 %v2315
  %v2763 = vunpack.c.l.b16 %v2316
  %v2764 = vunpack.c.h.b16 %v2316
  %v2765 = vunpack.c.l.b16 %v2317
  %v2766 = vunpack.c.h.b16 %v2317
  %v2767 = vunpack.c.l.b16 %v2318
  %v2768 = vunpack.c.h.b16 %v2318
  %v2769 = vunpack.c.l.b16 %v2319
  %v2770 = vunpack.c.h.b16 %v2319
  %v2771 = vunpack.c.l.b16 %v2320
  %v2772 = vunpack.c.h.b16 %v2320
  %v2773 = vunpack.c.l.b16 %v2321
  %v2774 = vunpack.c.h.b16 %v2321
  %v2775 = vunpack.c.l.b16 %v2322
  %v2776 = vunpack.c.h.b16 %v2322
  %v2777 = vunpack.c.l.b16 %v2323
  %v2778 = vunpack.c.h.b16 %v2323
  %v2779 = vunpack.c.l.b16 %v2324
  %v2780 = vunpack.c.h.b16 %v2324
  %v2781 = vunpack.c.l.b16 %v2325
  %v2782 = vunpack.c.h.b16 %v2325
  %v2783 = vunpack.c.l.b16 %v2326
  %v2784 = vunpack.c.h.b16 %v2326
  %v2785 = vunpack.c.l.b16 %v2327
  %v2786 = vunpack.c.h.b16 %v2327
  %v2787 = vunpack.c.l.b16 %v2328
  %v2788 = vunpack.c.h.b16 %v2328
  %v2789 = vunpack.c.l.b16 %v2329
  %v2790 = vunpack.c.h.b16 %v2329
  %v2791 = vunpack.c.l.b16 %v2330
  %v2792 = vunpack.c.h.b16 %v2330
  %v2793 = vunpack.c.l.b16 %v2331
  %v2794 = vunpack.c.h.b16 %v2331
  %v2795 = vunpack.c.l.b16 %v2332
  %v2796 = vunpack.c.h.b16 %v2332
  %v2797 = vunpack.c.l.b16 %v2333
  %v2798 = vunpack.c.h.b16 %v2333
  %v2799 = vunpack.c.l.b16 %v2334
  %v2800 = vunpack.c.h.b16 %v2334
  %v2801 = vunpack.c.l.b16 %v2335
  %v2802 = vunpack.c.h.b16 %v2335
  %v2803 = vunpack.c.l.b16 %v2336
  %v2804 = vunpack.c.h.b16 %v2336
  %v2805 = vunpack.c.l.b16 %v2337
  %v2806 = vunpack.c.h.b16 %v2337
  %v2807 = vunpack.c.l.b16 %v2338
  %v2808 = vunpack.c.h.b16 %v2338
  %v2809 = vunpack.c.l.b16 %v2339
  %v2810 = vunpack.c.h.b16 %v2339
  %v2811 = vunpack.c.l.b16 %v2340
  %v2812 = vunpack.c.h.b16 %v2340
  %v2813 = vunpack.c.l.b16 %v2341
  %v2814 = vunpack.c.h.b16 %v2341
  %v2815 = vunpack.c.l.b16 %v2342
  %v2816 = vunpack.c.h.b16 %v2342
  %v2817 = vunpack.c.l.b16 %v2343
  %v2818 = vunpack.c.h.b16 %v2343
  %v2819 = vunpack.c.l.b16 %v2344
  %v2820 = vunpack.c.h.b16 %v2344
  %v2821 = vunpack.c.l.b16 %v2345
  %v2822 = vunpack.c.h.b16 %v2345
  %v2823 = vunpack.c.l.b16 %v2346
  %v2824 = vunpack.c.h.b16 %v2346
  %v2825 = vunpack.c.l.b16 %v2347
  %v2826 = vunpack.c.h.b16 %v2347
  %v2827 = vunpack.c.l.b16 %v2348
  %v2828 = vunpack.c.h.b16 %v2348
  %v2829 = vunpack.c.l.b16 %v2349
  %v2830 = vunpack.c.h.b16 %v2349
  %v2831 = vunpack.c.l.b16 %v2350
  %v2832 = vunpack.c.h.b16 %v2350
  %v2833 = vunpack.c.l.b16 %v2351
  %v2834 = vunpack.c.h.b16 %v2351
  %v2835 = vunpack.c.l.b16 %v2352
  %v2836 = vunpack.c.h.b16 %v2352
  %v2837 = vunpack.c.l.b16 %v2353
  %v2838 = vunpack.c.h.b16 %v2353
  %v2839 = vunpack.c.l.b16 %v2354
  %v2840 = vunpack.c.h.b16 %v2354
  %v2841 = vunpack.c.l.b16 %v2355
  %v2842 = vunpack.c.h.b16 %v2355
  %v2843 = vunpack.c.l.b16 %v2356
  %v2844 = vunpack.c.h.b16 %v2356
  %v2845 = vunpack.c.l.b16 %v2357
  %v2846 = vunpack.c.h.b16 %v2357
  %v2847 = vunpack.c.l.b16 %v2358
  %v2848 = vunpack.c.h.b16 %v2358
  %v2849 = vunpack.c.l.b16 %v2359
  %v2850 = vunpack.c.h.b16 %v2359
  %v2851 = vunpack.c.l.b16 %v2360
  %v2852 = vunpack.c.h.b16 %v2360
  %v2853 = vunpack.c.l.b16 %v2361
  %v2854 = vunpack.c.h.b16 %v2361
  %v2855 = vunpack.c.l.b16 %v2362
  %v2856 = vunpack.c.h.b16 %v2362
  %v2857 = vunpack.c.l.b16 %v2363
  %v2858 = vunpack.c.h.b16 %v2363
  %v2859 = vunpack.c.l.b16 %v2364
  %v2860 = vunpack.c.h.b16 %v2364
  %v2861 = vunpack.c.l.b16 %v2365
  %v2862 = vunpack.c.h.b16 %v2365
  %v2863 = vunpack.c.l.b16 %v2366
  %v2864 = vunpack.c.h.b16 %v2366
  %v2865 = vunpack.c.l.b16 %v2367
  %v2866 = vunpack.c.h.b16 %v2367
  %v2867 = vunpack.c.l.b16 %v2368
  %v2868 = vunpack.c.h.b16 %v2368
  %v2869 = vunpack.c.l.b16 %v2369
  %v2870 = vunpack.c.h.b16 %v2369
  %v2871 = vunpack.c.l.b16 %v2370
  %v2872 = vunpack.c.h.b16 %v2370
  %v2873 = vunpack.c.l.b16 %v2371
  %v2874 = vunpack.c.h.b16 %v2371
  %v2875 = vunpack.c.l.b16 %v2372
  %v2876 = vunpack.c.h.b16 %v2372
  %v2877 = vunpack.c.l.b16 %v2373
  %v2878 = vunpack.c.h.b16 %v2373
  %v2879 = vunpack.c.l.b16 %v2374
  %v2880 = vunpack.c.h.b16 %v2374
  %v2881 = vunpack.c.l.b16 %v2375
  %v2882 = vunpack.c.h.b16 %v2375
  %v2883 = vunpack.c.l.b16 %v2376
  %v2884 = vunpack.c.h.b16 %v2376
  %v2885 = vunpack.c.l.b16 %v2377
  %v2886 = vunpack.c.h.b16 %v2377
  %v2887 = vunpack.c.l.b16 %v2378
  %v2888 = vunpack.c.h.b16 %v2378
  %v2889 = vunpack.c.l.b16 %v2379
  %v2890 = vunpack.c.h.b16 %v2379
  %v2891 = vunpack.c.l.b16 %v2380
  %v2892 = vunpack.c.h.b16 %v2380
  %v2893 = vunpack.c.l.b16 %v2381
  %v2894 = vunpack.c.h.b16 %v2381
  %v2895 = vunpack.c.l.b16 %v2382
  %v2896 = vunpack.c.h.b16 %v2382
  %v2897 = vunpack.c.l.b16 %v2383
  %v2898 = vunpack.c.h.b16 %v2383
  %v2899 = vunpack.c.l.b16 %v2384
  %v2900 = vunpack.c.h.b16 %v2384
  %v2901 = vunpack.c.l.b16 %v2385
  %v2902 = vunpack.c.h.b16 %v2385
  %v2903 = vunpack.c.l.b16 %v2386
  %v2904 = vunpack.c.h.b16 %v2386
  %v2905 = vunpack.c.l.b16 %v2387
  %v2906 = vunpack.c.h.b16 %v2387
  %v2907 = vunpack.c.l.b16 %v2388
  %v2908 = vunpack.c.h.b16 %v2388
  %v2909 = vunpack.c.l.b16 %v2389
  %v2910 = vunpack.c.h.b16 %v2389
  %v2911 = vunpack.c.l.b16 %v2390
  %v2912 = vunpack.c.h.b16 %v2390
  %v2913 = vunpack.c.l.b16 %v2391
  %v2914 = vunpack.c.h.b16 %v2391
  %v2915 = vunpack.c.l.b16 %v2392
  %v2916 = vunpack.c.h.b16 %v2392
  %v2917 = vunpack.c.l.b16 %v2393
  %v2918 = vunpack.c.h.b16 %v2393
  %v2919 = vunpack.c.l.b16 %v2394
  %v2920 = vunpack.c.h.b16 %v2394
  %v2921 = vunpack.c.l.b16 %v2395
  %v2922 = vunpack.c.h.b16 %v2395
  %v2923 = vunpack.c.l.b16 %v2396
  %v2924 = vunpack.c.h.b16 %v2396
  %v2925 = vunpack.c.l.b16 %v2397
  %v2926 = vunpack.c.h.b16 %v2397
  %v2927 = vunpack.c.l.b16 %v2398
  %v2928 = vunpack.c.h.b16 %v2398
  %v2929 = vunpack.c.l.b16 %v2399
  %v2930 = vunpack.c.h.b16 %v2399
  %v2931 = vunpack.c.l.b16 %v2400
  %v2932 = vunpack.c.h.b16 %v2400
  %v2933 = vunpack.c.l.b16 %v2401
  %v2934 = vunpack.c.h.b16 %v2401
  %v2935 = vunpack.c.l.b16 %v2402
  %v2936 = vunpack.c.h.b16 %v2402
  %v2937 = vunpack.c.l.b16 %v2403
  %v2938 = vunpack.c.h.b16 %v2403
  %v2939 = vunpack.c.l.b16 %v2404
  %v2940 = vunpack.c.h.b16 %v2404
  %v2941 = vunpack.c.l.b16 %v2405
  %v2942 = vunpack.c.h.b16 %v2405
  %v2943 = vunpack.c.l.b16 %v2406
  %v2944 = vunpack.c.h.b16 %v2406
  %v2945 = vunpack.c.l.b16 %v2407
  %v2946 = vunpack.c.h.b16 %v2407
  %v2947 = vunpack.c.l.b16 %v2408
  %v2948 = vunpack.c.h.b16 %v2408
  %v2949 = vunpack.c.l.b16 %v2409
  %v2950 = vunpack.c.h.b16 %v2409
  %v2951 = vunpack.c.l.b16 %v2410
  %v2952 = vunpack.c.h.b16 %v2410
  %v2953 = vunpack.c.l.b16 %v2411
  %v2954 = vunpack.c.h.b16 %v2411
  %v2955 = vunpack.c.l.b16 %v2412
  %v2956 = vunpack.c.h.b16 %v2412
  %v2957 = vunpack.c.l.b16 %v2413
  %v2958 = vunpack.c.h.b16 %v2413
  %v2959 = vunpack.c.l.b16 %v2414
  %v2960 = vunpack.c.h.b16 %v2414
  %v2961 = vunpack.c.l.b16 %v2415
  %v2962 = vunpack.c.h.b16 %v2415
  %v2963 = vunpack.c.l.b16 %v2416
  %v2964 = vunpack.c.h.b16 %v2416
  %v2965 = vunpack.c.l.b16 %v2417
  %v2966 = vunpack.c.h.b16 %v2417
  %v2967 = vunpack.c.l.b16 %v2418
  %v2968 = vunpack.c.h.b16 %v2418
  %v2969 = vunpack.c.l.b16 %v2419
  %v2970 = vunpack.c.h.b16 %v2419
  %v2971 = vunpack.c.l.b16 %v2420
  %v2972 = vunpack.c.h.b16 %v2420
  %v2973 = vunpack.c.l.b16 %v2421
  %v2974 = vunpack.c.h.b16 %v2421
  %v2975 = vunpack.c.l.b16 %v2422
  %v2976 = vunpack.c.h.b16 %v2422
  %v2977 = vunpack.c.l.b16 %v2423
  %v2978 = vunpack.c.h.b16 %v2423
  %v2979 = vunpack.c.l.b16 %v2424
  %v2980 = vunpack.c.h.b16 %v2424
  %v2981 = vunpack.c.l.b16 %v2425
  %v2982 = vunpack.c.h.b16 %v2425
  %v2983 = vunpack.c.l.b16 %v2426
  %v2984 = vunpack.c.h.b16 %v2426
  %v2985 = vunpack.c.l.b16 %v2427
  %v2986 = vunpack.c.h.b16 %v2427
  %v2987 = vunpack.c.l.b16 %v2428
  %v2988 = vunpack.c.h.b16 %v2428
  %v2989 = vunpack.c.l.b16 %v2429
  %v2990 = vunpack.c.h.b16 %v2429
  %v2991 = vunpack.c.l.b16 %v2430
  %v2992 = vunpack.c.h.b16 %v2430
  %v2993 = vunpack.c.l.b16 %v2431
  %v2994 = vunpack.c.h.b16 %v2431
  %v2995 = vunpack.c.l.b16 %v2432
  %v2996 = vunpack.c.h.b16 %v2432
  %v2997 = vunpack.c.l.b16 %v2433
  %v2998 = vunpack.c.h.b16 %v2433
  %v2999 = vunpack.c.l.b16 %v2434
  %v3000 = vunpack.c.h.b16 %v2434
  %v3001 = vunpack.c.l.b16 %v2435
  %v3002 = vunpack.c.h.b16 %v2435
  %v3003 = vunpack.c.l.b16 %v2436
  %v3004 = vunpack.c.h.b16 %v2436
  %v3005 = vunpack.c.l.b16 %v2437
  %v3006 = vunpack.c.h.b16 %v2437
  %v3007 = vunpack.c.l.b16 %v2438
  %v3008 = vunpack.c.h.b16 %v2438
  %v3009 = vunpack.c.l.b16 %v2439
  %v3010 = vunpack.c.h.b16 %v2439
  %v3011 = vunpack.c.l.b16 %v2440
  %v3012 = vunpack.c.h.b16 %v2440
  %v3013 = vunpack.c.l.b16 %v2441
  %v3014 = vunpack.c.h.b16 %v2441
  %v3015 = vunpack.c.l.b16 %v2442
  %v3016 = vunpack.c.h.b16 %v2442
  %v3017 = vunpack.c.l.b16 %v2443
  %v3018 = vunpack.c.h.b16 %v2443
  %v3019 = vunpack.c.l.b16 %v2444
  %v3020 = vunpack.c.h.b16 %v2444
  %v3021 = vunpack.c.l.b16 %v2445
  %v3022 = vunpack.c.h.b16 %v2445
  %v3023 = vunpack.c.l.b16 %v2446
  %v3024 = vunpack.c.h.b16 %v2446
  %v3025 = vunpack.c.l.b16 %v2447
  %v3026 = vunpack.c.h.b16 %v2447
  %v3027 = vunpack.c.l.b16 %v2448
  %v3028 = vunpack.c.h.b16 %v2448
  %v3029 = vunpack.c.l.b16 %v2449
  %v3030 = vunpack.c.h.b16 %v2449
  %v3031 = vunpack.c.l.b16 %v2450
  %v3032 = vunpack.c.h.b16 %v2450
  %v3033 = vunpack.c.l.b16 %v2451
  %v3034 = vunpack.c.h.b16 %v2451
  %v3035 = vunpack.c.l.b16 %v2452
  %v3036 = vunpack.c.h.b16 %v2452
  %v3037 = vunpack.c.l.b16 %v2453
  %v3038 = vunpack.c.h.b16 %v2453
  %v3039 = vunpack.c.l.b16 %v2454
  %v3040 = vunpack.c.h.b16 %v2454
  %v3041 = vunpack.c.l.b16 %v2455
  %v3042 = vunpack.c.h.b16 %v2455
  %v3043 = vunpack.c.l.b16 %v2456
  %v3044 = vunpack.c.h.b16 %v2456
  %v3045 = vunpack.c.l.b16 %v2457
  %v3046 = vunpack.c.h.b16 %v2457
  %v3047 = vunpack.c.l.b16 %v2458
  %v3048 = vunpack.c.h.b16 %v2458
  %v3049 = vunpack.c.l.b16 %v2459
  %v3050 = vunpack.c.h.b16 %v2459
  %v3051 = vunpack.c.l.b16 %v2460
  %v3052 = vunpack.c.h.b16 %v2460
  %v3053 = vunpack.c.l.b16 %v2461
  %v3054 = vunpack.c.h.b16 %v2461
  %v3055 = vunpack.c.l.b16 %v2462
  %v3056 = vunpack.c.h.b16 %v2462
  %v3057 = vunpack.c.l.b16 %v2463
  %v3058 = vunpack.c.h.b16 %v2463
  %v3059 = vunpack.c.l.b16 %v2464
  %v3060 = vunpack.c.h.b16 %v2464
  %v3061 = vunpack.c.l.b16 %v2465
  %v3062 = vunpack.c.h.b16 %v2465
  %v3063 = vunpack.c.l.b16 %v2466
  %v3064 = vunpack.c.h.b16 %v2466
  %v3065 = vunpack.c.l.b16 %v2467
  %v3066 = vunpack.c.h.b16 %v2467
  %v3067 = vunpack.c.l.b16 %v2468
  %v3068 = vunpack.c.h.b16 %v2468
  %v3069 = vunpack.c.l.b16 %v2469
  %v3070 = vunpack.c.h.b16 %v2469
  %v3071 = vunpack.c.l.b16 %v2470
  %v3072 = vunpack.c.h.b16 %v2470
  %v3073 = vunpack.c.l.b16 %v2471
  %v3074 = vunpack.c.h.b16 %v2471
  %v3075 = vunpack.c.l.b16 %v2472
  %v3076 = vunpack.c.h.b16 %v2472
  %v3077 = vunpack.c.l.b16 %v2473
  %v3078 = vunpack.c.h.b16 %v2473
  %v3079 = vunpack.c.l.b16 %v2474
  %v3080 = vunpack.c.h.b16 %v2474
  %v3081 = vunpack.c.l.b16 %v2475
  %v3082 = vunpack.c.h.b16 %v2475
  %v3083 = vunpack.c.l.b16 %v2476
  %v3084 = vunpack.c.h.b16 %v2476
  %v3085 = vunpack.c.l.b16 %v2477
  %v3086 = vunpack.c.h.b16 %v2477
  %v3087 = vunpack.c.l.b16 %v2478
  %v3088 = vunpack.c.h.b16 %v2478
  %v3089 = vunpack.c.l.b16 %v2479
  %v3090 = vunpack.c.h.b16 %v2479
  %v3091 = vunpack.c.l.b16 %v2480
  %v3092 = vunpack.c.h.b16 %v2480
  %v3093 = vunpack.c.l.b16 %v2481
  %v3094 = vunpack.c.h.b16 %v2481
  %v3095 = vunpack.c.l.b16 %v2482
  %v3096 = vunpack.c.h.b16 %v2482
  %v3097 = vunpack.c.l.b16 %v2483
  %v3098 = vunpack.c.h.b16 %v2483
  %v3099 = vunpack.c.l.b16 %v2484
  %v3100 = vunpack.c.h.b16 %v2484
  %v3101 = vunpack.c.l.b16 %v2485
  %v3102 = vunpack.c.h.b16 %v2485
  %v3103 = vunpack.c.l.b16 %v2486
  %v3104 = vunpack.c.h.b16 %v2486
  %v3105 = vpack.c.b16 %v2713, %v2705
  %v3106 = vpack.c.b16 %v2714, %v2706
  %v3107 = vpack.c.b16 %v2715, %v2707
  %v3108 = vpack.c.b16 %v2716, %v2708
  %v3109 = vpack.c.b16 %v2717, %v2709
  %v3110 = vpack.c.b16 %v2718, %v2710
  %v3111 = vpack.c.b16 %v2719, %v2711
  %v3112 = vpack.c.b16 %v2720, %v2712
  %v3113 = vpack.c.b16 %v2729, %v2721
  %v3114 = vpack.c.b16 %v2730, %v2722
  %v3115 = vpack.c.b16 %v2731, %v2723
  %v3116 = vpack.c.b16 %v2732, %v2724
  %v3117 = vpack.c.b16 %v2733, %v2725
  %v3118 = vpack.c.b16 %v2734, %v2726
  %v3119 = vpack.c.b16 %v2735, %v2727
  %v3120 = vpack.c.b16 %v2736, %v2728
  %v3121 = vpack.c.b16 %v2745, %v2737
  %v3122 = vpack.c.b16 %v2746, %v2738
  %v3123 = vpack.c.b16 %v2747, %v2739
  %v3124 = vpack.c.b16 %v2748, %v2740
  %v3125 = vpack.c.b16 %v2749, %v2741
  %v3126 = vpack.c.b16 %v2750, %v2742
  %v3127 = vpack.c.b16 %v2751, %v2743
  %v3128 = vpack.c.b16 %v2752, %v2744
  %v3129 = vpack.c.b16 %v2761, %v2753
  %v3130 = vpack.c.b16 %v2762, %v2754
  %v3131 = vpack.c.b16 %v2763, %v2755
  %v3132 = vpack.c.b16 %v2764, %v2756
  %v3133 = vpack.c.b16 %v2765, %v2757
  %v3134 = vpack.c.b16 %v2766, %v2758
  %v3135 = vpack.c.b16 %v2767, %v2759
  %v3136 = vpack.c.b16 %v2768, %v2760
  %v3137 = vpack.c.b16 %v2777, %v2769
  %v3138 = vpack.c.b16 %v2778, %v2770
  %v3139 = vpack.c.b16 %v2779, %v2771
  %v3140 = vpack.c.b16 %v2780, %v2772
  %v3141 = vpack.c.b16 %v2781, %v2773
  %v3142 = vpack.c.b16 %v2782, %v2774
  %v3143 = vpack.c.b16 %v2783, %v2775
  %v3144 = vpack.c.b16 %v2784, %v2776
  %v3145 = vpack.c.b16 %v2793, %v2785
  %v3146 = vpack.c.b16 %v2794, %v2786
  %v3147 = vpack.c.b16 %v2795, %v2787
  %v3148 = vpack.c.b16 %v2796, %v2788
  %v3149 = vpack.c.b16 %v2797, %v2789
  %v3150 = vpack.c.b16 %v2798, %v2790
  %v3151 = vpack.c.b16 %v2799, %v2791
  %v3152 = vpack.c.b16 %v2800, %v2792
  %v3153 = vpack.c.b16 %v2809, %v2801
  %v3154 = vpack.c.b16 %v2810, %v2802
  %v3155 = vpack.c.b16 %v2811, %v2803
  %v3156 = vpack.c.b16 %v2812, %v2804
  %v3157 = vpack.c.b16 %v2813, %v2805
  %v3158 = vpack.c.b16 %v2814, %v2806
  %v3159 = vpack.c.b16 %v2815, %v2807
  %v3160 = vpack.c.b16 %v2816, %v2808
  %v3161 = vpack.c.b16 %v2825, %v2817
  %v3162 = vpack.c.b16 %v2826, %v2818
  %v3163 = vpack.c.b16 %v2827, %v2819
  %v3164 = vpack.c.b16 %v2828, %v2820
  %v3165 = vpack.c.b16 %v2829, %v2821
  %v3166 = vpack.c.b16 %v2830, %v2822
  %v3167 = vpack.c.b16 %v2831, %v2823
  %v3168 = vpack.c.b16 %v2832, %v2824
  %v3169 = vpack.c.b16 %v2841, %v2833
  %v3170 = vpack.c.b16 %v2842, %v2834
  %v3171 = vpack.c.b16 %v2843, %v2835
  %v3172 = vpack.c.b16 %v2844, %v2836
  %v3173 = vpack.c.b16 %v2845, %v2837
  %v3174 = vpack.c.b16 %v2846, %v2838
  %v3175 = vpack.c.b16 %v2847, %v2839
  %v3176 = vpack.c.b16 %v2848, %v2840
  %v3177 = vpack.c.b16 %v2857, %v2849
  %v3178 = vpack.c.b16 %v2858, %v2850
  %v3179 = vpack.c.b16 %v2859, %v2851
  %v3180 = vpack.c.b16 %v2860, %v2852
  %v3181 = vpack.c.b16 %v2861, %v2853
  %v3182 = vpack.c.b16 %v2862, %v2854
  %v3183 = vpack.c.b16 %v2863, %v2855
  %v3184 = vpack.c.b16 %v2864, %v2856
  %v3185 = vpack.c.b16 %v2873, %v2865
  %v3186 = vpack.c.b16 %v2874, %v2866
  %v3187 = vpack.c.b16 %v2875, %v2867
  %v3188 = vpack.c.b16 %v2876, %v2868
  %v3189 = vpack.c.b16 %v2877, %v2869
  %v3190 = vpack.c.b16 %v2878, %v2870
  %v3191 = vpack.c.b16 %v2879, %v2871
  %v3192 = vpack.c.b16 %v2880, %v2872
  %v3193 = vpack.c.b16 %v2889, %v2881
  %v3194 = vpack.c.b16 %v2890, %v2882
  %v3195 = vpack.c.b16 %v2891, %v2883
  %v3196 = vpack.c.b16 %v2892, %v2884
  %v3197 = vpack.c.b16 %v2893, %v2885
  %v3198 = vpack.c.b16 %v2894, %v2886
  %v3199 = vpack.c.b16 %v2895, %v2887
  %v3200 = vpack.c.b16 %v2896, %v2888
  %v3201 = vpack.c.b16 %v2905, %v2897
  %v3202 = vpack.c.b16 %v2906, %v2898
  %v3203 = vpack.c.b16 %v2907, %v2899
  %v3204 = vpack.c.b16 %v2908, %v2900
  %v3205 = vpack.c.b16 %v2909, %v2901
  %v3206 = vpack.c.b16 %v2910, %v2902
  %v3207 = vpack.c.b16 %v2911, %v2903
  %v3208 = vpack.c.b16 %v2912, %v2904
  %v3209 = vpack.c.b16 %v2921, %v2913
  %v3210 = vpack.c.b16 %v2922, %v2914
  %v3211 = vpack.c.b16 %v2923, %v2915
  %v3212 = vpack.c.b16 %v2924, %v2916
  %v3213 = vpack.c.b16 %v2925, %v2917
  %v3214 = vpack.c.b16 %v2926, %v2918
  %v3215 = vpack.c.b16 %v2927, %v2919
  %v3216 = vpack.c.b16 %v2928, %v2920
  %v3217 = vpack.c.b16 %v2937, %v2929
  %v3218 = vpack.c.b16 %v2938, %v2930
  %v3219 = vpack.c.b16 %v2939, %v2931
  %v3220 = vpack.c.b16 %v2940, %v2932
  %v3221 = vpack.c.b16 %v2941, %v2933
  %v3222 = vpack.c.b16 %v2942, %v2934
  %v3223 = vpack.c.b16 %v2943, %v2935
  %v3224 = vpack.c.b16 %v2944, %v2936
  %v3225 = vpack.c.b16 %v2953, %v2945
  %v3226 = vpack.c.b16 %v2954, %v2946
  %v3227 = vpack.c.b16 %v2955, %v2947
  %v3228 = vpack.c.b16 %v2956, %v2948
  %v3229 = vpack.c.b16 %v2957, %v2949
  %v3230 = vpack.c.b16 %v2958, %v2950
  %v3231 = vpack.c.b16 %v2959, %v2951
  %v3232 = vpack.c.b16 %v2960, %v2952
  %v3233 = vpack.c.b16 %v2969, %v2961
  %v3234 = vpack.c.b16 %v2970, %v2962
  %v3235 = vpack.c.b16 %v2971, %v2963
  %v3236 = vpack.c.b16 %v2972, %v2964
  %v3237 = vpack.c.b16 %v2973, %v2965
  %v3238 = vpack.c.b16 %v2974, %v2966
  %v3239 = vpack.c.b16 %v2975, %v2967
  %v3240 = vpack.c.b16 %v2976, %v2968
  %v3241 = vpack.c.b16 %v2985, %v2977
  %v3242 = vpack.c.b16 %v2986, %v2978
  %v3243 = vpack.c.b16 %v2987, %v2979
  %v3244 = vpack.c.b16 %v2988, %v2980
  %v3245 = vpack.c.b16 %v2989, %v2981
  %v3246 = vpack.c.b16 %v2990, %v2982
  %v3247 = vpack.c.b16 %v2991, %v2983
  %v3248 = vpack.c.b16 %v2992, %v2984
  %v3249 = vpack.c.b16 %v3001, %v2993
  %v3250 = vpack.c.b16 %v3002, %v2994
  %v3251 = vpack.c.b16 %v3003, %v2995
  %v3252 = vpack.c.b16 %v3004, %v2996
  %v3253 = vpack.c.b16 %v3005, %v2997
  %v3254 = vpack.c.b16 %v3006, %v2998
  %v3255 = vpack.c.b16 %v3007, %v2999
  %v3256 = vpack.c.b16 %v3008, %v3000
  %v3257 = vpack.c.b16 %v3017, %v3009
  %v3258 = vpack.c.b16 %v3018, %v3010
  %v3259 = vpack.c.b16 %v3019, %v3011
  %v3260 = vpack.c.b16 %v3020, %v3012
  %v3261 = vpack.c.b16 %v3021, %v3013
  %v3262 = vpack.c.b16 %v3022, %v3014
  %v3263 = vpack.c.b16 %v3023, %v3015
  %v3264 = vpack.c.b16 %v3024, %v3016
  %v3265 = vpack.c.b16 %v3033, %v3025
  %v3266 = vpack.c.b16 %v3034, %v3026
  %v3267 = vpack.c.b16 %v3035, %v3027
  %v3268 = vpack.c.b16 %v3036, %v3028
  %v3269 = vpack.c.b16 %v3037, %v3029
  %v3270 = vpack.c.b16 %v3038, %v3030
  %v3271 = vpack.c.b16 %v3039, %v3031
  %v3272 = vpack.c.b16 %v3040, %v3032
  %v3273 = vpack.c.b16 %v3049, %v3041
  %v3274 = vpack.c.b16 %v3050, %v3042
  %v3275 = vpack.c.b16 %v3051, %v3043
  %v3276 = vpack.c.b16 %v3052, %v3044
  %v3277 = vpack.c.b16 %v3053, %v3045
  %v3278 = vpack.c.b16 %v3054, %v3046
  %v3279 = vpack.c.b16 %v3055, %v3047
  %v3280 = vpack.c.b16 %v3056, %v3048
  %v3281 = vpack.c.b16 %v3065, %v3057
  %v3282 = vpack.c.b16 %v3066, %v3058
  %v3283 = vpack.c.b16 %v3067, %v3059
  %v3284 = vpack.c.b16 %v3068, %v3060
  %v3285 = vpack.c.b16 %v3069, %v3061
  %v3286 = vpack.c.b16 %v3070, %v3062
  %v3287 = vpack.c.b16 %v3071, %v3063
  %v3288 = vpack.c.b16 %v3072, %v3064
  %v3289 = vpack.c.b16 %v3081, %v3073
  %v3290 = vpack.c.b16 %v3082, %v3074
  %v3291 = vpack.c.b16 %v3083, %v3075
  %v3292 = vpack.c.b16 %v3084, %v3076
  %v3293 = vpack.c.b16 %v3085, %v3077
  %v3294 = vpack.c.b16 %v3086, %v3078
  %v3295 = vpack.c.b16 %v3087, %v3079
  %v3296 = vpack.c.b16 %v3088, %v3080
  %v3297 = vpack.c.b16 %v3097, %v3089
  %v3298 = vpack.c.b16 %v3098, %v3090
  %v3299 = vpack.c.b16 %v3099, %v3091
  %v3300 = vpack.c.b16 %v3100, %v3092
  %v3301 = vpack.c.b16 %v3101, %v3093
  %v3302 = vpack.c.b16 %v3102, %v3094
  %v3303 = vpack.c.b16 %v3103, %v3095
  %v3304 = vpack.c.b16 %v3104, %v3096
  %v3506 = vsel %vm2089, %v2286, 0
  %3508 = vmatpush.bf16.msra.mxu0 %v3161
  %3509 = vmatpush.bf16.msra.mxu0 %v3153
  %3510 = vmatpush.bf16.msra.mxu0 %v3145
  %3511 = vmatpush.bf16.msra.mxu0 %v3137
  %3512 = vmatpush.bf16.msra.mxu0 %v3129
  %3513 = vmatpush.bf16.msra.mxu0 %v3121
  %3514 = vmatpush.bf16.msra.mxu0 %v3113
  %3515 = vmatpush.bf16.msra.mxu0 %v3105
  %3516 = vmatmul.bf16.gmra.mxu0 %v2283
  %v3517 = vpop.f32.mrf.mxu0
  %v3518 = vadd.f32 %v2489, %v3517
  %v3519 = vpop.f32.mrf.mxu0
  %3520 = vdwg.mxu0
  %3521 = vmatpush.bf16.msra.mxu0 %v3225
  %3522 = vmatpush.bf16.msra.mxu0 %v3217
  %3523 = vmatpush.bf16.msra.mxu0 %v3209
  %3524 = vmatpush.bf16.msra.mxu0 %v3201
  %3525 = vmatpush.bf16.msra.mxu0 %v3193
  %3526 = vmatpush.bf16.msra.mxu0 %v3185
  %3527 = vmatpush.bf16.msra.mxu0 %v3177
  %3528 = vmatpush.bf16.msra.mxu0 %v3169
  %3529 = vmatmul.bf16.gmra.mxu0 %v2284
  %v3530 = vpop.f32.mrf.mxu0
  %v3531 = vadd.f32 %v3518, %v3530
  %v3532 = vpop.f32.mrf.mxu0
  %3533 = vdwg.mxu0
  %3534 = vmatpush.bf16.msra.mxu0 %v3289
  %3535 = vmatpush.bf16.msra.mxu0 %v3281
  %3536 = vmatpush.bf16.msra.mxu0 %v3273
  %3537 = vmatpush.bf16.msra.mxu0 %v3265
  %3538 = vmatpush.bf16.msra.mxu0 %v3257
  %3539 = vmatpush.bf16.msra.mxu0 %v3249
  %3540 = vmatpush.bf16.msra.mxu0 %v3241
  %3541 = vmatpush.bf16.msra.mxu0 %v3233
  %3542 = vmatmul.bf16.gmra.mxu0 %v2285
  %v3543 = vpop.f32.mrf.mxu0
  %v3544 = vadd.f32 %v3531, %v3543
  %v3545 = vpop.f32.mrf.mxu0
  %3546 = vdwg.mxu0
  %3547 = vmatpush.bf16.msra.mxu0 0
  %3548 = vmatpush.bf16.msra.mxu0 0
  %3549 = vmatpush.bf16.msra.mxu0 0
  %3550 = vmatpush.bf16.msra.mxu0 0
  %3551 = vmatpush.bf16.msra.mxu0 0
  %3552 = vmatpush.bf16.msra.mxu0 0
  %3553 = vmatpush.bf16.msra.mxu0 0
  %3554 = vmatpush.bf16.msra.mxu0 %v3297
  %3555 = vmatmul.bf16.gmra.mxu0 %v3506
  %v3556 = vpop.f32.mrf.mxu0
  %v3557 = vadd.f32 %v3544, %v3556
  %v3558 = vpop.f32.mrf.mxu0
  %3559 = vdwg.mxu0
  %3560 = vmatpush.bf16.msra.mxu0 %v3162
  %3561 = vmatpush.bf16.msra.mxu0 %v3154
  %3562 = vmatpush.bf16.msra.mxu0 %v3146
  %3563 = vmatpush.bf16.msra.mxu0 %v3138
  %3564 = vmatpush.bf16.msra.mxu0 %v3130
  %3565 = vmatpush.bf16.msra.mxu0 %v3122
  %3566 = vmatpush.bf16.msra.mxu0 %v3114
  %3567 = vmatpush.bf16.msra.mxu0 %v3106
  %3568 = vmatmul.bf16.gmra.mxu0 %v2283
  %v3569 = vpop.f32.mrf.mxu0
  %v3570 = vadd.f32 %v2490, %v3569
  %v3571 = vpop.f32.mrf.mxu0
  %3572 = vdwg.mxu0
  %3573 = vmatpush.bf16.msra.mxu0 %v3226
  %3574 = vmatpush.bf16.msra.mxu0 %v3218
  %3575 = vmatpush.bf16.msra.mxu0 %v3210
  %3576 = vmatpush.bf16.msra.mxu0 %v3202
  %3577 = vmatpush.bf16.msra.mxu0 %v3194
  %3578 = vmatpush.bf16.msra.mxu0 %v3186
  %3579 = vmatpush.bf16.msra.mxu0 %v3178
  %3580 = vmatpush.bf16.msra.mxu0 %v3170
  %3581 = vmatmul.bf16.gmra.mxu0 %v2284
  %v3582 = vpop.f32.mrf.mxu0
  %v3583 = vadd.f32 %v3570, %v3582
  %v3584 = vpop.f32.mrf.mxu0
  %3585 = vdwg.mxu0
  %3586 = vmatpush.bf16.msra.mxu0 %v3290
  %3587 = vmatpush.bf16.msra.mxu0 %v3282
  %3588 = vmatpush.bf16.msra.mxu0 %v3274
  %3589 = vmatpush.bf16.msra.mxu0 %v3266
  %3590 = vmatpush.bf16.msra.mxu0 %v3258
  %3591 = vmatpush.bf16.msra.mxu0 %v3250
  %3592 = vmatpush.bf16.msra.mxu0 %v3242
  %3593 = vmatpush.bf16.msra.mxu0 %v3234
  %3594 = vmatmul.bf16.gmra.mxu0 %v2285
  %v3595 = vpop.f32.mrf.mxu0
  %v3596 = vadd.f32 %v3583, %v3595
  %v3597 = vpop.f32.mrf.mxu0
  %3598 = vdwg.mxu0
  %3599 = vmatpush.bf16.msra.mxu0 0
  %3600 = vmatpush.bf16.msra.mxu0 0
  %3601 = vmatpush.bf16.msra.mxu0 0
  %3602 = vmatpush.bf16.msra.mxu0 0
  %3603 = vmatpush.bf16.msra.mxu0 0
  %3604 = vmatpush.bf16.msra.mxu0 0
  %3605 = vmatpush.bf16.msra.mxu0 0
  %3606 = vmatpush.bf16.msra.mxu0 %v3298
  %3607 = vmatmul.bf16.gmra.mxu0 %v3506
  %v3608 = vpop.f32.mrf.mxu0
  %v3609 = vadd.f32 %v3596, %v3608
  %v3610 = vpop.f32.mrf.mxu0
  %3611 = vdwg.mxu0
  %3612 = vmatpush.bf16.msra.mxu0 %v3163
  %3613 = vmatpush.bf16.msra.mxu0 %v3155
  %3614 = vmatpush.bf16.msra.mxu0 %v3147
  %3615 = vmatpush.bf16.msra.mxu0 %v3139
  %3616 = vmatpush.bf16.msra.mxu0 %v3131
  %3617 = vmatpush.bf16.msra.mxu0 %v3123
  %3618 = vmatpush.bf16.msra.mxu0 %v3115
  %3619 = vmatpush.bf16.msra.mxu0 %v3107
  %3620 = vmatmul.bf16.gmra.mxu0 %v2283
  %v3621 = vpop.f32.mrf.mxu0
  %v3622 = vadd.f32 %v2491, %v3621
  %v3623 = vpop.f32.mrf.mxu0
  %3624 = vdwg.mxu0
  %3625 = vmatpush.bf16.msra.mxu0 %v3227
  %3626 = vmatpush.bf16.msra.mxu0 %v3219
  %3627 = vmatpush.bf16.msra.mxu0 %v3211
  %3628 = vmatpush.bf16.msra.mxu0 %v3203
  %3629 = vmatpush.bf16.msra.mxu0 %v3195
  %3630 = vmatpush.bf16.msra.mxu0 %v3187
  %3631 = vmatpush.bf16.msra.mxu0 %v3179
  %3632 = vmatpush.bf16.msra.mxu0 %v3171
  %3633 = vmatmul.bf16.gmra.mxu0 %v2284
  %v3634 = vpop.f32.mrf.mxu0
  %v3635 = vadd.f32 %v3622, %v3634
  %v3636 = vpop.f32.mrf.mxu0
  %3637 = vdwg.mxu0
  %3638 = vmatpush.bf16.msra.mxu0 %v3291
  %3639 = vmatpush.bf16.msra.mxu0 %v3283
  %3640 = vmatpush.bf16.msra.mxu0 %v3275
  %3641 = vmatpush.bf16.msra.mxu0 %v3267
  %3642 = vmatpush.bf16.msra.mxu0 %v3259
  %3643 = vmatpush.bf16.msra.mxu0 %v3251
  %3644 = vmatpush.bf16.msra.mxu0 %v3243
  %3645 = vmatpush.bf16.msra.mxu0 %v3235
  %3646 = vmatmul.bf16.gmra.mxu0 %v2285
  %v3647 = vpop.f32.mrf.mxu0
  %v3648 = vadd.f32 %v3635, %v3647
  %v3649 = vpop.f32.mrf.mxu0
  %3650 = vdwg.mxu0
  %3651 = vmatpush.bf16.msra.mxu0 0
  %3652 = vmatpush.bf16.msra.mxu0 0
  %3653 = vmatpush.bf16.msra.mxu0 0
  %3654 = vmatpush.bf16.msra.mxu0 0
  %3655 = vmatpush.bf16.msra.mxu0 0
  %3656 = vmatpush.bf16.msra.mxu0 0
  %3657 = vmatpush.bf16.msra.mxu0 0
  %3658 = vmatpush.bf16.msra.mxu0 %v3299
  %3659 = vmatmul.bf16.gmra.mxu0 %v3506
  %v3660 = vpop.f32.mrf.mxu0
  %v3661 = vadd.f32 %v3648, %v3660
  %v3662 = vpop.f32.mrf.mxu0
  %3663 = vdwg.mxu0
  %3664 = vmatpush.bf16.msra.mxu0 %v3164
  %3665 = vmatpush.bf16.msra.mxu0 %v3156
  %3666 = vmatpush.bf16.msra.mxu0 %v3148
  %3667 = vmatpush.bf16.msra.mxu0 %v3140
  %3668 = vmatpush.bf16.msra.mxu0 %v3132
  %3669 = vmatpush.bf16.msra.mxu0 %v3124
  %3670 = vmatpush.bf16.msra.mxu0 %v3116
  %3671 = vmatpush.bf16.msra.mxu0 %v3108
  %3672 = vmatmul.bf16.gmra.mxu0 %v2283
  %v3673 = vpop.f32.mrf.mxu0
  %v3674 = vadd.f32 %v2492, %v3673
  %v3675 = vpop.f32.mrf.mxu0
  %3676 = vdwg.mxu0
  %3677 = vmatpush.bf16.msra.mxu0 %v3228
  %3678 = vmatpush.bf16.msra.mxu0 %v3220
  %3679 = vmatpush.bf16.msra.mxu0 %v3212
  %3680 = vmatpush.bf16.msra.mxu0 %v3204
  %3681 = vmatpush.bf16.msra.mxu0 %v3196
  %3682 = vmatpush.bf16.msra.mxu0 %v3188
  %3683 = vmatpush.bf16.msra.mxu0 %v3180
  %3684 = vmatpush.bf16.msra.mxu0 %v3172
  %3685 = vmatmul.bf16.gmra.mxu0 %v2284
  %v3686 = vpop.f32.mrf.mxu0
  %v3687 = vadd.f32 %v3674, %v3686
  %v3688 = vpop.f32.mrf.mxu0
  %3689 = vdwg.mxu0
  %3690 = vmatpush.bf16.msra.mxu0 %v3292
  %3691 = vmatpush.bf16.msra.mxu0 %v3284
  %3692 = vmatpush.bf16.msra.mxu0 %v3276
  %3693 = vmatpush.bf16.msra.mxu0 %v3268
  %3694 = vmatpush.bf16.msra.mxu0 %v3260
  %3695 = vmatpush.bf16.msra.mxu0 %v3252
  %3696 = vmatpush.bf16.msra.mxu0 %v3244
  %3697 = vmatpush.bf16.msra.mxu0 %v3236
  %3698 = vmatmul.bf16.gmra.mxu0 %v2285
  %v3699 = vpop.f32.mrf.mxu0
  %v3700 = vadd.f32 %v3687, %v3699
  %v3701 = vpop.f32.mrf.mxu0
  %3702 = vdwg.mxu0
  %3703 = vmatpush.bf16.msra.mxu0 0
  %3704 = vmatpush.bf16.msra.mxu0 0
  %3705 = vmatpush.bf16.msra.mxu0 0
  %3706 = vmatpush.bf16.msra.mxu0 0
  %3707 = vmatpush.bf16.msra.mxu0 0
  %3708 = vmatpush.bf16.msra.mxu0 0
  %3709 = vmatpush.bf16.msra.mxu0 0
  %3710 = vmatpush.bf16.msra.mxu0 %v3300
  %3711 = vmatmul.bf16.gmra.mxu0 %v3506
  %v3712 = vpop.f32.mrf.mxu0
  %v3713 = vadd.f32 %v3700, %v3712
  %v3714 = vpop.f32.mrf.mxu0
  %3715 = vdwg.mxu0
  %3716 = vmatpush.bf16.msra.mxu0 %v3165
  %3717 = vmatpush.bf16.msra.mxu0 %v3157
  %3718 = vmatpush.bf16.msra.mxu0 %v3149
  %3719 = vmatpush.bf16.msra.mxu0 %v3141
  %3720 = vmatpush.bf16.msra.mxu0 %v3133
  %3721 = vmatpush.bf16.msra.mxu0 %v3125
  %3722 = vmatpush.bf16.msra.mxu0 %v3117
  %3723 = vmatpush.bf16.msra.mxu0 %v3109
  %3724 = vmatmul.bf16.gmra.mxu0 %v2283
  %v3725 = vpop.f32.mrf.mxu0
  %v3726 = vadd.f32 %v2493, %v3725
  %v3727 = vpop.f32.mrf.mxu0
  %3728 = vdwg.mxu0
  %3729 = vmatpush.bf16.msra.mxu0 %v3229
  %3730 = vmatpush.bf16.msra.mxu0 %v3221
  %3731 = vmatpush.bf16.msra.mxu0 %v3213
  %3732 = vmatpush.bf16.msra.mxu0 %v3205
  %3733 = vmatpush.bf16.msra.mxu0 %v3197
  %3734 = vmatpush.bf16.msra.mxu0 %v3189
  %3735 = vmatpush.bf16.msra.mxu0 %v3181
  %3736 = vmatpush.bf16.msra.mxu0 %v3173
  %3737 = vmatmul.bf16.gmra.mxu0 %v2284
  %v3738 = vpop.f32.mrf.mxu0
  %v3739 = vadd.f32 %v3726, %v3738
  %v3740 = vpop.f32.mrf.mxu0
  %3741 = vdwg.mxu0
  %3742 = vmatpush.bf16.msra.mxu0 %v3293
  %3743 = vmatpush.bf16.msra.mxu0 %v3285
  %3744 = vmatpush.bf16.msra.mxu0 %v3277
  %3745 = vmatpush.bf16.msra.mxu0 %v3269
  %3746 = vmatpush.bf16.msra.mxu0 %v3261
  %3747 = vmatpush.bf16.msra.mxu0 %v3253
  %3748 = vmatpush.bf16.msra.mxu0 %v3245
  %3749 = vmatpush.bf16.msra.mxu0 %v3237
  %3750 = vmatmul.bf16.gmra.mxu0 %v2285
  %v3751 = vpop.f32.mrf.mxu0
  %v3752 = vadd.f32 %v3739, %v3751
  %v3753 = vpop.f32.mrf.mxu0
  %3754 = vdwg.mxu0
  %3755 = vmatpush.bf16.msra.mxu0 0
  %3756 = vmatpush.bf16.msra.mxu0 0
  %3757 = vmatpush.bf16.msra.mxu0 0
  %3758 = vmatpush.bf16.msra.mxu0 0
  %3759 = vmatpush.bf16.msra.mxu0 0
  %3760 = vmatpush.bf16.msra.mxu0 0
  %3761 = vmatpush.bf16.msra.mxu0 0
  %3762 = vmatpush.bf16.msra.mxu0 %v3301
  %3763 = vmatmul.bf16.gmra.mxu0 %v3506
  %v3764 = vpop.f32.mrf.mxu0
  %v3765 = vadd.f32 %v3752, %v3764
  %v3766 = vpop.f32.mrf.mxu0
  %3767 = vdwg.mxu0
  %3768 = vmatpush.bf16.msra.mxu0 %v3166
  %3769 = vmatpush.bf16.msra.mxu0 %v3158
  %3770 = vmatpush.bf16.msra.mxu0 %v3150
  %3771 = vmatpush.bf16.msra.mxu0 %v3142
  %3772 = vmatpush.bf16.msra.mxu0 %v3134
  %3773 = vmatpush.bf16.msra.mxu0 %v3126
  %3774 = vmatpush.bf16.msra.mxu0 %v3118
  %3775 = vmatpush.bf16.msra.mxu0 %v3110
  %3776 = vmatmul.bf16.gmra.mxu0 %v2283
  %v3777 = vpop.f32.mrf.mxu0
  %v3778 = vadd.f32 %v2494, %v3777
  %v3779 = vpop.f32.mrf.mxu0
  %3780 = vdwg.mxu0
  %3781 = vmatpush.bf16.msra.mxu0 %v3230
  %3782 = vmatpush.bf16.msra.mxu0 %v3222
  %3783 = vmatpush.bf16.msra.mxu0 %v3214
  %3784 = vmatpush.bf16.msra.mxu0 %v3206
  %3785 = vmatpush.bf16.msra.mxu0 %v3198
  %3786 = vmatpush.bf16.msra.mxu0 %v3190
  %3787 = vmatpush.bf16.msra.mxu0 %v3182
  %3788 = vmatpush.bf16.msra.mxu0 %v3174
  %3789 = vmatmul.bf16.gmra.mxu0 %v2284
  %v3790 = vpop.f32.mrf.mxu0
  %v3791 = vadd.f32 %v3778, %v3790
  %v3792 = vpop.f32.mrf.mxu0
  %3793 = vdwg.mxu0
  %3794 = vmatpush.bf16.msra.mxu0 %v3294
  %3795 = vmatpush.bf16.msra.mxu0 %v3286
  %3796 = vmatpush.bf16.msra.mxu0 %v3278
  %3797 = vmatpush.bf16.msra.mxu0 %v3270
  %3798 = vmatpush.bf16.msra.mxu0 %v3262
  %3799 = vmatpush.bf16.msra.mxu0 %v3254
  %3800 = vmatpush.bf16.msra.mxu0 %v3246
  %3801 = vmatpush.bf16.msra.mxu0 %v3238
  %3802 = vmatmul.bf16.gmra.mxu0 %v2285
  %v3803 = vpop.f32.mrf.mxu0
  %v3804 = vadd.f32 %v3791, %v3803
  %v3805 = vpop.f32.mrf.mxu0
  %3806 = vdwg.mxu0
  %3807 = vmatpush.bf16.msra.mxu0 0
  %3808 = vmatpush.bf16.msra.mxu0 0
  %3809 = vmatpush.bf16.msra.mxu0 0
  %3810 = vmatpush.bf16.msra.mxu0 0
  %3811 = vmatpush.bf16.msra.mxu0 0
  %3812 = vmatpush.bf16.msra.mxu0 0
  %3813 = vmatpush.bf16.msra.mxu0 0
  %3814 = vmatpush.bf16.msra.mxu0 %v3302
  %3815 = vmatmul.bf16.gmra.mxu0 %v3506
  %v3816 = vpop.f32.mrf.mxu0
  %v3817 = vadd.f32 %v3804, %v3816
  %v3818 = vpop.f32.mrf.mxu0
  %3819 = vdwg.mxu0
  %3820 = vmatpush.bf16.msra.mxu0 %v3167
  %3821 = vmatpush.bf16.msra.mxu0 %v3159
  %3822 = vmatpush.bf16.msra.mxu0 %v3151
  %3823 = vmatpush.bf16.msra.mxu0 %v3143
  %3824 = vmatpush.bf16.msra.mxu0 %v3135
  %3825 = vmatpush.bf16.msra.mxu0 %v3127
  %3826 = vmatpush.bf16.msra.mxu0 %v3119
  %3827 = vmatpush.bf16.msra.mxu0 %v3111
  %3828 = vmatmul.bf16.gmra.mxu0 %v2283
  %v3829 = vpop.f32.mrf.mxu0
  %v3830 = vadd.f32 %v2495, %v3829
  %v3831 = vpop.f32.mrf.mxu0
  %3832 = vdwg.mxu0
  %3833 = vmatpush.bf16.msra.mxu0 %v3231
  %3834 = vmatpush.bf16.msra.mxu0 %v3223
  %3835 = vmatpush.bf16.msra.mxu0 %v3215
  %3836 = vmatpush.bf16.msra.mxu0 %v3207
  %3837 = vmatpush.bf16.msra.mxu0 %v3199
  %3838 = vmatpush.bf16.msra.mxu0 %v3191
  %3839 = vmatpush.bf16.msra.mxu0 %v3183
  %3840 = vmatpush.bf16.msra.mxu0 %v3175
  %3841 = vmatmul.bf16.gmra.mxu0 %v2284
  %v3842 = vpop.f32.mrf.mxu0
  %v3843 = vadd.f32 %v3830, %v3842
  %v3844 = vpop.f32.mrf.mxu0
  %3845 = vdwg.mxu0
  %3846 = vmatpush.bf16.msra.mxu0 %v3295
  %3847 = vmatpush.bf16.msra.mxu0 %v3287
  %3848 = vmatpush.bf16.msra.mxu0 %v3279
  %3849 = vmatpush.bf16.msra.mxu0 %v3271
  %3850 = vmatpush.bf16.msra.mxu0 %v3263
  %3851 = vmatpush.bf16.msra.mxu0 %v3255
  %3852 = vmatpush.bf16.msra.mxu0 %v3247
  %3853 = vmatpush.bf16.msra.mxu0 %v3239
  %3854 = vmatmul.bf16.gmra.mxu0 %v2285
  %v3855 = vpop.f32.mrf.mxu0
  %v3856 = vadd.f32 %v3843, %v3855
  %v3857 = vpop.f32.mrf.mxu0
  %3858 = vdwg.mxu0
  %3859 = vmatpush.bf16.msra.mxu0 0
  %3860 = vmatpush.bf16.msra.mxu0 0
  %3861 = vmatpush.bf16.msra.mxu0 0
  %3862 = vmatpush.bf16.msra.mxu0 0
  %3863 = vmatpush.bf16.msra.mxu0 0
  %3864 = vmatpush.bf16.msra.mxu0 0
  %3865 = vmatpush.bf16.msra.mxu0 0
  %3866 = vmatpush.bf16.msra.mxu0 %v3303
  %3867 = vmatmul.bf16.gmra.mxu0 %v3506
  %v3868 = vpop.f32.mrf.mxu0
  %v3869 = vadd.f32 %v3856, %v3868
  %v3870 = vpop.f32.mrf.mxu0
  %3871 = vdwg.mxu0
  %3872 = vmatpush.bf16.msra.mxu0 %v3168
  %3873 = vmatpush.bf16.msra.mxu0 %v3160
  %3874 = vmatpush.bf16.msra.mxu0 %v3152
  %3875 = vmatpush.bf16.msra.mxu0 %v3144
  %3876 = vmatpush.bf16.msra.mxu0 %v3136
  %3877 = vmatpush.bf16.msra.mxu0 %v3128
  %3878 = vmatpush.bf16.msra.mxu0 %v3120
  %3879 = vmatpush.bf16.msra.mxu0 %v3112
  %3880 = vmatmul.bf16.gmra.mxu0 %v2283
  %v3881 = vpop.f32.mrf.mxu0
  %v3882 = vadd.f32 %v2496, %v3881
  %v3883 = vpop.f32.mrf.mxu0
  %3884 = vdwg.mxu0
  %3885 = vmatpush.bf16.msra.mxu0 %v3232
  %3886 = vmatpush.bf16.msra.mxu0 %v3224
  %3887 = vmatpush.bf16.msra.mxu0 %v3216
  %3888 = vmatpush.bf16.msra.mxu0 %v3208
  %3889 = vmatpush.bf16.msra.mxu0 %v3200
  %3890 = vmatpush.bf16.msra.mxu0 %v3192
  %3891 = vmatpush.bf16.msra.mxu0 %v3184
  %3892 = vmatpush.bf16.msra.mxu0 %v3176
  %3893 = vmatmul.bf16.gmra.mxu0 %v2284
  %v3894 = vpop.f32.mrf.mxu0
  %v3895 = vadd.f32 %v3882, %v3894
  %v3896 = vpop.f32.mrf.mxu0
  %3897 = vdwg.mxu0
  %3898 = vmatpush.bf16.msra.mxu0 %v3296
  %3899 = vmatpush.bf16.msra.mxu0 %v3288
  %3900 = vmatpush.bf16.msra.mxu0 %v3280
  %3901 = vmatpush.bf16.msra.mxu0 %v3272
  %3902 = vmatpush.bf16.msra.mxu0 %v3264
  %3903 = vmatpush.bf16.msra.mxu0 %v3256
  %3904 = vmatpush.bf16.msra.mxu0 %v3248
  %3905 = vmatpush.bf16.msra.mxu0 %v3240
  %3906 = vmatmul.bf16.gmra.mxu0 %v2285
  %v3907 = vpop.f32.mrf.mxu0
  %v3908 = vadd.f32 %v3895, %v3907
  %v3909 = vpop.f32.mrf.mxu0
  %3910 = vdwg.mxu0
  %3911 = vmatpush.bf16.msra.mxu0 0
  %3912 = vmatpush.bf16.msra.mxu0 0
  %3913 = vmatpush.bf16.msra.mxu0 0
  %3914 = vmatpush.bf16.msra.mxu0 0
  %3915 = vmatpush.bf16.msra.mxu0 0
  %3916 = vmatpush.bf16.msra.mxu0 0
  %3917 = vmatpush.bf16.msra.mxu0 0
  %3918 = vmatpush.bf16.msra.mxu0 %v3304
  %3919 = vmatmul.bf16.gmra.mxu0 %v3506
  %v3920 = vpop.f32.mrf.mxu0
  %v3921 = vadd.f32 %v3908, %v3920
  %v3922 = vpop.f32.mrf.mxu0
  %3923 = vdwg.mxu0
  %v3924 = vsub.f32 0.0, %v3557
  %v3925 = vsub.f32 0.0, %v3609
  %v3926 = vsub.f32 0.0, %v3661
  %v3927 = vsub.f32 0.0, %v3713
  %v3928 = vsub.f32 0.0, %v3765
  %v3929 = vsub.f32 0.0, %v3817
  %v3930 = vsub.f32 0.0, %v3869
  %v3931 = vsub.f32 0.0, %v3921
  %v3932 = vmul.f32 %v3924, 1.442695
  %v3933 = vpow.pop %v3932
  %v3934 = vmul.f32 %v3925, 1.442695
  %v3935 = vpow.pop %v3934
  %v3936 = vmul.f32 %v3926, 1.442695
  %v3937 = vpow.pop %v3936
  %v3938 = vmul.f32 %v3927, 1.442695
  %v3939 = vpow.pop %v3938
  %v3940 = vmul.f32 %v3928, 1.442695
  %v3941 = vpow.pop %v3940
  %v3942 = vmul.f32 %v3929, 1.442695
  %v3943 = vpow.pop %v3942
  %v3944 = vmul.f32 %v3930, 1.442695
  %v3945 = vpow.pop %v3944
  %v3946 = vmul.f32 %v3931, 1.442695
  %v3947 = vpow.pop %v3946
  %v3948 = vadd.f32 %v3933, 1.0
  %v3949 = vadd.f32 %v3935, 1.0
  %v3950 = vadd.f32 %v3937, 1.0
  %v3951 = vadd.f32 %v3939, 1.0
  %v3952 = vadd.f32 %v3941, 1.0
  %v3953 = vadd.f32 %v3943, 1.0
  %v3954 = vadd.f32 %v3945, 1.0
  %v3955 = vadd.f32 %v3947, 1.0
  %v3956 = vrcp.pop %v3948
  %v3957 = vrcp.pop %v3949
  %v3958 = vrcp.pop %v3950
  %v3959 = vrcp.pop %v3951
  %v3960 = vrcp.pop %v3952
  %v3961 = vrcp.pop %v3953
  %v3962 = vrcp.pop %v3954
  %v3963 = vrcp.pop %v3955
  %v3972 = vrot.slane %v3957, 6
  %v3973 = vrot.slane %v3958, 4
  %v3974 = vrot.slane %v3959, 2
  %v3975 = vrot.slane %v3961, 6
  %v3976 = vrot.slane %v3962, 4
  %v3977 = vrot.slane %v3963, 2
  %vm3978 = vcmask 1041408
  %v3979 = vsel %vm3978, %v3956, %v3972
  %vm3980 = vcmask 1045508
  %v3981 = vsel %vm3980, %v3973, %v3974
  %v3982 = vsel %vm2214, %v3979, %v3981
  %v3983 = vsel %vm3978, %v3960, %v3975
  %v3984 = vsel %vm3980, %v3976, %v3977
  %v3985 = vsel %vm2214, %v3983, %v3984
  %3988 = vst [vmem:[%s10] sm:$0xff] %v3982
  %3989 = vst [vmem:[%s10 + $0x8] sm:$0xff] %v3985
  %v3990 = vsel %vm2089, %v2171, 0.0
  %3991 = vst [vmem:[%s11] sm:$0x3] %v3990
  // Predicated region
  $region42: #{fcvae_forward.1} parent=0 // pred_check
    _
  $region43: #{fcvae_forward.1} parent=0 // pred_check_branch
    %3993 = sbr.rel (0) target = $region45
  $region44: #{fcvae_forward.1} parent=0 // pred_region
    _
  $region45: #{fcvae_forward.1} parent=0 // pred_fallthru
    _
  // Predicated region
  $region46: #{fcvae_forward.1} parent=0 // pred_check
    _
  $region47: #{fcvae_forward.1} parent=0 // pred_check_branch
    %3995 = sbr.rel (0) target = $region49
  $region48: #{fcvae_forward.1} parent=0 // pred_region
    _
  $region49: #{fcvae_forward.1} parent=0 // pred_fallthru
    _
  // Predicated region
  $region50: #{fcvae_forward.1} parent=0 // pred_check
    _
  $region51: #{fcvae_forward.1} parent=0 // pred_check_branch
    %3997 = sbr.rel (0) target = $region53
  $region52: #{fcvae_forward.1} parent=0 // pred_region
    _
  $region53: #{fcvae_forward.1} parent=0 // pred_fallthru
    _
  // Predicated region
  $region54: #{fcvae_forward.1} parent=0 // pred_check
    _
  $region55: #{fcvae_forward.1} parent=0 // pred_check_branch
    %3999 = sbr.rel (0) target = $region57
  $region56: #{fcvae_forward.1} parent=0 // pred_region
    _
  $region57: #{fcvae_forward.1} parent=0 // pred_fallthru
    _

</llo_original>
